<compile_context>
chip_gen: v7x
topology: tpu7x:2x2x1
jax: 0.10.0
libtpu: 0.0.40
codegen_flags: <defaults>
</compile_context>

<pallas_src>
import functools

import jax
import jax.numpy as jnp
from jax import lax
from jax.experimental import pallas as pl
from jax.experimental.pallas import tpu as pltpu

# ----------------------------- synthetic configuration ------------------------
BATCH = 2
OBS = 8                        # observations_count
STYLE_FEATURES = 16
DEFORMATION_FEATURES = 8
ACTIONS_COUNT = 4
ACTION_SPACE_DIM = 8
HIDDEN = 32
GUMBEL_TEMPERATURE = 1.0
HARD_GUMBEL = False            # soft gumbel-softmax
CENTROID_ALPHA = 0.1
USE_DEFORMATION = True
GROUND_TRUTH_OBSERVATIONS = 4

ACTION_IN_FEATURES = 3 + 3 + (DEFORMATION_FEATURES if USE_DEFORMATION else 0)   # 14
DYN_STATE_FEATURES = 3 + 3 + STYLE_FEATURES + DEFORMATION_FEATURES              # 30
DYN_AV_FEATURES = ACTIONS_COUNT + ACTION_SPACE_DIM                              # 12
DYN_IN_FEATURES = DYN_STATE_FEATURES + DYN_AV_FEATURES                          # 42
DYN_OUT_FEATURES = DYN_STATE_FEATURES                                           # 30

# Lane layout of the single packed action-network output slab (f32, 128 lanes):
#   [ 0:16)  state head   (mean | logvar)   -> action_states_distribution
#   [16:24)  sampled action states
#   [24:40)  direction head (mean | logvar) -> action_directions_distribution
#   [40:48)  sampled action directions
#   [48:52)  action logits
#   [52:56)  action probabilities (softmax)
#   [56:60)  sampled actions (gumbel-softmax)
#   [60:68)  action variations (centroid variant only)
#   [68:128) zero padding (lane-dense store)
SLAB_WIDTH = 128


# ===================== shared action-network math (in-kernel) =================
def _action_math(feats, eps_state, eps_dir, gumbel,
                 sw1, sb1, sw2, sb2, dw1p, dw1n, db1, dw2, db2,
                 aw1, ab1, aw2, ab2, *, temperature):
    f32 = jnp.float32
    rows = feats.shape[0]
    a = eps_state.shape[1]

    # ---- state encoder MLP + reparameterization (merged mean|logvar head) ----
    h1 = jnp.tanh(jnp.dot(feats, sw1, preferred_element_type=f32) + sb1)
    state_head = jnp.dot(h1, sw2, preferred_element_type=f32) + sb2        # (rows, 2A)
    state_mean = state_head[:, :a]
    state_logvar = state_head[:, a:]
    sampled_states = state_mean + jnp.exp(0.5 * state_logvar) * eps_state  # (rows, A)

    # ---- consecutive-timestep pairing: s_next[i] = states[i+1].  Built from an
    # in-kernel iota shift matrix (no HBM input, MXU is otherwise idle); rows
    # that pair across a batch boundary are discarded by the wrapper. ----
    ri = lax.broadcasted_iota(jnp.int32, (rows, rows), 0)
    ci = lax.broadcasted_iota(jnp.int32, (rows, rows), 1)
    shift = (ci == ri + 1).astype(f32)
    s_next = jnp.dot(shift, sampled_states, preferred_element_type=f32)    # (rows, A)

    # ---- direction encoder MLP + reparameterization ----
    h2 = jnp.tanh(jnp.dot(sampled_states, dw1p, preferred_element_type=f32)
                  + jnp.dot(s_next, dw1n, preferred_element_type=f32) + db1)
    dir_head = jnp.dot(h2, dw2, preferred_element_type=f32) + db2          # (rows, 2A)
    dir_mean = dir_head[:, :a]
    dir_logvar = dir_head[:, a:]
    sampled_dirs = dir_mean + jnp.exp(0.5 * dir_logvar) * eps_dir          # (rows, A)

    # ---- action classifier ----
    h3 = jnp.tanh(jnp.dot(sampled_dirs, aw1, preferred_element_type=f32) + ab1)
    logits = jnp.dot(h3, aw2, preferred_element_type=f32) + ab2            # (rows, K)

    # ---- softmax + gumbel-softmax sampling (fused) ----
    m = jnp.max(logits, axis=-1, keepdims=True)
    z = logits - m
    e = jnp.exp(z)
    s = jnp.sum(e, axis=-1, keepdims=True)
    probs = e / s                                        # softmax(logits)
    log_probs = z - jnp.log(s)                           # log_softmax(logits)
    g = (log_probs + gumbel) / temperature
    m2 = jnp.max(g, axis=-1, keepdims=True)
    e2 = jnp.exp(g - m2)
    sampled_actions = e2 / jnp.sum(e2, axis=-1, keepdims=True)
    # TODO(synk): hard (straight-through) gumbel not implemented (HARD_GUMBEL=False).

    return dict(state_head=state_head, sampled_states=sampled_states,
                dir_head=dir_head, dir_mean=dir_mean, sampled_dirs=sampled_dirs,
                logits=logits, probs=probs, sampled_actions=sampled_actions)


def _pack_slab(r, extra, slab_ref):
    rows = slab_ref.shape[0]
    pieces = [r["state_head"], r["sampled_states"], r["dir_head"], r["sampled_dirs"],
              r["logits"], r["probs"], r["sampled_actions"]] + extra
    width = sum(p.shape[1] for p in pieces)
    pad = slab_ref.shape[1] - width
    pieces.append(jnp.zeros((rows, pad), jnp.float32))
    slab_ref[...] = jnp.concatenate(pieces, axis=-1)


# ===================== action network kernels =================================
def _action_kernel(feats_ref, eps_state_ref, eps_dir_ref, gumbel_ref,
                   sw1_ref, sb1_ref, sw2_ref, sb2_ref,
                   dw1p_ref, dw1n_ref, db1_ref, dw2_ref, db2_ref,
                   aw1_ref, ab1_ref, aw2_ref, ab2_ref,
                   slab_ref, *, temperature):
    r = _action_math(feats_ref[...], eps_state_ref[...], eps_dir_ref[...], gumbel_ref[...],
                     sw1_ref[...], sb1_ref[...], sw2_ref[...], sb2_ref[...],
                     dw1p_ref[...], dw1n_ref[...], db1_ref[...], dw2_ref[...], db2_ref[...],
                     aw1_ref[...], ab1_ref[...], aw2_ref[...], ab2_ref[...],
                     temperature=temperature)
    _pack_slab(r, [], slab_ref)


def _action_centroid_kernel(feats_ref, eps_state_ref, eps_dir_ref, gumbel_ref,
                            valid_ref, cent_ref,
                            sw1_ref, sb1_ref, sw2_ref, sb2_ref,
                            dw1p_ref, dw1n_ref, db1_ref, dw2_ref, db2_ref,
                            aw1_ref, ab1_ref, aw2_ref, ab2_ref,
                            cent_out_ref, slab_ref, *, temperature, alpha):
    f32 = jnp.float32
    r = _action_math(feats_ref[...], eps_state_ref[...], eps_dir_ref[...], gumbel_ref[...],
                     sw1_ref[...], sb1_ref[...], sw2_ref[...], sb2_ref[...],
                     dw1p_ref[...], dw1n_ref[...], db1_ref[...], dw2_ref[...], db2_ref[...],
                     aw1_ref[...], ab1_ref[...], aw2_ref[...], ab2_ref[...],
                     temperature=temperature)

    # ---- centroid EMA update (validity-masked soft assignment) ----
    # Masking by validity weight 0 is equivalent to the boolean-index filtering
    # in the PyTorch update (invalid rows contribute nothing).
    w = r["probs"] * valid_ref[...]                                        # (rows, K)
    weighted = lax.dot_general(w, r["dir_mean"], (((0,), (0,)), ((), ())),
                               preferred_element_type=f32)                 # (K, A)
    counts = jnp.sum(w, axis=0, keepdims=True)                             # (1, K)
    batch_centroids = weighted / (counts.T + 1e-6)
    # TODO(synk): clusters with ~zero soft count decay toward 0 by alpha; a
    # reference that skips empty clusters would differ slightly.
    new_cent = (1.0 - alpha) * cent_ref[...] + alpha * batch_centroids
    cent_out_ref[...] = new_cent

    # ---- action variations against the freshly-updated centroids ----
    variations = r["sampled_dirs"] - jnp.dot(r["sampled_actions"], new_cent,
                                             preferred_element_type=f32)   # (rows, A)
    _pack_slab(r, [variations], slab_ref)


def pallas_action_network(params, feats, eps_state, eps_dir, gumbel,
                          valid=None, centroids=None):
    rows = feats.shape[0]
    a = ACTION_SPACE_DIM
    k = ACTIONS_COUNT

    dw1 = params["dir_w1"]
    weights = (params["state_w1"], params["state_b1"], params["state_w2"], params["state_b2"],
               dw1[:a, :], dw1[a:, :], params["dir_b1"], params["dir_w2"], params["dir_b2"],
               params["act_w1"], params["act_b1"], params["act_w2"], params["act_b2"])

    def spec(arr):
        return pl.BlockSpec(arr.shape, lambda i: (0, 0))

    slab_shape = jax.ShapeDtypeStruct((rows, SLAB_WIDTH), jnp.float32)
    slab_spec = pl.BlockSpec((rows, SLAB_WIDTH), lambda i: (0, 0))

    if centroids is None:
        args = (feats, eps_state, eps_dir, gumbel) + weights
        return pl.pallas_call(
            functools.partial(_action_kernel, temperature=GUMBEL_TEMPERATURE),
            out_shape=slab_shape,
            grid=(1,),
            in_specs=[spec(x) for x in args],
            out_specs=slab_spec,
            compiler_params=pltpu.CompilerParams(dimension_semantics=("arbitrary",)),
        )(*args)

    args = (feats, eps_state, eps_dir, gumbel, valid, centroids) + weights
    return pl.pallas_call(
        functools.partial(_action_centroid_kernel, temperature=GUMBEL_TEMPERATURE,
                          alpha=CENTROID_ALPHA),
        out_shape=(jax.ShapeDtypeStruct((k, a), jnp.float32), slab_shape),
        grid=(1,),
        in_specs=[spec(x) for x in args],
        out_specs=(pl.BlockSpec((k, a), lambda i: (0, 0)), slab_spec),
        input_output_aliases={5: 0},     # centroid EMA updates in place
        compiler_params=pltpu.CompilerParams(dimension_semantics=("arbitrary",)),
    )(*args)


# ===================== fused recurrent dynamics kernel ========================
def _dynamics_kernel(gt_ref, av_ref, w1s_ref, w1av_ref, b1_ref, w2_ref, b2_ref,
                     out_ref, *, gto, steps):
    f32 = jnp.float32
    # Weights resident in vregs for the whole rollout.
    w1s = w1s_ref[...]
    w1av = w1av_ref[...]
    b1 = b1_ref[...]
    w2 = w2_ref[...]
    b2 = b2_ref[...]

    state = gt_ref[0]                      # (bs, 30) ground truth at t=0
    out_ref[0] = state
    # Fully unrolled static rollout (steps = T-1 = 7): no grid-step overhead,
    # no per-step DMA issue; all indices are static leading-dim accesses.
    for t in range(steps):
        state_in = gt_ref[t] if t < gto else state     # teacher forcing
        h = jnp.tanh(jnp.dot(state_in, w1s, preferred_element_type=f32)
                     + jnp.dot(av_ref[t], w1av, preferred_element_type=f32)
                     + b1)
        state = jnp.dot(h, w2, preferred_element_type=f32) + b2            # (bs, 30)
        out_ref[t + 1] = state


def forward_through_dynamics(params, rotations, translations, style, deformation,
                             actions_and_variations, ground_truth_observations):
    bs, t, _ = rotations.shape

    # Pack ground truth once, go time-major so the kernel only does leading-dim
    # (trivially supported) static indexing.
    gt = jnp.concatenate([rotations, translations, style, deformation], axis=-1)  # (bs,T,30)
    gt_tm = jnp.transpose(gt, (1, 0, 2))                                          # (T,bs,30)
    av_tm = jnp.transpose(actions_and_variations, (1, 0, 2))                      # (T-1,bs,12)

    w1 = params["dyn_w1"]
    w1s = w1[:DYN_STATE_FEATURES]          # (30, H)
    w1av = w1[DYN_STATE_FEATURES:]         # (12, H)  actions | variations

    def spec2(arr):
        return pl.BlockSpec(arr.shape, lambda i: (0, 0))

    def spec3(arr):
        return pl.BlockSpec(arr.shape, lambda i: (0, 0, 0))

    out_tm = pl.pallas_call(
        functools.partial(_dynamics_kernel, gto=ground_truth_observations, steps=t - 1),
        out_shape=jax.ShapeDtypeStruct((t, bs, DYN_OUT_FEATURES), jnp.float32),
        grid=(1,),
        in_specs=[spec3(gt_tm), spec3(av_tm), spec2(w1s), spec2(w1av),
                  spec2(params["dyn_b1"]), spec2(params["dyn_w2"]), spec2(params["dyn_b2"])],
        out_specs=pl.BlockSpec((t, bs, DYN_OUT_FEATURES), lambda i: (0, 0, 0)),
        compiler_params=pltpu.CompilerParams(dimension_semantics=("arbitrary",)),
    )(gt_tm, av_tm, w1s, w1av, params["dyn_b1"], params["dyn_w2"], params["dyn_b2"])

    full = jnp.transpose(out_tm, (1, 0, 2))                                # (bs, T, 30)
    return (full[..., 0:3],
            full[..., 3:6],
            full[..., 6:6 + STYLE_FEATURES],
            full[..., 6 + STYLE_FEATURES:])


# ----------------------------- parameter init --------------------------------
def init_params(key):
    def dense(kk, fi, fo, scale=0.1):
        kw, _ = jax.random.split(kk)
        return (scale * jax.random.normal(kw, (fi, fo), jnp.float32),
                jnp.zeros((1, fo), jnp.float32))

    keys = jax.random.split(key, 8)
    p = {}
    # action network: state encoder, direction encoder, action classifier
    p["state_w1"], p["state_b1"] = dense(keys[0], ACTION_IN_FEATURES, HIDDEN)
    p["state_w2"], p["state_b2"] = dense(keys[1], HIDDEN, 2 * ACTION_SPACE_DIM)
    p["dir_w1"], p["dir_b1"] = dense(keys[2], 2 * ACTION_SPACE_DIM, HIDDEN)
    p["dir_w2"], p["dir_b2"] = dense(keys[3], HIDDEN, 2 * ACTION_SPACE_DIM)
    p["act_w1"], p["act_b1"] = dense(keys[4], ACTION_SPACE_DIM, HIDDEN)
    p["act_w2"], p["act_b2"] = dense(keys[5], HIDDEN, ACTIONS_COUNT)
    # dynamics network
    p["dyn_w1"], p["dyn_b1"] = dense(keys[6], DYN_IN_FEATURES, HIDDEN)
    p["dyn_w2"], p["dyn_b2"] = dense(keys[7], HIDDEN, DYN_OUT_FEATURES)
    return p


# ----------------------------- model components -------------------------------
def compute_sequence_validity(object_in_scene):
    # once False, stays False (cumulative AND over the time axis)
    return jnp.cumprod(object_in_scene.astype(jnp.int32), axis=1).astype(bool)


def compute_actions(params, rotations, translations, deformation, key,
                    sequence_validity=None, centroids=None):
    # Note: the reference also passes object_in_scene to the action network;
    # the MLP action network instantiated here does not consume it.
    bs, t, _ = rotations.shape
    rows = bs * t
    a = ACTION_SPACE_DIM
    k = ACTIONS_COUNT
    tm1 = t - 1

    feat_list = [rotations, translations]
    if USE_DEFORMATION:
        feat_list.append(deformation)
    feats = jnp.concatenate(feat_list, axis=-1).reshape(rows, -1)          # (rows, Fin)

    k1, k2, k3 = jax.random.split(key, 3)
    eps_state = jax.random.normal(k1, (rows, a), jnp.float32)
    eps_dir = jax.random.normal(k2, (rows, a), jnp.float32)
    gumbel = jax.random.gumbel(k3, (rows, k), jnp.float32)

    if centroids is None:
        slab = pallas_action_network(params, feats, eps_state, eps_dir, gumbel)
        new_centroids = None
    else:
        # Validity at time t gates the (t, t+1) direction (reference passes
        # sequence_validity[:, :-1]); dummy per-batch last rows get weight 0.
        time_mask = (jnp.arange(t) < t - 1).astype(jnp.float32)
        valid = (sequence_validity.astype(jnp.float32) * time_mask[None, :]).reshape(rows, 1)
        new_centroids, slab = pallas_action_network(
            params, feats, eps_state, eps_dir, gumbel, valid, centroids)

    slab = slab.reshape(bs, t, SLAB_WIDTH)
    out = {
        "action_states_distribution": slab[:, :, 0:16].reshape(bs, t, 2, a),
        "sampled_action_states": slab[:, :, 16:24],
        "action_directions_distribution": slab[:, :tm1, 24:40].reshape(bs, tm1, 2, a),
        "sampled_action_directions": slab[:, :tm1, 40:48],
        "action_logits": slab[:, :tm1, 48:52],
        "action_probabilities": slab[:, :tm1, 52:56],
        "sampled_actions": slab[:, :tm1, 56:60],
    }
    if centroids is not None:
        out["action_variations"] = slab[:, :tm1, 60:68]
        out["actions_and_variations"] = slab[:, :tm1, 56:68]   # actions | variations
        out["estimated_action_centroids"] = new_centroids
    return out


@functools.partial(jax.jit, static_argnames=("ground_truth_observations",))
def object_animation_forward(params, centroids, object_rotations, object_translations,
                             object_style, object_deformation, object_in_scene,
                             key, ground_truth_observations):
    sequence_validity = compute_sequence_validity(object_in_scene)

    k1, k2 = jax.random.split(key)
    act = compute_actions(params, object_rotations, object_translations, object_deformation,
                          k1, sequence_validity=sequence_validity, centroids=centroids)
    # TODO(synk): action_modifier hook not implemented (None in the reference call).

    (reconstructed_object_rotations, reconstructed_object_translations,
     reconstructed_object_style, reconstructed_object_deformation) = forward_through_dynamics(
        params, object_rotations, object_translations, object_style, object_deformation,
        act["actions_and_variations"], ground_truth_observations)

    rec_act = compute_actions(params, reconstructed_object_rotations,
                              reconstructed_object_translations,
                              reconstructed_object_deformation, k2)

    return {
        "reconstructed_object_rotations": reconstructed_object_rotations,
        "reconstructed_object_translations": reconstructed_object_translations,
        "reconstructed_object_style": reconstructed_object_style,
        "reconstructed_object_deformation": reconstructed_object_deformation,
        "sampled_actions": act["sampled_actions"],
        "action_logits": act["action_logits"],
        "action_directions_distribution": act["action_directions_distribution"],
        "sampled_action_directions": act["sampled_action_directions"],
        "action_states_distribution": act["action_states_distribution"],
        "sampled_action_states": act["sampled_action_states"],
        "action_variations": act["action_variations"],
        "reconstructed_action_logits": rec_act["action_logits"],
        "reconstructed_action_directions_distribution": rec_act["action_directions_distribution"],
        "reconstructed_sampled_action_directions": rec_act["sampled_action_directions"],
        "reconstructed_action_states_distribution": rec_act["action_states_distribution"],
        "reconstructed_sampled_action_states": rec_act["sampled_action_states"],
        "sequence_validity": sequence_validity,
        "estimated_action_centroids": act["estimated_action_centroids"],
    }


# ----------------------------- main ------------------------------------------
if __name__ == "__main__":
    root = jax.random.PRNGKey(0)
    k_param, k_rot, k_tr, k_sty, k_def, k_scene, k_fwd = jax.random.split(root, 7)

    params = init_params(k_param)
    centroids = jnp.zeros((ACTIONS_COUNT, ACTION_SPACE_DIM), jnp.float32)

    object_rotations = jax.random.normal(k_rot, (BATCH, OBS, 3), jnp.float32)
    object_translations = jax.random.normal(k_tr, (BATCH, OBS, 3), jnp.float32)
    object_style = jax.random.normal(k_sty, (BATCH, OBS, STYLE_FEATURES), jnp.float32)
    object_deformation = jax.random.normal(k_def, (BATCH, OBS, DEFORMATION_FEATURES), jnp.float32)
    object_in_scene = jax.random.uniform(k_scene, (BATCH, OBS)) > 0.2

    results = object_animation_forward(
        params, centroids, object_rotations, object_translations, object_style,
        object_deformation, object_in_scene, k_fwd,
        ground_truth_observations=GROUND_TRUTH_OBSERVATIONS)
    jax.block_until_ready(results)

    # sanity on output shapes implied by the module docstring
    assert results["reconstructed_object_rotations"].shape == (BATCH, OBS, 3)
    assert results["reconstructed_object_translations"].shape == (BATCH, OBS, 3)
    assert results["reconstructed_object_style"].shape == (BATCH, OBS, STYLE_FEATURES)
    assert results["reconstructed_object_deformation"].shape == (BATCH, OBS, DEFORMATION_FEATURES)
    assert results["sampled_actions"].shape == (BATCH, OBS - 1, ACTIONS_COUNT)
    assert results["action_logits"].shape == (BATCH, OBS - 1, ACTIONS_COUNT)
    assert results["action_directions_distribution"].shape == (BATCH, OBS - 1, 2, ACTION_SPACE_DIM)
    assert results["action_states_distribution"].shape == (BATCH, OBS, 2, ACTION_SPACE_DIM)
    assert results["action_variations"].shape == (BATCH, OBS - 1, ACTION_SPACE_DIM)
    assert results["sequence_validity"].shape == (BATCH, OBS)
    assert results["estimated_action_centroids"].shape == (ACTIONS_COUNT, ACTION_SPACE_DIM)

    print("KERNEL_OK")
</pallas_src>

<mosaic_0001>
module attributes {stable_mosaic.version = 11 : i64} {
  func.func @_dynamics_kernel(%arg0: i32, %arg1: memref<8x2x30xf32, #tpu.memory_space<vmem>>, %arg2: memref<7x2x12xf32, #tpu.memory_space<vmem>>, %arg3: memref<30x32xf32, #tpu.memory_space<vmem>>, %arg4: memref<12x32xf32, #tpu.memory_space<vmem>>, %arg5: memref<1x32xf32, #tpu.memory_space<vmem>>, %arg6: memref<32x30xf32, #tpu.memory_space<vmem>>, %arg7: memref<1x30xf32, #tpu.memory_space<vmem>>, %arg8: memref<8x2x30xf32, #tpu.memory_space<vmem>>) attributes {dimension_semantics = [#tpu.dimension_semantics<arbitrary>], iteration_bounds = array<i64: 1>, scalar_prefetch = 0 : i64, scratch_operands = 0 : i64, tpu.core_type = #tpu.core_type<tc>, window_params = [{pipeline_mode = #tpu.pipeline_mode<synchronous>, transform_indices = @transform_0, window_bounds = array<i64: 8, 2, 30>}, {pipeline_mode = #tpu.pipeline_mode<synchronous>, transform_indices = @transform_1, window_bounds = array<i64: 7, 2, 12>}, {pipeline_mode = #tpu.pipeline_mode<synchronous>, transform_indices = @transform_2, window_bounds = array<i64: 30, 32>}, {pipeline_mode = #tpu.pipeline_mode<synchronous>, transform_indices = @transform_3, window_bounds = array<i64: 12, 32>}, {pipeline_mode = #tpu.pipeline_mode<synchronous>, transform_indices = @transform_4, window_bounds = array<i64: 1, 32>}, {pipeline_mode = #tpu.pipeline_mode<synchronous>, transform_indices = @transform_5, window_bounds = array<i64: 32, 30>}, {pipeline_mode = #tpu.pipeline_mode<synchronous>, transform_indices = @transform_6, window_bounds = array<i64: 1, 30>}, {pipeline_mode = #tpu.pipeline_mode<synchronous>, transform_indices = @transform_7, window_bounds = array<i64: 8, 2, 30>}]} {
    %c0 = arith.constant 0 : index
    %c0_0 = arith.constant 0 : index
    %0 = vector.load %arg3[%c0, %c0_0] : memref<30x32xf32, #tpu.memory_space<vmem>>, vector<30x32xf32>
    %c0_1 = arith.constant 0 : index
    %c0_2 = arith.constant 0 : index
    %1 = vector.load %arg4[%c0_1, %c0_2] : memref<12x32xf32, #tpu.memory_space<vmem>>, vector<12x32xf32>
    %c0_3 = arith.constant 0 : index
    %c0_4 = arith.constant 0 : index
    %2 = vector.load %arg5[%c0_3, %c0_4] : memref<1x32xf32, #tpu.memory_space<vmem>>, vector<1x32xf32>
    %c0_5 = arith.constant 0 : index
    %c0_6 = arith.constant 0 : index
    %3 = vector.load %arg6[%c0_5, %c0_6] : memref<32x30xf32, #tpu.memory_space<vmem>>, vector<32x30xf32>
    %c0_7 = arith.constant 0 : index
    %c0_8 = arith.constant 0 : index
    %4 = vector.load %arg7[%c0_7, %c0_8] : memref<1x30xf32, #tpu.memory_space<vmem>>, vector<1x30xf32>
    %c0_9 = arith.constant 0 : index
    %c0_10 = arith.constant 0 : index
    %c0_11 = arith.constant 0 : index
    %5 = vector.load %arg1[%c0_9, %c0_10, %c0_11] : memref<8x2x30xf32, #tpu.memory_space<vmem>>, vector<1x2x30xf32>
    %6 = vector.shape_cast %5 : vector<1x2x30xf32> to vector<2x30xf32>
    %c0_12 = arith.constant 0 : index
    %c0_13 = arith.constant 0 : index
    %c0_14 = arith.constant 0 : index
    %7 = vector.load %arg8[%c0_12, %c0_13, %c0_14] : memref<8x2x30xf32, #tpu.memory_space<vmem>>, vector<1x2x30xf32>
    %8 = vector.shape_cast %7 : vector<1x2x30xf32> to vector<2x30xf32>
    %9 = vector.shape_cast %6 : vector<2x30xf32> to vector<1x2x30xf32>
    tpu.vector_store %arg8[%c0_12, %c0_13, %c0_14], %9 {strides = array<i32>} : memref<8x2x30xf32, #tpu.memory_space<vmem>>, vector<1x2x30xf32>,
    %c0_15 = arith.constant 0 : index
    %c0_16 = arith.constant 0 : index
    %c0_17 = arith.constant 0 : index
    %10 = vector.load %arg1[%c0_15, %c0_16, %c0_17] : memref<8x2x30xf32, #tpu.memory_space<vmem>>, vector<1x2x30xf32>
    %11 = vector.shape_cast %10 : vector<1x2x30xf32> to vector<2x30xf32>
    %cst = arith.constant dense<0.000000e+00> : vector<2x32xf32>
    %12 = tpu.matmul %11, %0, %cst {dimension_numbers = #tpu.dot_dimension_numbers<[1], [0], [0], [1], [0, 0, 1, 1], [], []>} : vector<2x30xf32>, vector<30x32xf32>, vector<2x32xf32> -> vector<2x32xf32>
    %c0_18 = arith.constant 0 : index
    %c0_19 = arith.constant 0 : index
    %c0_20 = arith.constant 0 : index
    %13 = vector.load %arg2[%c0_18, %c0_19, %c0_20] : memref<7x2x12xf32, #tpu.memory_space<vmem>>, vector<1x2x12xf32>
    %14 = vector.shape_cast %13 : vector<1x2x12xf32> to vector<2x12xf32>
    %cst_21 = arith.constant dense<0.000000e+00> : vector<2x32xf32>
    %15 = tpu.matmul %14, %1, %cst_21 {dimension_numbers = #tpu.dot_dimension_numbers<[1], [0], [0], [1], [0, 0, 1, 1], [], []>} : vector<2x12xf32>, vector<12x32xf32>, vector<2x32xf32> -> vector<2x32xf32>
    %16 = arith.addf %12, %15 : vector<2x32xf32>
    %17 = vector.broadcast %2 : vector<1x32xf32> to vector<2x32xf32>
    %18 = arith.addf %16, %17 : vector<2x32xf32>
    %19 = math.tanh %18 : vector<2x32xf32>
    %cst_22 = arith.constant dense<0.000000e+00> : vector<2x30xf32>
    %20 = tpu.matmul %19, %3, %cst_22 {dimension_numbers = #tpu.dot_dimension_numbers<[1], [0], [0], [1], [0, 0, 1, 1], [], []>} : vector<2x32xf32>, vector<32x30xf32>, vector<2x30xf32> -> vector<2x30xf32>
    %21 = vector.broadcast %4 : vector<1x30xf32> to vector<2x30xf32>
    %22 = arith.addf %20, %21 : vector<2x30xf32>
    %c1 = arith.constant 1 : index
    %c0_23 = arith.constant 0 : index
    %c0_24 = arith.constant 0 : index
    %23 = vector.load %arg8[%c1, %c0_23, %c0_24] : memref<8x2x30xf32, #tpu.memory_space<vmem>>, vector<1x2x30xf32>
    %24 = vector.shape_cast %23 : vector<1x2x30xf32> to vector<2x30xf32>
    %25 = vector.shape_cast %22 : vector<2x30xf32> to vector<1x2x30xf32>
    tpu.vector_store %arg8[%c1, %c0_23, %c0_24], %25 {strides = array<i32>} : memref<8x2x30xf32, #tpu.memory_space<vmem>>, vector<1x2x30xf32>,
    %c1_25 = arith.constant 1 : index
    %c0_26 = arith.constant 0 : index
    %c0_27 = arith.constant 0 : index
    %26 = vector.load %arg1[%c1_25, %c0_26, %c0_27] : memref<8x2x30xf32, #tpu.memory_space<vmem>>, vector<1x2x30xf32>
    %27 = vector.shape_cast %26 : vector<1x2x30xf32> to vector<2x30xf32>
    %cst_28 = arith.constant dense<0.000000e+00> : vector<2x32xf32>
    %28 = tpu.matmul %27, %0, %cst_28 {dimension_numbers = #tpu.dot_dimension_numbers<[1], [0], [0], [1], [0, 0, 1, 1], [], []>} : vector<2x30xf32>, vector<30x32xf32>, vector<2x32xf32> -> vector<2x32xf32>
    %c1_29 = arith.constant 1 : index
    %c0_30 = arith.constant 0 : index
    %c0_31 = arith.constant 0 : index
    %29 = vector.load %arg2[%c1_29, %c0_30, %c0_31] : memref<7x2x12xf32, #tpu.memory_space<vmem>>, vector<1x2x12xf32>
    %30 = vector.shape_cast %29 : vector<1x2x12xf32> to vector<2x12xf32>
    %cst_32 = arith.constant dense<0.000000e+00> : vector<2x32xf32>
    %31 = tpu.matmul %30, %1, %cst_32 {dimension_numbers = #tpu.dot_dimension_numbers<[1], [0], [0], [1], [0, 0, 1, 1], [], []>} : vector<2x12xf32>, vector<12x32xf32>, vector<2x32xf32> -> vector<2x32xf32>
    %32 = arith.addf %28, %31 : vector<2x32xf32>
    %33 = vector.broadcast %2 : vector<1x32xf32> to vector<2x32xf32>
    %34 = arith.addf %32, %33 : vector<2x32xf32>
    %35 = math.tanh %34 : vector<2x32xf32>
    %cst_33 = arith.constant dense<0.000000e+00> : vector<2x30xf32>
    %36 = tpu.matmul %35, %3, %cst_33 {dimension_numbers = #tpu.dot_dimension_numbers<[1], [0], [0], [1], [0, 0, 1, 1], [], []>} : vector<2x32xf32>, vector<32x30xf32>, vector<2x30xf32> -> vector<2x30xf32>
    %37 = vector.broadcast %4 : vector<1x30xf32> to vector<2x30xf32>
    %38 = arith.addf %36, %37 : vector<2x30xf32>
    %c2 = arith.constant 2 : index
    %c0_34 = arith.constant 0 : index
    %c0_35 = arith.constant 0 : index
    %39 = vector.load %arg8[%c2, %c0_34, %c0_35] : memref<8x2x30xf32, #tpu.memory_space<vmem>>, vector<1x2x30xf32>
    %40 = vector.shape_cast %39 : vector<1x2x30xf32> to vector<2x30xf32>
    %41 = vector.shape_cast %38 : vector<2x30xf32> to vector<1x2x30xf32>
    tpu.vector_store %arg8[%c2, %c0_34, %c0_35], %41 {strides = array<i32>} : memref<8x2x30xf32, #tpu.memory_space<vmem>>, vector<1x2x30xf32>,
    %c2_36 = arith.constant 2 : index
    %c0_37 = arith.constant 0 : index
    %c0_38 = arith.constant 0 : index
    %42 = vector.load %arg1[%c2_36, %c0_37, %c0_38] : memref<8x2x30xf32, #tpu.memory_space<vmem>>, vector<1x2x30xf32>
    %43 = vector.shape_cast %42 : vector<1x2x30xf32> to vector<2x30xf32>
    %cst_39 = arith.constant dense<0.000000e+00> : vector<2x32xf32>
    %44 = tpu.matmul %43, %0, %cst_39 {dimension_numbers = #tpu.dot_dimension_numbers<[1], [0], [0], [1], [0, 0, 1, 1], [], []>} : vector<2x30xf32>, vector<30x32xf32>, vector<2x32xf32> -> vector<2x32xf32>
    %c2_40 = arith.constant 2 : index
    %c0_41 = arith.constant 0 : index
    %c0_42 = arith.constant 0 : index
    %45 = vector.load %arg2[%c2_40, %c0_41, %c0_42] : memref<7x2x12xf32, #tpu.memory_space<vmem>>, vector<1x2x12xf32>
    %46 = vector.shape_cast %45 : vector<1x2x12xf32> to vector<2x12xf32>
    %cst_43 = arith.constant dense<0.000000e+00> : vector<2x32xf32>
    %47 = tpu.matmul %46, %1, %cst_43 {dimension_numbers = #tpu.dot_dimension_numbers<[1], [0], [0], [1], [0, 0, 1, 1], [], []>} : vector<2x12xf32>, vector<12x32xf32>, vector<2x32xf32> -> vector<2x32xf32>
    %48 = arith.addf %44, %47 : vector<2x32xf32>
    %49 = vector.broadcast %2 : vector<1x32xf32> to vector<2x32xf32>
    %50 = arith.addf %48, %49 : vector<2x32xf32>
    %51 = math.tanh %50 : vector<2x32xf32>
    %cst_44 = arith.constant dense<0.000000e+00> : vector<2x30xf32>
    %52 = tpu.matmul %51, %3, %cst_44 {dimension_numbers = #tpu.dot_dimension_numbers<[1], [0], [0], [1], [0, 0, 1, 1], [], []>} : vector<2x32xf32>, vector<32x30xf32>, vector<2x30xf32> -> vector<2x30xf32>
    %53 = vector.broadcast %4 : vector<1x30xf32> to vector<2x30xf32>
    %54 = arith.addf %52, %53 : vector<2x30xf32>
    %c3 = arith.constant 3 : index
    %c0_45 = arith.constant 0 : index
    %c0_46 = arith.constant 0 : index
    %55 = vector.load %arg8[%c3, %c0_45, %c0_46] : memref<8x2x30xf32, #tpu.memory_space<vmem>>, vector<1x2x30xf32>
    %56 = vector.shape_cast %55 : vector<1x2x30xf32> to vector<2x30xf32>
    %57 = vector.shape_cast %54 : vector<2x30xf32> to vector<1x2x30xf32>
    tpu.vector_store %arg8[%c3, %c0_45, %c0_46], %57 {strides = array<i32>} : memref<8x2x30xf32, #tpu.memory_space<vmem>>, vector<1x2x30xf32>,
    %c3_47 = arith.constant 3 : index
    %c0_48 = arith.constant 0 : index
    %c0_49 = arith.constant 0 : index
    %58 = vector.load %arg1[%c3_47, %c0_48, %c0_49] : memref<8x2x30xf32, #tpu.memory_space<vmem>>, vector<1x2x30xf32>
    %59 = vector.shape_cast %58 : vector<1x2x30xf32> to vector<2x30xf32>
    %cst_50 = arith.constant dense<0.000000e+00> : vector<2x32xf32>
    %60 = tpu.matmul %59, %0, %cst_50 {dimension_numbers = #tpu.dot_dimension_numbers<[1], [0], [0], [1], [0, 0, 1, 1], [], []>} : vector<2x30xf32>, vector<30x32xf32>, vector<2x32xf32> -> vector<2x32xf32>
    %c3_51 = arith.constant 3 : index
    %c0_52 = arith.constant 0 : index
    %c0_53 = arith.constant 0 : index
    %61 = vector.load %arg2[%c3_51, %c0_52, %c0_53] : memref<7x2x12xf32, #tpu.memory_space<vmem>>, vector<1x2x12xf32>
    %62 = vector.shape_cast %61 : vector<1x2x12xf32> to vector<2x12xf32>
    %cst_54 = arith.constant dense<0.000000e+00> : vector<2x32xf32>
    %63 = tpu.matmul %62, %1, %cst_54 {dimension_numbers = #tpu.dot_dimension_numbers<[1], [0], [0], [1], [0, 0, 1, 1], [], []>} : vector<2x12xf32>, vector<12x32xf32>, vector<2x32xf32> -> vector<2x32xf32>
    %64 = arith.addf %60, %63 : vector<2x32xf32>
    %65 = vector.broadcast %2 : vector<1x32xf32> to vector<2x32xf32>
    %66 = arith.addf %64, %65 : vector<2x32xf32>
    %67 = math.tanh %66 : vector<2x32xf32>
    %cst_55 = arith.constant dense<0.000000e+00> : vector<2x30xf32>
    %68 = tpu.matmul %67, %3, %cst_55 {dimension_numbers = #tpu.dot_dimension_numbers<[1], [0], [0], [1], [0, 0, 1, 1], [], []>} : vector<2x32xf32>, vector<32x30xf32>, vector<2x30xf32> -> vector<2x30xf32>
    %69 = vector.broadcast %4 : vector<1x30xf32> to vector<2x30xf32>
    %70 = arith.addf %68, %69 : vector<2x30xf32>
    %c4 = arith.constant 4 : index
    %c0_56 = arith.constant 0 : index
    %c0_57 = arith.constant 0 : index
    %71 = vector.load %arg8[%c4, %c0_56, %c0_57] : memref<8x2x30xf32, #tpu.memory_space<vmem>>, vector<1x2x30xf32>
    %72 = vector.shape_cast %71 : vector<1x2x30xf32> to vector<2x30xf32>
    %73 = vector.shape_cast %70 : vector<2x30xf32> to vector<1x2x30xf32>
    tpu.vector_store %arg8[%c4, %c0_56, %c0_57], %73 {strides = array<i32>} : memref<8x2x30xf32, #tpu.memory_space<vmem>>, vector<1x2x30xf32>,
    %cst_58 = arith.constant dense<0.000000e+00> : vector<2x32xf32>
    %74 = tpu.matmul %70, %0, %cst_58 {dimension_numbers = #tpu.dot_dimension_numbers<[1], [0], [0], [1], [0, 0, 1, 1], [], []>} : vector<2x30xf32>, vector<30x32xf32>, vector<2x32xf32> -> vector<2x32xf32>
    %c4_59 = arith.constant 4 : index
    %c0_60 = arith.constant 0 : index
    %c0_61 = arith.constant 0 : index
    %75 = vector.load %arg2[%c4_59, %c0_60, %c0_61] : memref<7x2x12xf32, #tpu.memory_space<vmem>>, vector<1x2x12xf32>
    %76 = vector.shape_cast %75 : vector<1x2x12xf32> to vector<2x12xf32>
    %cst_62 = arith.constant dense<0.000000e+00> : vector<2x32xf32>
    %77 = tpu.matmul %76, %1, %cst_62 {dimension_numbers = #tpu.dot_dimension_numbers<[1], [0], [0], [1], [0, 0, 1, 1], [], []>} : vector<2x12xf32>, vector<12x32xf32>, vector<2x32xf32> -> vector<2x32xf32>
    %78 = arith.addf %74, %77 : vector<2x32xf32>
    %79 = vector.broadcast %2 : vector<1x32xf32> to vector<2x32xf32>
    %80 = arith.addf %78, %79 : vector<2x32xf32>
    %81 = math.tanh %80 : vector<2x32xf32>
    %cst_63 = arith.constant dense<0.000000e+00> : vector<2x30xf32>
    %82 = tpu.matmul %81, %3, %cst_63 {dimension_numbers = #tpu.dot_dimension_numbers<[1], [0], [0], [1], [0, 0, 1, 1], [], []>} : vector<2x32xf32>, vector<32x30xf32>, vector<2x30xf32> -> vector<2x30xf32>
    %83 = vector.broadcast %4 : vector<1x30xf32> to vector<2x30xf32>
    %84 = arith.addf %82, %83 : vector<2x30xf32>
    %c5 = arith.constant 5 : index
    %c0_64 = arith.constant 0 : index
    %c0_65 = arith.constant 0 : index
    %85 = vector.load %arg8[%c5, %c0_64, %c0_65] : memref<8x2x30xf32, #tpu.memory_space<vmem>>, vector<1x2x30xf32>
    %86 = vector.shape_cast %85 : vector<1x2x30xf32> to vector<2x30xf32>
    %87 = vector.shape_cast %84 : vector<2x30xf32> to vector<1x2x30xf32>
    tpu.vector_store %arg8[%c5, %c0_64, %c0_65], %87 {strides = array<i32>} : memref<8x2x30xf32, #tpu.memory_space<vmem>>, vector<1x2x30xf32>,
    %cst_66 = arith.constant dense<0.000000e+00> : vector<2x32xf32>
    %88 = tpu.matmul %84, %0, %cst_66 {dimension_numbers = #tpu.dot_dimension_numbers<[1], [0], [0], [1], [0, 0, 1, 1], [], []>} : vector<2x30xf32>, vector<30x32xf32>, vector<2x32xf32> -> vector<2x32xf32>
    %c5_67 = arith.constant 5 : index
    %c0_68 = arith.constant 0 : index
    %c0_69 = arith.constant 0 : index
    %89 = vector.load %arg2[%c5_67, %c0_68, %c0_69] : memref<7x2x12xf32, #tpu.memory_space<vmem>>, vector<1x2x12xf32>
    %90 = vector.shape_cast %89 : vector<1x2x12xf32> to vector<2x12xf32>
    %cst_70 = arith.constant dense<0.000000e+00> : vector<2x32xf32>
    %91 = tpu.matmul %90, %1, %cst_70 {dimension_numbers = #tpu.dot_dimension_numbers<[1], [0], [0], [1], [0, 0, 1, 1], [], []>} : vector<2x12xf32>, vector<12x32xf32>, vector<2x32xf32> -> vector<2x32xf32>
    %92 = arith.addf %88, %91 : vector<2x32xf32>
    %93 = vector.broadcast %2 : vector<1x32xf32> to vector<2x32xf32>
    %94 = arith.addf %92, %93 : vector<2x32xf32>
    %95 = math.tanh %94 : vector<2x32xf32>
    %cst_71 = arith.constant dense<0.000000e+00> : vector<2x30xf32>
    %96 = tpu.matmul %95, %3, %cst_71 {dimension_numbers = #tpu.dot_dimension_numbers<[1], [0], [0], [1], [0, 0, 1, 1], [], []>} : vector<2x32xf32>, vector<32x30xf32>, vector<2x30xf32> -> vector<2x30xf32>
    %97 = vector.broadcast %4 : vector<1x30xf32> to vector<2x30xf32>
    %98 = arith.addf %96, %97 : vector<2x30xf32>
    %c6 = arith.constant 6 : index
    %c0_72 = arith.constant 0 : index
    %c0_73 = arith.constant 0 : index
    %99 = vector.load %arg8[%c6, %c0_72, %c0_73] : memref<8x2x30xf32, #tpu.memory_space<vmem>>, vector<1x2x30xf32>
    %100 = vector.shape_cast %99 : vector<1x2x30xf32> to vector<2x30xf32>
    %101 = vector.shape_cast %98 : vector<2x30xf32> to vector<1x2x30xf32>
    tpu.vector_store %arg8[%c6, %c0_72, %c0_73], %101 {strides = array<i32>} : memref<8x2x30xf32, #tpu.memory_space<vmem>>, vector<1x2x30xf32>,
    %cst_74 = arith.constant dense<0.000000e+00> : vector<2x32xf32>
    %102 = tpu.matmul %98, %0, %cst_74 {dimension_numbers = #tpu.dot_dimension_numbers<[1], [0], [0], [1], [0, 0, 1, 1], [], []>} : vector<2x30xf32>, vector<30x32xf32>, vector<2x32xf32> -> vector<2x32xf32>
    %c6_75 = arith.constant 6 : index
    %c0_76 = arith.constant 0 : index
    %c0_77 = arith.constant 0 : index
    %103 = vector.load %arg2[%c6_75, %c0_76, %c0_77] : memref<7x2x12xf32, #tpu.memory_space<vmem>>, vector<1x2x12xf32>
    %104 = vector.shape_cast %103 : vector<1x2x12xf32> to vector<2x12xf32>
    %cst_78 = arith.constant dense<0.000000e+00> : vector<2x32xf32>
    %105 = tpu.matmul %104, %1, %cst_78 {dimension_numbers = #tpu.dot_dimension_numbers<[1], [0], [0], [1], [0, 0, 1, 1], [], []>} : vector<2x12xf32>, vector<12x32xf32>, vector<2x32xf32> -> vector<2x32xf32>
    %106 = arith.addf %102, %105 : vector<2x32xf32>
    %107 = vector.broadcast %2 : vector<1x32xf32> to vector<2x32xf32>
    %108 = arith.addf %106, %107 : vector<2x32xf32>
    %109 = math.tanh %108 : vector<2x32xf32>
    %cst_79 = arith.constant dense<0.000000e+00> : vector<2x30xf32>
    %110 = tpu.matmul %109, %3, %cst_79 {dimension_numbers = #tpu.dot_dimension_numbers<[1], [0], [0], [1], [0, 0, 1, 1], [], []>} : vector<2x32xf32>, vector<32x30xf32>, vector<2x30xf32> -> vector<2x30xf32>
    %111 = vector.broadcast %4 : vector<1x30xf32> to vector<2x30xf32>
    %112 = arith.addf %110, %111 : vector<2x30xf32>
    %c7 = arith.constant 7 : index
    %c0_80 = arith.constant 0 : index
    %c0_81 = arith.constant 0 : index
    %113 = vector.load %arg8[%c7, %c0_80, %c0_81] : memref<8x2x30xf32, #tpu.memory_space<vmem>>, vector<1x2x30xf32>
    %114 = vector.shape_cast %113 : vector<1x2x30xf32> to vector<2x30xf32>
    %115 = vector.shape_cast %112 : vector<2x30xf32> to vector<1x2x30xf32>
    tpu.vector_store %arg8[%c7, %c0_80, %c0_81], %115 {strides = array<i32>} : memref<8x2x30xf32, #tpu.memory_space<vmem>>, vector<1x2x30xf32>,
    return
  }
  func.func @transform_0(%arg0: i32) -> (i32, i32, i32) {
    %c0_i32 = arith.constant 0 : i32
    %c0_i32_0 = arith.constant 0 : i32
    %c0_i32_1 = arith.constant 0 : i32
    %c0_i32_2 = arith.constant 0 : i32
    return %c0_i32, %c0_i32_0, %c0_i32_1 : i32, i32, i32
  }
  func.func @transform_1(%arg0: i32) -> (i32, i32, i32) {
    %c0_i32 = arith.constant 0 : i32
    %c0_i32_0 = arith.constant 0 : i32
    %c0_i32_1 = arith.constant 0 : i32
    %c0_i32_2 = arith.constant 0 : i32
    return %c0_i32, %c0_i32_0, %c0_i32_1 : i32, i32, i32
  }
  func.func @transform_2(%arg0: i32) -> (i32, i32) {
    %c0_i32 = arith.constant 0 : i32
    %c0_i32_0 = arith.constant 0 : i32
    %c0_i32_1 = arith.constant 0 : i32
    return %c0_i32, %c0_i32_0 : i32, i32
  }
  func.func @transform_3(%arg0: i32) -> (i32, i32) {
    %c0_i32 = arith.constant 0 : i32
    %c0_i32_0 = arith.constant 0 : i32
    %c0_i32_1 = arith.constant 0 : i32
    return %c0_i32, %c0_i32_0 : i32, i32
  }
  func.func @transform_4(%arg0: i32) -> (i32, i32) {
    %c0_i32 = arith.constant 0 : i32
    %c0_i32_0 = arith.constant 0 : i32
    %c0_i32_1 = arith.constant 0 : i32
    return %c0_i32, %c0_i32_0 : i32, i32
  }
  func.func @transform_5(%arg0: i32) -> (i32, i32) {
    %c0_i32 = arith.constant 0 : i32
    %c0_i32_0 = arith.constant 0 : i32
    %c0_i32_1 = arith.constant 0 : i32
    return %c0_i32, %c0_i32_0 : i32, i32
  }
  func.func @transform_6(%arg0: i32) -> (i32, i32) {
    %c0_i32 = arith.constant 0 : i32
    %c0_i32_0 = arith.constant 0 : i32
    %c0_i32_1 = arith.constant 0 : i32
    return %c0_i32, %c0_i32_0 : i32, i32
  }
  func.func @transform_7(%arg0: i32) -> (i32, i32, i32) {
    %c0_i32 = arith.constant 0 : i32
    %c0_i32_0 = arith.constant 0 : i32
    %c0_i32_1 = arith.constant 0 : i32
    %c0_i32_2 = arith.constant 0 : i32
    return %c0_i32, %c0_i32_0, %c0_i32_1 : i32, i32, i32
  }
}

module attributes {stable_mosaic.version = 11 : i64} {
  func.func @_action_centroid_kernel(%arg0: i32, %arg1: memref<16x14xf32, #tpu.memory_space<vmem>>, %arg2: memref<16x8xf32, #tpu.memory_space<vmem>>, %arg3: memref<16x8xf32, #tpu.memory_space<vmem>>, %arg4: memref<16x4xf32, #tpu.memory_space<vmem>>, %arg5: memref<16x1xf32, #tpu.memory_space<vmem>>, %arg6: memref<4x8xf32, #tpu.memory_space<vmem>>, %arg7: memref<14x32xf32, #tpu.memory_space<vmem>>, %arg8: memref<1x32xf32, #tpu.memory_space<vmem>>, %arg9: memref<32x16xf32, #tpu.memory_space<vmem>>, %arg10: memref<1x16xf32, #tpu.memory_space<vmem>>, %arg11: memref<8x32xf32, #tpu.memory_space<vmem>>, %arg12: memref<8x32xf32, #tpu.memory_space<vmem>>, %arg13: memref<1x32xf32, #tpu.memory_space<vmem>>, %arg14: memref<32x16xf32, #tpu.memory_space<vmem>>, %arg15: memref<1x16xf32, #tpu.memory_space<vmem>>, %arg16: memref<8x32xf32, #tpu.memory_space<vmem>>, %arg17: memref<1x32xf32, #tpu.memory_space<vmem>>, %arg18: memref<32x4xf32, #tpu.memory_space<vmem>>, %arg19: memref<1x4xf32, #tpu.memory_space<vmem>>, %arg20: memref<4x8xf32, #tpu.memory_space<vmem>>, %arg21: memref<16x128xf32, #tpu.memory_space<vmem>>) attributes {dimension_semantics = [#tpu.dimension_semantics<arbitrary>], iteration_bounds = array<i64: 1>, scalar_prefetch = 0 : i64, scratch_operands = 0 : i64, tpu.core_type = #tpu.core_type<tc>, window_params = [{pipeline_mode = #tpu.pipeline_mode<synchronous>, transform_indices = @transform_0, window_bounds = array<i64: 16, 14>}, {pipeline_mode = #tpu.pipeline_mode<synchronous>, transform_indices = @transform_1, window_bounds = array<i64: 16, 8>}, {pipeline_mode = #tpu.pipeline_mode<synchronous>, transform_indices = @transform_2, window_bounds = array<i64: 16, 8>}, {pipeline_mode = #tpu.pipeline_mode<synchronous>, transform_indices = @transform_3, window_bounds = array<i64: 16, 4>}, {pipeline_mode = #tpu.pipeline_mode<synchronous>, transform_indices = @transform_4, window_bounds = array<i64: 16, 1>}, {pipeline_mode = #tpu.pipeline_mode<synchronous>, transform_indices = @transform_5, window_bounds = array<i64: 4, 8>}, {pipeline_mode = #tpu.pipeline_mode<synchronous>, transform_indices = @transform_6, window_bounds = array<i64: 14, 32>}, {pipeline_mode = #tpu.pipeline_mode<synchronous>, transform_indices = @transform_7, window_bounds = array<i64: 1, 32>}, {pipeline_mode = #tpu.pipeline_mode<synchronous>, transform_indices = @transform_8, window_bounds = array<i64: 32, 16>}, {pipeline_mode = #tpu.pipeline_mode<synchronous>, transform_indices = @transform_9, window_bounds = array<i64: 1, 16>}, {pipeline_mode = #tpu.pipeline_mode<synchronous>, transform_indices = @transform_10, window_bounds = array<i64: 8, 32>}, {pipeline_mode = #tpu.pipeline_mode<synchronous>, transform_indices = @transform_11, window_bounds = array<i64: 8, 32>}, {pipeline_mode = #tpu.pipeline_mode<synchronous>, transform_indices = @transform_12, window_bounds = array<i64: 1, 32>}, {pipeline_mode = #tpu.pipeline_mode<synchronous>, transform_indices = @transform_13, window_bounds = array<i64: 32, 16>}, {pipeline_mode = #tpu.pipeline_mode<synchronous>, transform_indices = @transform_14, window_bounds = array<i64: 1, 16>}, {pipeline_mode = #tpu.pipeline_mode<synchronous>, transform_indices = @transform_15, window_bounds = array<i64: 8, 32>}, {pipeline_mode = #tpu.pipeline_mode<synchronous>, transform_indices = @transform_16, window_bounds = array<i64: 1, 32>}, {pipeline_mode = #tpu.pipeline_mode<synchronous>, transform_indices = @transform_17, window_bounds = array<i64: 32, 4>}, {pipeline_mode = #tpu.pipeline_mode<synchronous>, transform_indices = @transform_18, window_bounds = array<i64: 1, 4>}, {pipeline_mode = #tpu.pipeline_mode<synchronous>, transform_indices = @transform_19, window_bounds = array<i64: 4, 8>}, {pipeline_mode = #tpu.pipeline_mode<synchronous>, transform_indices = @transform_20, window_bounds = array<i64: 16, 128>}]} {
    %c0 = arith.constant 0 : index
    %c0_0 = arith.constant 0 : index
    %0 = vector.load %arg1[%c0, %c0_0] : memref<16x14xf32, #tpu.memory_space<vmem>>, vector<16x14xf32>
    %c0_1 = arith.constant 0 : index
    %c0_2 = arith.constant 0 : index
    %1 = vector.load %arg2[%c0_1, %c0_2] : memref<16x8xf32, #tpu.memory_space<vmem>>, vector<16x8xf32>
    %c0_3 = arith.constant 0 : index
    %c0_4 = arith.constant 0 : index
    %2 = vector.load %arg3[%c0_3, %c0_4] : memref<16x8xf32, #tpu.memory_space<vmem>>, vector<16x8xf32>
    %c0_5 = arith.constant 0 : index
    %c0_6 = arith.constant 0 : index
    %3 = vector.load %arg4[%c0_5, %c0_6] : memref<16x4xf32, #tpu.memory_space<vmem>>, vector<16x4xf32>
    %c0_7 = arith.constant 0 : index
    %c0_8 = arith.constant 0 : index
    %4 = vector.load %arg7[%c0_7, %c0_8] : memref<14x32xf32, #tpu.memory_space<vmem>>, vector<14x32xf32>
    %c0_9 = arith.constant 0 : index
    %c0_10 = arith.constant 0 : index
    %5 = vector.load %arg8[%c0_9, %c0_10] : memref<1x32xf32, #tpu.memory_space<vmem>>, vector<1x32xf32>
    %c0_11 = arith.constant 0 : index
    %c0_12 = arith.constant 0 : index
    %6 = vector.load %arg9[%c0_11, %c0_12] : memref<32x16xf32, #tpu.memory_space<vmem>>, vector<32x16xf32>
    %c0_13 = arith.constant 0 : index
    %c0_14 = arith.constant 0 : index
    %7 = vector.load %arg10[%c0_13, %c0_14] : memref<1x16xf32, #tpu.memory_space<vmem>>, vector<1x16xf32>
    %c0_15 = arith.constant 0 : index
    %c0_16 = arith.constant 0 : index
    %8 = vector.load %arg11[%c0_15, %c0_16] : memref<8x32xf32, #tpu.memory_space<vmem>>, vector<8x32xf32>
    %c0_17 = arith.constant 0 : index
    %c0_18 = arith.constant 0 : index
    %9 = vector.load %arg12[%c0_17, %c0_18] : memref<8x32xf32, #tpu.memory_space<vmem>>, vector<8x32xf32>
    %c0_19 = arith.constant 0 : index
    %c0_20 = arith.constant 0 : index
    %10 = vector.load %arg13[%c0_19, %c0_20] : memref<1x32xf32, #tpu.memory_space<vmem>>, vector<1x32xf32>
    %c0_21 = arith.constant 0 : index
    %c0_22 = arith.constant 0 : index
    %11 = vector.load %arg14[%c0_21, %c0_22] : memref<32x16xf32, #tpu.memory_space<vmem>>, vector<32x16xf32>
    %c0_23 = arith.constant 0 : index
    %c0_24 = arith.constant 0 : index
    %12 = vector.load %arg15[%c0_23, %c0_24] : memref<1x16xf32, #tpu.memory_space<vmem>>, vector<1x16xf32>
    %c0_25 = arith.constant 0 : index
    %c0_26 = arith.constant 0 : index
    %13 = vector.load %arg16[%c0_25, %c0_26] : memref<8x32xf32, #tpu.memory_space<vmem>>, vector<8x32xf32>
    %c0_27 = arith.constant 0 : index
    %c0_28 = arith.constant 0 : index
    %14 = vector.load %arg17[%c0_27, %c0_28] : memref<1x32xf32, #tpu.memory_space<vmem>>, vector<1x32xf32>
    %c0_29 = arith.constant 0 : index
    %c0_30 = arith.constant 0 : index
    %15 = vector.load %arg18[%c0_29, %c0_30] : memref<32x4xf32, #tpu.memory_space<vmem>>, vector<32x4xf32>
    %c0_31 = arith.constant 0 : index
    %c0_32 = arith.constant 0 : index
    %16 = vector.load %arg19[%c0_31, %c0_32] : memref<1x4xf32, #tpu.memory_space<vmem>>, vector<1x4xf32>
    %cst = arith.constant dense<0.000000e+00> : vector<16x32xf32>
    %17 = tpu.matmul %0, %4, %cst {dimension_numbers = #tpu.dot_dimension_numbers<[1], [0], [0], [1], [0, 0, 1, 1], [], []>} : vector<16x14xf32>, vector<14x32xf32>, vector<16x32xf32> -> vector<16x32xf32>
    %18 = vector.broadcast %5 : vector<1x32xf32> to vector<16x32xf32>
    %19 = arith.addf %17, %18 : vector<16x32xf32>
    %20 = math.tanh %19 : vector<16x32xf32>
    %cst_33 = arith.constant dense<0.000000e+00> : vector<16x16xf32>
    %21 = tpu.matmul %20, %6, %cst_33 {dimension_numbers = #tpu.dot_dimension_numbers<[1], [0], [0], [1], [0, 0, 1, 1], [], []>} : vector<16x32xf32>, vector<32x16xf32>, vector<16x16xf32> -> vector<16x16xf32>
    %22 = vector.broadcast %7 : vector<1x16xf32> to vector<16x16xf32>
    %23 = arith.addf %21, %22 : vector<16x16xf32>
    %24 = vector.extract_strided_slice %23 {offsets = [0, 0], sizes = [16, 8], strides = [1, 1]} : vector<16x16xf32> to vector<16x8xf32>
    %25 = vector.extract_strided_slice %23 {offsets = [0, 8], sizes = [16, 8], strides = [1, 1]} : vector<16x16xf32> to vector<16x8xf32>
    %cst_34 = arith.constant 5.000000e-01 : f32
    %26 = vector.broadcast %cst_34 : f32 to vector<16x8xf32>
    %27 = arith.mulf %26, %25 : vector<16x8xf32>
    %28 = math.exp %27 : vector<16x8xf32>
    %29 = arith.mulf %28, %1 : vector<16x8xf32>
    %30 = arith.addf %24, %29 : vector<16x8xf32>
    %31 = tpu.iota {dimensions = array<i32: 0>} : vector<16x16xi32>
    %32 = tpu.iota {dimensions = array<i32: 1>} : vector<16x16xi32>
    %c1_i32 = arith.constant 1 : i32
    %33 = vector.broadcast %c1_i32 : i32 to vector<16x16xi32>
    %34 = arith.addi %31, %33 : vector<16x16xi32>
    %35 = arith.cmpi eq, %32, %34 : vector<16x16xi32>
    %36 = arith.extui %35 : vector<16x16xi1> to vector<16x16xi32>
    %37 = arith.sitofp %36 : vector<16x16xi32> to vector<16x16xf32>
    %cst_35 = arith.constant dense<0.000000e+00> : vector<16x8xf32>
    %38 = tpu.matmul %37, %30, %cst_35 {dimension_numbers = #tpu.dot_dimension_numbers<[1], [0], [0], [1], [0, 0, 1, 1], [], []>} : vector<16x16xf32>, vector<16x8xf32>, vector<16x8xf32> -> vector<16x8xf32>
    %cst_36 = arith.constant dense<0.000000e+00> : vector<16x32xf32>
    %39 = tpu.matmul %30, %8, %cst_36 {dimension_numbers = #tpu.dot_dimension_numbers<[1], [0], [0], [1], [0, 0, 1, 1], [], []>} : vector<16x8xf32>, vector<8x32xf32>, vector<16x32xf32> -> vector<16x32xf32>
    %cst_37 = arith.constant dense<0.000000e+00> : vector<16x32xf32>
    %40 = tpu.matmul %38, %9, %cst_37 {dimension_numbers = #tpu.dot_dimension_numbers<[1], [0], [0], [1], [0, 0, 1, 1], [], []>} : vector<16x8xf32>, vector<8x32xf32>, vector<16x32xf32> -> vector<16x32xf32>
    %41 = arith.addf %39, %40 : vector<16x32xf32>
    %42 = vector.broadcast %10 : vector<1x32xf32> to vector<16x32xf32>
    %43 = arith.addf %41, %42 : vector<16x32xf32>
    %44 = math.tanh %43 : vector<16x32xf32>
    %cst_38 = arith.constant dense<0.000000e+00> : vector<16x16xf32>
    %45 = tpu.matmul %44, %11, %cst_38 {dimension_numbers = #tpu.dot_dimension_numbers<[1], [0], [0], [1], [0, 0, 1, 1], [], []>} : vector<16x32xf32>, vector<32x16xf32>, vector<16x16xf32> -> vector<16x16xf32>
    %46 = vector.broadcast %12 : vector<1x16xf32> to vector<16x16xf32>
    %47 = arith.addf %45, %46 : vector<16x16xf32>
    %48 = vector.extract_strided_slice %47 {offsets = [0, 0], sizes = [16, 8], strides = [1, 1]} : vector<16x16xf32> to vector<16x8xf32>
    %49 = vector.extract_strided_slice %47 {offsets = [0, 8], sizes = [16, 8], strides = [1, 1]} : vector<16x16xf32> to vector<16x8xf32>
    %cst_39 = arith.constant 5.000000e-01 : f32
    %50 = vector.broadcast %cst_39 : f32 to vector<16x8xf32>
    %51 = arith.mulf %50, %49 : vector<16x8xf32>
    %52 = math.exp %51 : vector<16x8xf32>
    %53 = arith.mulf %52, %2 : vector<16x8xf32>
    %54 = arith.addf %48, %53 : vector<16x8xf32>
    %cst_40 = arith.constant dense<0.000000e+00> : vector<16x32xf32>
    %55 = tpu.matmul %54, %13, %cst_40 {dimension_numbers = #tpu.dot_dimension_numbers<[1], [0], [0], [1], [0, 0, 1, 1], [], []>} : vector<16x8xf32>, vector<8x32xf32>, vector<16x32xf32> -> vector<16x32xf32>
    %56 = vector.broadcast %14 : vector<1x32xf32> to vector<16x32xf32>
    %57 = arith.addf %55, %56 : vector<16x32xf32>
    %58 = math.tanh %57 : vector<16x32xf32>
    %cst_41 = arith.constant dense<0.000000e+00> : vector<16x4xf32>
    %59 = tpu.matmul %58, %15, %cst_41 {dimension_numbers = #tpu.dot_dimension_numbers<[1], [0], [0], [1], [0, 0, 1, 1], [], []>} : vector<16x32xf32>, vector<32x4xf32>, vector<16x4xf32> -> vector<16x4xf32>
    %60 = vector.broadcast %16 : vector<1x4xf32> to vector<16x4xf32>
    %61 = arith.addf %59, %60 : vector<16x4xf32>
    %cst_42 = arith.constant dense<0xFF800000> : vector<16xf32>
    %62 = vector.multi_reduction <maximumf>, %61, %cst_42 [1] : vector<16x4xf32> to vector<16xf32>
    %63 = vector.shape_cast %62 : vector<16xf32> to vector<16x1xf32>
    %64 = vector.broadcast %63 : vector<16x1xf32> to vector<16x4xf32>
    %65 = arith.subf %61, %64 : vector<16x4xf32>
    %66 = math.exp %65 : vector<16x4xf32>
    %cst_43 = arith.constant dense<0.000000e+00> : vector<16xf32>
    %67 = vector.multi_reduction <add>, %66, %cst_43 [1] : vector<16x4xf32> to vector<16xf32>
    %68 = vector.shape_cast %67 : vector<16xf32> to vector<16x1xf32>
    %69 = vector.broadcast %68 : vector<16x1xf32> to vector<16x4xf32>
    %70 = arith.divf %66, %69 : vector<16x4xf32>
    %71 = math.log %68 : vector<16x1xf32>
    %72 = vector.broadcast %71 : vector<16x1xf32> to vector<16x4xf32>
    %73 = arith.subf %65, %72 : vector<16x4xf32>
    %74 = arith.addf %73, %3 : vector<16x4xf32>
    %cst_44 = arith.constant 1.000000e+00 : f32
    %75 = vector.broadcast %cst_44 : f32 to vector<16x4xf32>
    %76 = arith.divf %74, %75 : vector<16x4xf32>
    %cst_45 = arith.constant dense<0xFF800000> : vector<16xf32>
    %77 = vector.multi_reduction <maximumf>, %76, %cst_45 [1] : vector<16x4xf32> to vector<16xf32>
    %78 = vector.shape_cast %77 : vector<16xf32> to vector<16x1xf32>
    %79 = vector.broadcast %78 : vector<16x1xf32> to vector<16x4xf32>
    %80 = arith.subf %76, %79 : vector<16x4xf32>
    %81 = math.exp %80 : vector<16x4xf32>
    %cst_46 = arith.constant dense<0.000000e+00> : vector<16xf32>
    %82 = vector.multi_reduction <add>, %81, %cst_46 [1] : vector<16x4xf32> to vector<16xf32>
    %83 = vector.shape_cast %82 : vector<16xf32> to vector<16x1xf32>
    %84 = vector.broadcast %83 : vector<16x1xf32> to vector<16x4xf32>
    %85 = arith.divf %81, %84 : vector<16x4xf32>
    %c0_47 = arith.constant 0 : index
    %c0_48 = arith.constant 0 : index
    %86 = vector.load %arg5[%c0_47, %c0_48] : memref<16x1xf32, #tpu.memory_space<vmem>>, vector<16x1xf32>
    %87 = vector.broadcast %86 : vector<16x1xf32> to vector<16x4xf32>
    %88 = arith.mulf %70, %87 : vector<16x4xf32>
    %cst_49 = arith.constant dense<0.000000e+00> : vector<4x8xf32>
    %89 = tpu.matmul %88, %48, %cst_49 {dimension_numbers = #tpu.dot_dimension_numbers<[0], [0], [1], [1], [0, 1, 1, 1], [], []>} : vector<16x4xf32>, vector<16x8xf32>, vector<4x8xf32> -> vector<4x8xf32>
    %cst_50 = arith.constant dense<0.000000e+00> : vector<4xf32>
    %90 = vector.multi_reduction <add>, %88, %cst_50 [0] : vector<16x4xf32> to vector<4xf32>
    %91 = vector.shape_cast %90 : vector<4xf32> to vector<1x4xf32>
    %92 = tpu.transpose %91, [1, 0] : vector<1x4xf32> -> vector<4x1xf32>
    %cst_51 = arith.constant 9.99999997E-7 : f32
    %93 = vector.broadcast %cst_51 : f32 to vector<4x1xf32>
    %94 = arith.addf %92, %93 : vector<4x1xf32>
    %95 = vector.broadcast %94 : vector<4x1xf32> to vector<4x8xf32>
    %96 = arith.divf %89, %95 : vector<4x8xf32>
    %c0_52 = arith.constant 0 : index
    %c0_53 = arith.constant 0 : index
    %97 = vector.load %arg6[%c0_52, %c0_53] : memref<4x8xf32, #tpu.memory_space<vmem>>, vector<4x8xf32>
    %cst_54 = arith.constant 0.899999976 : f32
    %98 = vector.broadcast %cst_54 : f32 to vector<4x8xf32>
    %99 = arith.mulf %98, %97 : vector<4x8xf32>
    %cst_55 = arith.constant 1.000000e-01 : f32
    %100 = vector.broadcast %cst_55 : f32 to vector<4x8xf32>
    %101 = arith.mulf %100, %96 : vector<4x8xf32>
    %102 = arith.addf %99, %101 : vector<4x8xf32>
    %c0_56 = arith.constant 0 : index
    %c0_57 = arith.constant 0 : index
    %103 = vector.load %arg20[%c0_56, %c0_57] : memref<4x8xf32, #tpu.memory_space<vmem>>, vector<4x8xf32>
    tpu.vector_store %arg20[%c0_56, %c0_57], %102 {strides = array<i32>} : memref<4x8xf32, #tpu.memory_space<vmem>>, vector<4x8xf32>,
    %cst_58 = arith.constant dense<0.000000e+00> : vector<16x8xf32>
    %104 = tpu.matmul %85, %102, %cst_58 {dimension_numbers = #tpu.dot_dimension_numbers<[1], [0], [0], [1], [0, 0, 1, 1], [], []>} : vector<16x4xf32>, vector<4x8xf32>, vector<16x8xf32> -> vector<16x8xf32>
    %105 = arith.subf %54, %104 : vector<16x8xf32>
    %cst_59 = arith.constant 0.000000e+00 : f32
    %106 = vector.broadcast %cst_59 : f32 to vector<16x60xf32>
    %107 = tpu.concatenate %23, %30, %47, %54, %61, %70, %85, %105, %106 in 1 : vector<16x16xf32>, vector<16x8xf32>, vector<16x16xf32>, vector<16x8xf32>, vector<16x4xf32>, vector<16x4xf32>, vector<16x4xf32>, vector<16x8xf32>, vector<16x60xf32> -> vector<16x128xf32>
    %c0_60 = arith.constant 0 : index
    %c0_61 = arith.constant 0 : index
    %108 = vector.load %arg21[%c0_60, %c0_61] : memref<16x128xf32, #tpu.memory_space<vmem>>, vector<16x128xf32>
    tpu.vector_store %arg21[%c0_60, %c0_61], %107 {strides = array<i32>} : memref<16x128xf32, #tpu.memory_space<vmem>>, vector<16x128xf32>,
    return
  }
  func.func @transform_0(%arg0: i32) -> (i32, i32) {
    %c0_i32 = arith.constant 0 : i32
    %c0_i32_0 = arith.constant 0 : i32
    %c0_i32_1 = arith.constant 0 : i32
    return %c0_i32, %c0_i32_0 : i32, i32
  }
  func.func @transform_1(%arg0: i32) -> (i32, i32) {
    %c0_i32 = arith.constant 0 : i32
    %c0_i32_0 = arith.constant 0 : i32
    %c0_i32_1 = arith.constant 0 : i32
    return %c0_i32, %c0_i32_0 : i32, i32
  }
  func.func @transform_2(%arg0: i32) -> (i32, i32) {
    %c0_i32 = arith.constant 0 : i32
    %c0_i32_0 = arith.constant 0 : i32
    %c0_i32_1 = arith.constant 0 : i32
    return %c0_i32, %c0_i32_0 : i32, i32
  }
  func.func @transform_3(%arg0: i32) -> (i32, i32) {
    %c0_i32 = arith.constant 0 : i32
    %c0_i32_0 = arith.constant 0 : i32
    %c0_i32_1 = arith.constant 0 : i32
    return %c0_i32, %c0_i32_0 : i32, i32
  }
  func.func @transform_4(%arg0: i32) -> (i32, i32) {
    %c0_i32 = arith.constant 0 : i32
    %c0_i32_0 = arith.constant 0 : i32
    %c0_i32_1 = arith.constant 0 : i32
    return %c0_i32, %c0_i32_0 : i32, i32
  }
  func.func @transform_5(%arg0: i32) -> (i32, i32) {
    %c0_i32 = arith.constant 0 : i32
    %c0_i32_0 = arith.constant 0 : i32
    %c0_i32_1 = arith.constant 0 : i32
    return %c0_i32, %c0_i32_0 : i32, i32
  }
  func.func @transform_6(%arg0: i32) -> (i32, i32) {
    %c0_i32 = arith.constant 0 : i32
    %c0_i32_0 = arith.constant 0 : i32
    %c0_i32_1 = arith.constant 0 : i32
    return %c0_i32, %c0_i32_0 : i32, i32
  }
  func.func @transform_7(%arg0: i32) -> (i32, i32) {
    %c0_i32 = arith.constant 0 : i32
    %c0_i32_0 = arith.constant 0 : i32
    %c0_i32_1 = arith.constant 0 : i32
    return %c0_i32, %c0_i32_0 : i32, i32
  }
  func.func @transform_8(%arg0: i32) -> (i32, i32) {
    %c0_i32 = arith.constant 0 : i32
    %c0_i32_0 = arith.constant 0 : i32
    %c0_i32_1 = arith.constant 0 : i32
    return %c0_i32, %c0_i32_0 : i32, i32
  }
  func.func @transform_9(%arg0: i32) -> (i32, i32) {
    %c0_i32 = arith.constant 0 : i32
    %c0_i32_0 = arith.constant 0 : i32
    %c0_i32_1 = arith.constant 0 : i32
    return %c0_i32, %c0_i32_0 : i32, i32
  }
  func.func @transform_10(%arg0: i32) -> (i32, i32) {
    %c0_i32 = arith.constant 0 : i32
    %c0_i32_0 = arith.constant 0 : i32
    %c0_i32_1 = arith.constant 0 : i32
    return %c0_i32, %c0_i32_0 : i32, i32
  }
  func.func @transform_11(%arg0: i32) -> (i32, i32) {
    %c0_i32 = arith.constant 0 : i32
    %c0_i32_0 = arith.constant 0 : i32
    %c0_i32_1 = arith.constant 0 : i32
    return %c0_i32, %c0_i32_0 : i32, i32
  }
  func.func @transform_12(%arg0: i32) -> (i32, i32) {
    %c0_i32 = arith.constant 0 : i32
    %c0_i32_0 = arith.constant 0 : i32
    %c0_i32_1 = arith.constant 0 : i32
    return %c0_i32, %c0_i32_0 : i32, i32
  }
  func.func @transform_13(%arg0: i32) -> (i32, i32) {
    %c0_i32 = arith.constant 0 : i32
    %c0_i32_0 = arith.constant 0 : i32
    %c0_i32_1 = arith.constant 0 : i32
    return %c0_i32, %c0_i32_0 : i32, i32
  }
  func.func @transform_14(%arg0: i32) -> (i32, i32) {
    %c0_i32 = arith.constant 0 : i32
    %c0_i32_0 = arith.constant 0 : i32
    %c0_i32_1 = arith.constant 0 : i32
    return %c0_i32, %c0_i32_0 : i32, i32
  }
  func.func @transform_15(%arg0: i32) -> (i32, i32) {
    %c0_i32 = arith.constant 0 : i32
    %c0_i32_0 = arith.constant 0 : i32
    %c0_i32_1 = arith.constant 0 : i32
    return %c0_i32, %c0_i32_0 : i32, i32
  }
  func.func @transform_16(%arg0: i32) -> (i32, i32) {
    %c0_i32 = arith.constant 0 : i32
    %c0_i32_0 = arith.constant 0 : i32
    %c0_i32_1 = arith.constant 0 : i32
    return %c0_i32, %c0_i32_0 : i32, i32
  }
  func.func @transform_17(%arg0: i32) -> (i32, i32) {
    %c0_i32 = arith.constant 0 : i32
    %c0_i32_0 = arith.constant 0 : i32
    %c0_i32_1 = arith.constant 0 : i32
    return %c0_i32, %c0_i32_0 : i32, i32
  }
  func.func @transform_18(%arg0: i32) -> (i32, i32) {
    %c0_i32 = arith.constant 0 : i32
    %c0_i32_0 = arith.constant 0 : i32
    %c0_i32_1 = arith.constant 0 : i32
    return %c0_i32, %c0_i32_0 : i32, i32
  }
  func.func @transform_19(%arg0: i32) -> (i32, i32) {
    %c0_i32 = arith.constant 0 : i32
    %c0_i32_0 = arith.constant 0 : i32
    %c0_i32_1 = arith.constant 0 : i32
    return %c0_i32, %c0_i32_0 : i32, i32
  }
  func.func @transform_20(%arg0: i32) -> (i32, i32) {
    %c0_i32 = arith.constant 0 : i32
    %c0_i32_0 = arith.constant 0 : i32
    %c0_i32_1 = arith.constant 0 : i32
    return %c0_i32, %c0_i32_0 : i32, i32
  }
}

module attributes {stable_mosaic.version = 11 : i64} {
  func.func @_action_kernel(%arg0: i32, %arg1: memref<16x14xf32, #tpu.memory_space<vmem>>, %arg2: memref<16x8xf32, #tpu.memory_space<vmem>>, %arg3: memref<16x8xf32, #tpu.memory_space<vmem>>, %arg4: memref<16x4xf32, #tpu.memory_space<vmem>>, %arg5: memref<14x32xf32, #tpu.memory_space<vmem>>, %arg6: memref<1x32xf32, #tpu.memory_space<vmem>>, %arg7: memref<32x16xf32, #tpu.memory_space<vmem>>, %arg8: memref<1x16xf32, #tpu.memory_space<vmem>>, %arg9: memref<8x32xf32, #tpu.memory_space<vmem>>, %arg10: memref<8x32xf32, #tpu.memory_space<vmem>>, %arg11: memref<1x32xf32, #tpu.memory_space<vmem>>, %arg12: memref<32x16xf32, #tpu.memory_space<vmem>>, %arg13: memref<1x16xf32, #tpu.memory_space<vmem>>, %arg14: memref<8x32xf32, #tpu.memory_space<vmem>>, %arg15: memref<1x32xf32, #tpu.memory_space<vmem>>, %arg16: memref<32x4xf32, #tpu.memory_space<vmem>>, %arg17: memref<1x4xf32, #tpu.memory_space<vmem>>, %arg18: memref<16x128xf32, #tpu.memory_space<vmem>>) attributes {dimension_semantics = [#tpu.dimension_semantics<arbitrary>], iteration_bounds = array<i64: 1>, scalar_prefetch = 0 : i64, scratch_operands = 0 : i64, tpu.core_type = #tpu.core_type<tc>, window_params = [{pipeline_mode = #tpu.pipeline_mode<synchronous>, transform_indices = @transform_0, window_bounds = array<i64: 16, 14>}, {pipeline_mode = #tpu.pipeline_mode<synchronous>, transform_indices = @transform_1, window_bounds = array<i64: 16, 8>}, {pipeline_mode = #tpu.pipeline_mode<synchronous>, transform_indices = @transform_2, window_bounds = array<i64: 16, 8>}, {pipeline_mode = #tpu.pipeline_mode<synchronous>, transform_indices = @transform_3, window_bounds = array<i64: 16, 4>}, {pipeline_mode = #tpu.pipeline_mode<synchronous>, transform_indices = @transform_4, window_bounds = array<i64: 14, 32>}, {pipeline_mode = #tpu.pipeline_mode<synchronous>, transform_indices = @transform_5, window_bounds = array<i64: 1, 32>}, {pipeline_mode = #tpu.pipeline_mode<synchronous>, transform_indices = @transform_6, window_bounds = array<i64: 32, 16>}, {pipeline_mode = #tpu.pipeline_mode<synchronous>, transform_indices = @transform_7, window_bounds = array<i64: 1, 16>}, {pipeline_mode = #tpu.pipeline_mode<synchronous>, transform_indices = @transform_8, window_bounds = array<i64: 8, 32>}, {pipeline_mode = #tpu.pipeline_mode<synchronous>, transform_indices = @transform_9, window_bounds = array<i64: 8, 32>}, {pipeline_mode = #tpu.pipeline_mode<synchronous>, transform_indices = @transform_10, window_bounds = array<i64: 1, 32>}, {pipeline_mode = #tpu.pipeline_mode<synchronous>, transform_indices = @transform_11, window_bounds = array<i64: 32, 16>}, {pipeline_mode = #tpu.pipeline_mode<synchronous>, transform_indices = @transform_12, window_bounds = array<i64: 1, 16>}, {pipeline_mode = #tpu.pipeline_mode<synchronous>, transform_indices = @transform_13, window_bounds = array<i64: 8, 32>}, {pipeline_mode = #tpu.pipeline_mode<synchronous>, transform_indices = @transform_14, window_bounds = array<i64: 1, 32>}, {pipeline_mode = #tpu.pipeline_mode<synchronous>, transform_indices = @transform_15, window_bounds = array<i64: 32, 4>}, {pipeline_mode = #tpu.pipeline_mode<synchronous>, transform_indices = @transform_16, window_bounds = array<i64: 1, 4>}, {pipeline_mode = #tpu.pipeline_mode<synchronous>, transform_indices = @transform_17, window_bounds = array<i64: 16, 128>}]} {
    %c0 = arith.constant 0 : index
    %c0_0 = arith.constant 0 : index
    %0 = vector.load %arg1[%c0, %c0_0] : memref<16x14xf32, #tpu.memory_space<vmem>>, vector<16x14xf32>
    %c0_1 = arith.constant 0 : index
    %c0_2 = arith.constant 0 : index
    %1 = vector.load %arg2[%c0_1, %c0_2] : memref<16x8xf32, #tpu.memory_space<vmem>>, vector<16x8xf32>
    %c0_3 = arith.constant 0 : index
    %c0_4 = arith.constant 0 : index
    %2 = vector.load %arg3[%c0_3, %c0_4] : memref<16x8xf32, #tpu.memory_space<vmem>>, vector<16x8xf32>
    %c0_5 = arith.constant 0 : index
    %c0_6 = arith.constant 0 : index
    %3 = vector.load %arg4[%c0_5, %c0_6] : memref<16x4xf32, #tpu.memory_space<vmem>>, vector<16x4xf32>
    %c0_7 = arith.constant 0 : index
    %c0_8 = arith.constant 0 : index
    %4 = vector.load %arg5[%c0_7, %c0_8] : memref<14x32xf32, #tpu.memory_space<vmem>>, vector<14x32xf32>
    %c0_9 = arith.constant 0 : index
    %c0_10 = arith.constant 0 : index
    %5 = vector.load %arg6[%c0_9, %c0_10] : memref<1x32xf32, #tpu.memory_space<vmem>>, vector<1x32xf32>
    %c0_11 = arith.constant 0 : index
    %c0_12 = arith.constant 0 : index
    %6 = vector.load %arg7[%c0_11, %c0_12] : memref<32x16xf32, #tpu.memory_space<vmem>>, vector<32x16xf32>
    %c0_13 = arith.constant 0 : index
    %c0_14 = arith.constant 0 : index
    %7 = vector.load %arg8[%c0_13, %c0_14] : memref<1x16xf32, #tpu.memory_space<vmem>>, vector<1x16xf32>
    %c0_15 = arith.constant 0 : index
    %c0_16 = arith.constant 0 : index
    %8 = vector.load %arg9[%c0_15, %c0_16] : memref<8x32xf32, #tpu.memory_space<vmem>>, vector<8x32xf32>
    %c0_17 = arith.constant 0 : index
    %c0_18 = arith.constant 0 : index
    %9 = vector.load %arg10[%c0_17, %c0_18] : memref<8x32xf32, #tpu.memory_space<vmem>>, vector<8x32xf32>
    %c0_19 = arith.constant 0 : index
    %c0_20 = arith.constant 0 : index
    %10 = vector.load %arg11[%c0_19, %c0_20] : memref<1x32xf32, #tpu.memory_space<vmem>>, vector<1x32xf32>
    %c0_21 = arith.constant 0 : index
    %c0_22 = arith.constant 0 : index
    %11 = vector.load %arg12[%c0_21, %c0_22] : memref<32x16xf32, #tpu.memory_space<vmem>>, vector<32x16xf32>
    %c0_23 = arith.constant 0 : index
    %c0_24 = arith.constant 0 : index
    %12 = vector.load %arg13[%c0_23, %c0_24] : memref<1x16xf32, #tpu.memory_space<vmem>>, vector<1x16xf32>
    %c0_25 = arith.constant 0 : index
    %c0_26 = arith.constant 0 : index
    %13 = vector.load %arg14[%c0_25, %c0_26] : memref<8x32xf32, #tpu.memory_space<vmem>>, vector<8x32xf32>
    %c0_27 = arith.constant 0 : index
    %c0_28 = arith.constant 0 : index
    %14 = vector.load %arg15[%c0_27, %c0_28] : memref<1x32xf32, #tpu.memory_space<vmem>>, vector<1x32xf32>
    %c0_29 = arith.constant 0 : index
    %c0_30 = arith.constant 0 : index
    %15 = vector.load %arg16[%c0_29, %c0_30] : memref<32x4xf32, #tpu.memory_space<vmem>>, vector<32x4xf32>
    %c0_31 = arith.constant 0 : index
    %c0_32 = arith.constant 0 : index
    %16 = vector.load %arg17[%c0_31, %c0_32] : memref<1x4xf32, #tpu.memory_space<vmem>>, vector<1x4xf32>
    %cst = arith.constant dense<0.000000e+00> : vector<16x32xf32>
    %17 = tpu.matmul %0, %4, %cst {dimension_numbers = #tpu.dot_dimension_numbers<[1], [0], [0], [1], [0, 0, 1, 1], [], []>} : vector<16x14xf32>, vector<14x32xf32>, vector<16x32xf32> -> vector<16x32xf32>
    %18 = vector.broadcast %5 : vector<1x32xf32> to vector<16x32xf32>
    %19 = arith.addf %17, %18 : vector<16x32xf32>
    %20 = math.tanh %19 : vector<16x32xf32>
    %cst_33 = arith.constant dense<0.000000e+00> : vector<16x16xf32>
    %21 = tpu.matmul %20, %6, %cst_33 {dimension_numbers = #tpu.dot_dimension_numbers<[1], [0], [0], [1], [0, 0, 1, 1], [], []>} : vector<16x32xf32>, vector<32x16xf32>, vector<16x16xf32> -> vector<16x16xf32>
    %22 = vector.broadcast %7 : vector<1x16xf32> to vector<16x16xf32>
    %23 = arith.addf %21, %22 : vector<16x16xf32>
    %24 = vector.extract_strided_slice %23 {offsets = [0, 0], sizes = [16, 8], strides = [1, 1]} : vector<16x16xf32> to vector<16x8xf32>
    %25 = vector.extract_strided_slice %23 {offsets = [0, 8], sizes = [16, 8], strides = [1, 1]} : vector<16x16xf32> to vector<16x8xf32>
    %cst_34 = arith.constant 5.000000e-01 : f32
    %26 = vector.broadcast %cst_34 : f32 to vector<16x8xf32>
    %27 = arith.mulf %26, %25 : vector<16x8xf32>
    %28 = math.exp %27 : vector<16x8xf32>
    %29 = arith.mulf %28, %1 : vector<16x8xf32>
    %30 = arith.addf %24, %29 : vector<16x8xf32>
    %31 = tpu.iota {dimensions = array<i32: 0>} : vector<16x16xi32>
    %32 = tpu.iota {dimensions = array<i32: 1>} : vector<16x16xi32>
    %c1_i32 = arith.constant 1 : i32
    %33 = vector.broadcast %c1_i32 : i32 to vector<16x16xi32>
    %34 = arith.addi %31, %33 : vector<16x16xi32>
    %35 = arith.cmpi eq, %32, %34 : vector<16x16xi32>
    %36 = arith.extui %35 : vector<16x16xi1> to vector<16x16xi32>
    %37 = arith.sitofp %36 : vector<16x16xi32> to vector<16x16xf32>
    %cst_35 = arith.constant dense<0.000000e+00> : vector<16x8xf32>
    %38 = tpu.matmul %37, %30, %cst_35 {dimension_numbers = #tpu.dot_dimension_numbers<[1], [0], [0], [1], [0, 0, 1, 1], [], []>} : vector<16x16xf32>, vector<16x8xf32>, vector<16x8xf32> -> vector<16x8xf32>
    %cst_36 = arith.constant dense<0.000000e+00> : vector<16x32xf32>
    %39 = tpu.matmul %30, %8, %cst_36 {dimension_numbers = #tpu.dot_dimension_numbers<[1], [0], [0], [1], [0, 0, 1, 1], [], []>} : vector<16x8xf32>, vector<8x32xf32>, vector<16x32xf32> -> vector<16x32xf32>
    %cst_37 = arith.constant dense<0.000000e+00> : vector<16x32xf32>
    %40 = tpu.matmul %38, %9, %cst_37 {dimension_numbers = #tpu.dot_dimension_numbers<[1], [0], [0], [1], [0, 0, 1, 1], [], []>} : vector<16x8xf32>, vector<8x32xf32>, vector<16x32xf32> -> vector<16x32xf32>
    %41 = arith.addf %39, %40 : vector<16x32xf32>
    %42 = vector.broadcast %10 : vector<1x32xf32> to vector<16x32xf32>
    %43 = arith.addf %41, %42 : vector<16x32xf32>
    %44 = math.tanh %43 : vector<16x32xf32>
    %cst_38 = arith.constant dense<0.000000e+00> : vector<16x16xf32>
    %45 = tpu.matmul %44, %11, %cst_38 {dimension_numbers = #tpu.dot_dimension_numbers<[1], [0], [0], [1], [0, 0, 1, 1], [], []>} : vector<16x32xf32>, vector<32x16xf32>, vector<16x16xf32> -> vector<16x16xf32>
    %46 = vector.broadcast %12 : vector<1x16xf32> to vector<16x16xf32>
    %47 = arith.addf %45, %46 : vector<16x16xf32>
    %48 = vector.extract_strided_slice %47 {offsets = [0, 0], sizes = [16, 8], strides = [1, 1]} : vector<16x16xf32> to vector<16x8xf32>
    %49 = vector.extract_strided_slice %47 {offsets = [0, 8], sizes = [16, 8], strides = [1, 1]} : vector<16x16xf32> to vector<16x8xf32>
    %cst_39 = arith.constant 5.000000e-01 : f32
    %50 = vector.broadcast %cst_39 : f32 to vector<16x8xf32>
    %51 = arith.mulf %50, %49 : vector<16x8xf32>
    %52 = math.exp %51 : vector<16x8xf32>
    %53 = arith.mulf %52, %2 : vector<16x8xf32>
    %54 = arith.addf %48, %53 : vector<16x8xf32>
    %cst_40 = arith.constant dense<0.000000e+00> : vector<16x32xf32>
    %55 = tpu.matmul %54, %13, %cst_40 {dimension_numbers = #tpu.dot_dimension_numbers<[1], [0], [0], [1], [0, 0, 1, 1], [], []>} : vector<16x8xf32>, vector<8x32xf32>, vector<16x32xf32> -> vector<16x32xf32>
    %56 = vector.broadcast %14 : vector<1x32xf32> to vector<16x32xf32>
    %57 = arith.addf %55, %56 : vector<16x32xf32>
    %58 = math.tanh %57 : vector<16x32xf32>
    %cst_41 = arith.constant dense<0.000000e+00> : vector<16x4xf32>
    %59 = tpu.matmul %58, %15, %cst_41 {dimension_numbers = #tpu.dot_dimension_numbers<[1], [0], [0], [1], [0, 0, 1, 1], [], []>} : vector<16x32xf32>, vector<32x4xf32>, vector<16x4xf32> -> vector<16x4xf32>
    %60 = vector.broadcast %16 : vector<1x4xf32> to vector<16x4xf32>
    %61 = arith.addf %59, %60 : vector<16x4xf32>
    %cst_42 = arith.constant dense<0xFF800000> : vector<16xf32>
    %62 = vector.multi_reduction <maximumf>, %61, %cst_42 [1] : vector<16x4xf32> to vector<16xf32>
    %63 = vector.shape_cast %62 : vector<16xf32> to vector<16x1xf32>
    %64 = vector.broadcast %63 : vector<16x1xf32> to vector<16x4xf32>
    %65 = arith.subf %61, %64 : vector<16x4xf32>
    %66 = math.exp %65 : vector<16x4xf32>
    %cst_43 = arith.constant dense<0.000000e+00> : vector<16xf32>
    %67 = vector.multi_reduction <add>, %66, %cst_43 [1] : vector<16x4xf32> to vector<16xf32>
    %68 = vector.shape_cast %67 : vector<16xf32> to vector<16x1xf32>
    %69 = vector.broadcast %68 : vector<16x1xf32> to vector<16x4xf32>
    %70 = arith.divf %66, %69 : vector<16x4xf32>
    %71 = math.log %68 : vector<16x1xf32>
    %72 = vector.broadcast %71 : vector<16x1xf32> to vector<16x4xf32>
    %73 = arith.subf %65, %72 : vector<16x4xf32>
    %74 = arith.addf %73, %3 : vector<16x4xf32>
    %cst_44 = arith.constant 1.000000e+00 : f32
    %75 = vector.broadcast %cst_44 : f32 to vector<16x4xf32>
    %76 = arith.divf %74, %75 : vector<16x4xf32>
    %cst_45 = arith.constant dense<0xFF800000> : vector<16xf32>
    %77 = vector.multi_reduction <maximumf>, %76, %cst_45 [1] : vector<16x4xf32> to vector<16xf32>
    %78 = vector.shape_cast %77 : vector<16xf32> to vector<16x1xf32>
    %79 = vector.broadcast %78 : vector<16x1xf32> to vector<16x4xf32>
    %80 = arith.subf %76, %79 : vector<16x4xf32>
    %81 = math.exp %80 : vector<16x4xf32>
    %cst_46 = arith.constant dense<0.000000e+00> : vector<16xf32>
    %82 = vector.multi_reduction <add>, %81, %cst_46 [1] : vector<16x4xf32> to vector<16xf32>
    %83 = vector.shape_cast %82 : vector<16xf32> to vector<16x1xf32>
    %84 = vector.broadcast %83 : vector<16x1xf32> to vector<16x4xf32>
    %85 = arith.divf %81, %84 : vector<16x4xf32>
    %cst_47 = arith.constant 0.000000e+00 : f32
    %86 = vector.broadcast %cst_47 : f32 to vector<16x68xf32>
    %87 = tpu.concatenate %23, %30, %47, %54, %61, %70, %85, %86 in 1 : vector<16x16xf32>, vector<16x8xf32>, vector<16x16xf32>, vector<16x8xf32>, vector<16x4xf32>, vector<16x4xf32>, vector<16x4xf32>, vector<16x68xf32> -> vector<16x128xf32>
    %c0_48 = arith.constant 0 : index
    %c0_49 = arith.constant 0 : index
    %88 = vector.load %arg18[%c0_48, %c0_49] : memref<16x128xf32, #tpu.memory_space<vmem>>, vector<16x128xf32>
    tpu.vector_store %arg18[%c0_48, %c0_49], %87 {strides = array<i32>} : memref<16x128xf32, #tpu.memory_space<vmem>>, vector<16x128xf32>,
    return
  }
  func.func @transform_0(%arg0: i32) -> (i32, i32) {
    %c0_i32 = arith.constant 0 : i32
    %c0_i32_0 = arith.constant 0 : i32
    %c0_i32_1 = arith.constant 0 : i32
    return %c0_i32, %c0_i32_0 : i32, i32
  }
  func.func @transform_1(%arg0: i32) -> (i32, i32) {
    %c0_i32 = arith.constant 0 : i32
    %c0_i32_0 = arith.constant 0 : i32
    %c0_i32_1 = arith.constant 0 : i32
    return %c0_i32, %c0_i32_0 : i32, i32
  }
  func.func @transform_2(%arg0: i32) -> (i32, i32) {
    %c0_i32 = arith.constant 0 : i32
    %c0_i32_0 = arith.constant 0 : i32
    %c0_i32_1 = arith.constant 0 : i32
    return %c0_i32, %c0_i32_0 : i32, i32
  }
  func.func @transform_3(%arg0: i32) -> (i32, i32) {
    %c0_i32 = arith.constant 0 : i32
    %c0_i32_0 = arith.constant 0 : i32
    %c0_i32_1 = arith.constant 0 : i32
    return %c0_i32, %c0_i32_0 : i32, i32
  }
  func.func @transform_4(%arg0: i32) -> (i32, i32) {
    %c0_i32 = arith.constant 0 : i32
    %c0_i32_0 = arith.constant 0 : i32
    %c0_i32_1 = arith.constant 0 : i32
    return %c0_i32, %c0_i32_0 : i32, i32
  }
  func.func @transform_5(%arg0: i32) -> (i32, i32) {
    %c0_i32 = arith.constant 0 : i32
    %c0_i32_0 = arith.constant 0 : i32
    %c0_i32_1 = arith.constant 0 : i32
    return %c0_i32, %c0_i32_0 : i32, i32
  }
  func.func @transform_6(%arg0: i32) -> (i32, i32) {
    %c0_i32 = arith.constant 0 : i32
    %c0_i32_0 = arith.constant 0 : i32
    %c0_i32_1 = arith.constant 0 : i32
    return %c0_i32, %c0_i32_0 : i32, i32
  }
  func.func @transform_7(%arg0: i32) -> (i32, i32) {
    %c0_i32 = arith.constant 0 : i32
    %c0_i32_0 = arith.constant 0 : i32
    %c0_i32_1 = arith.constant 0 : i32
    return %c0_i32, %c0_i32_0 : i32, i32
  }
  func.func @transform_8(%arg0: i32) -> (i32, i32) {
    %c0_i32 = arith.constant 0 : i32
    %c0_i32_0 = arith.constant 0 : i32
    %c0_i32_1 = arith.constant 0 : i32
    return %c0_i32, %c0_i32_0 : i32, i32
  }
  func.func @transform_9(%arg0: i32) -> (i32, i32) {
    %c0_i32 = arith.constant 0 : i32
    %c0_i32_0 = arith.constant 0 : i32
    %c0_i32_1 = arith.constant 0 : i32
    return %c0_i32, %c0_i32_0 : i32, i32
  }
  func.func @transform_10(%arg0: i32) -> (i32, i32) {
    %c0_i32 = arith.constant 0 : i32
    %c0_i32_0 = arith.constant 0 : i32
    %c0_i32_1 = arith.constant 0 : i32
    return %c0_i32, %c0_i32_0 : i32, i32
  }
  func.func @transform_11(%arg0: i32) -> (i32, i32) {
    %c0_i32 = arith.constant 0 : i32
    %c0_i32_0 = arith.constant 0 : i32
    %c0_i32_1 = arith.constant 0 : i32
    return %c0_i32, %c0_i32_0 : i32, i32
  }
  func.func @transform_12(%arg0: i32) -> (i32, i32) {
    %c0_i32 = arith.constant 0 : i32
    %c0_i32_0 = arith.constant 0 : i32
    %c0_i32_1 = arith.constant 0 : i32
    return %c0_i32, %c0_i32_0 : i32, i32
  }
  func.func @transform_13(%arg0: i32) -> (i32, i32) {
    %c0_i32 = arith.constant 0 : i32
    %c0_i32_0 = arith.constant 0 : i32
    %c0_i32_1 = arith.constant 0 : i32
    return %c0_i32, %c0_i32_0 : i32, i32
  }
  func.func @transform_14(%arg0: i32) -> (i32, i32) {
    %c0_i32 = arith.constant 0 : i32
    %c0_i32_0 = arith.constant 0 : i32
    %c0_i32_1 = arith.constant 0 : i32
    return %c0_i32, %c0_i32_0 : i32, i32
  }
  func.func @transform_15(%arg0: i32) -> (i32, i32) {
    %c0_i32 = arith.constant 0 : i32
    %c0_i32_0 = arith.constant 0 : i32
    %c0_i32_1 = arith.constant 0 : i32
    return %c0_i32, %c0_i32_0 : i32, i32
  }
  func.func @transform_16(%arg0: i32) -> (i32, i32) {
    %c0_i32 = arith.constant 0 : i32
    %c0_i32_0 = arith.constant 0 : i32
    %c0_i32_1 = arith.constant 0 : i32
    return %c0_i32, %c0_i32_0 : i32, i32
  }
  func.func @transform_17(%arg0: i32) -> (i32, i32) {
    %c0_i32 = arith.constant 0 : i32
    %c0_i32_0 = arith.constant 0 : i32
    %c0_i32_1 = arith.constant 0 : i32
    return %c0_i32, %c0_i32_0 : i32, i32
  }
}

</mosaic_0001>

<llo_original>
// kernel: object_animation_forward.6
$region0: #{object_animation_forward.6}
  #allocation0 [shape = 'u32[]', space=smem, size = 0x4, offset = 0x4, fixed_abs, tag = 'smem constant byte address 0x4 - core index']
  #allocation1 [shape = 'u32[144,128]{1,0:T(1,128)}', space=vmem, size = 0x12000, scoped, tag = 'internal scratch']
  %s0 = inlined_call_operand.vmem [shape: f32[8,2,30], index: 0, kind: input, shape index: {}]
  %s1 = inlined_call_operand.vmem [shape: f32[7,2,12], index: 1, kind: input, shape index: {}]
  %s2 = inlined_call_operand.vmem [shape: f32[30,32], index: 2, kind: input, shape index: {}]
  %s3 = inlined_call_operand.vmem [shape: f32[12,32], index: 3, kind: input, shape index: {}]
  %s4 = inlined_call_operand.vmem [shape: f32[1,32], index: 4, kind: input, shape index: {}]
  %s5 = inlined_call_operand.vmem [shape: f32[32,30], index: 5, kind: input, shape index: {}]
  %s6 = inlined_call_operand.vmem [shape: f32[1,30], index: 6, kind: input, shape index: {}]
  %s7 = inlined_call_operand.vmem [shape: f32[8,2,30], index: 7, kind: output, shape index: {}]
  %s8 = sld [smem:[#allocation0]]
  $region38: #{object_animation_forward.6} parent=0
    _
  %s10 = ssub.s32 1, %s8
  %s11 = scalar_select 0, %s10, %s8
  // Predicated region
  $region2: #{object_animation_forward.6} parent=0 // pred_check
    _
  $region3: #{object_animation_forward.6} parent=0 // pred_check_branch
    %13 = sbr.rel (0) target = $region5
  $region4: #{object_animation_forward.6} parent=0 // pred_region
    _
  $region5: #{object_animation_forward.6} parent=0 // pred_fallthru
    _
  // Predicated region
  $region6: #{object_animation_forward.6} parent=0 // pred_check
    _
  $region7: #{object_animation_forward.6} parent=0 // pred_check_branch
    %15 = sbr.rel (0) target = $region9
  $region8: #{object_animation_forward.6} parent=0 // pred_region
    _
  $region9: #{object_animation_forward.6} parent=0 // pred_fallthru
    _
  // Predicated region
  $region10: #{object_animation_forward.6} parent=0 // pred_check
    _
  $region11: #{object_animation_forward.6} parent=0 // pred_check_branch
    %17 = sbr.rel (0) target = $region13
  $region12: #{object_animation_forward.6} parent=0 // pred_region
    _
  $region13: #{object_animation_forward.6} parent=0 // pred_fallthru
    _
  // Predicated region
  $region14: #{object_animation_forward.6} parent=0 // pred_check
    _
  $region15: #{object_animation_forward.6} parent=0 // pred_check_branch
    %19 = sbr.rel (0) target = $region17
  $region16: #{object_animation_forward.6} parent=0 // pred_region
    _
  $region17: #{object_animation_forward.6} parent=0 // pred_fallthru
    _
  // Predicated region
  $region18: #{object_animation_forward.6} parent=0 // pred_check
    _
  $region19: #{object_animation_forward.6} parent=0 // pred_check_branch
    %21 = sbr.rel (0) target = $region21
  $region20: #{object_animation_forward.6} parent=0 // pred_region
    _
  $region21: #{object_animation_forward.6} parent=0 // pred_fallthru
    _
  // Predicated region
  $region22: #{object_animation_forward.6} parent=0 // pred_check
    _
  $region23: #{object_animation_forward.6} parent=0 // pred_check_branch
    %23 = sbr.rel (0) target = $region25
  $region24: #{object_animation_forward.6} parent=0 // pred_region
    _
  $region25: #{object_animation_forward.6} parent=0 // pred_fallthru
    _
  // Predicated region
  $region26: #{object_animation_forward.6} parent=0 // pred_check
    _
  $region27: #{object_animation_forward.6} parent=0 // pred_check_branch
    %25 = sbr.rel (0) target = $region29
  $region28: #{object_animation_forward.6} parent=0 // pred_region
    _
  $region29: #{object_animation_forward.6} parent=0 // pred_fallthru
    _
  %v26 = vld [vmem:[%s2] sm:$0xff]
  %v27 = vld [vmem:[%s2 + $0x8] sm:$0xff]
  %v28 = vld [vmem:[%s2 + $0x10] sm:$0xff]
  %v29 = vld [vmem:[%s2 + $0x18] sm:$0x3f]
  %v30 = vld [vmem:[%s3] sm:$0xff]
  %v31 = vld [vmem:[%s3 + $0x8] sm:$0xf]
  %v32 = vld [vmem:[%s4] sm:$0x1]
  %v33 = vld [vmem:[%s5] sm:$0xff]
  %v34 = vld [vmem:[%s5 + $0x8] sm:$0xff]
  %v35 = vld [vmem:[%s5 + $0x10] sm:$0xff]
  %v36 = vld [vmem:[%s5 + $0x18] sm:$0xff]
  %v37 = vld [vmem:[%s6] sm:$0x1]
  %v38 = vld [vmem:[%s0] sm:$0x3]
  %vm39 = vcmask 238592
  %40 = vst.msk [vmem:[%s7] sm:$0x3] %vm39, %v38
  %v41 = vld [vmem:[%s0] sm:$0x3]
  %v42 = vld [vmem:[%s1] sm:$0x3]
  %vm43 = vcmask 97280
  %v45 = vsel %vm43, %v42, 0
  %vm47 = vcmask 1043456
  %v49 = vsel %vm47, %v31, 0
  %51 = vmatprep.subr.mxu0 0.0
  %52 = vmatpush1.msra.mxu0 %v30
  %53 = vmatprep.subr.mxu0 0.0
  %54 = vmatpush1.msra.mxu0 %v49
  %55 = vmatprep.subr.mxu0 0.0
  %56 = vmatpush1.msra.mxu0 0.0
  %57 = vmatprep.subr.mxu0 0.0
  %58 = vmatpush1.msra.mxu0 0.0
  %59 = vmatprep.subr.mxu0 0.0
  %60 = vmatpush1.msra.mxu0 0.0
  %61 = vmatprep.subr.mxu0 0.0
  %62 = vmatpush1.msra.mxu0 0.0
  %63 = vmatprep.subr.mxu0 0.0
  %64 = vmatpush1.msra.mxu0 0.0
  %65 = vmatprep.subr.mxu0 0.0
  %66 = vmatpush1.msra.mxu0 0.0
  %67 = vmatprep.subr.mxu0 0.0
  %68 = vmatpush1.msra.mxu0 0.0
  %69 = vmatprep.subr.mxu0 0.0
  %70 = vmatpush1.msra.mxu0 0.0
  %71 = vmatprep.subr.mxu0 0.0
  %72 = vmatpush1.msra.mxu0 0.0
  %73 = vmatprep.subr.mxu0 0.0
  %74 = vmatpush1.msra.mxu0 0.0
  %75 = vmatprep.subr.mxu0 0.0
  %76 = vmatpush1.msra.mxu0 0.0
  %77 = vmatprep.subr.mxu0 0.0
  %78 = vmatpush1.msra.mxu0 0.0
  %79 = vmatprep.subr.mxu0 0.0
  %80 = vmatpush1.msra.mxu0 0.0
  %81 = vmatprep.subr.mxu0 0.0
  %82 = vmatpush1.msra.mxu0 0.0
  %83 = vmatprep.subr.mxu0 0.0
  %84 = vmatpush1.msra.mxu0 0.0
  %85 = vmatprep.subr.mxu0 0.0
  %86 = vmatpush1.msra.mxu0 0.0
  %87 = vmatprep.subr.mxu0 0.0
  %88 = vmatpush1.msra.mxu0 0.0
  %89 = vmatprep.subr.mxu0 0.0
  %90 = vmatpush1.msra.mxu0 0.0
  %91 = vmatprep.subr.mxu0 0.0
  %92 = vmatpush1.msra.mxu0 0.0
  %93 = vmatprep.subr.mxu0 0.0
  %94 = vmatpush1.msra.mxu0 0.0
  %95 = vmatprep.subr.mxu0 0.0
  %96 = vmatpush1.msra.mxu0 0.0
  %97 = vmatprep.subr.mxu0 0.0
  %98 = vmatpush1.msra.mxu0 0.0
  %99 = vmatprep.subr.mxu0 0.0
  %100 = vmatpush1.msra.mxu0 0.0
  %101 = vmatprep.subr.mxu0 0.0
  %102 = vmatpush1.msra.mxu0 0.0
  %103 = vmatprep.subr.mxu0 0.0
  %104 = vmatpush1.msra.mxu0 0.0
  %105 = vmatprep.subr.mxu0 0.0
  %106 = vmatpush1.msra.mxu0 0.0
  %107 = vmatprep.subr.mxu0 0.0
  %108 = vmatpush1.msra.mxu0 0.0
  %109 = vmatprep.subr.mxu0 0.0
  %110 = vmatpush1.msra.mxu0 0.0
  %111 = vmatprep.subr.mxu0 0.0
  %112 = vmatpush1.msra.mxu0 0.0
  %113 = vmatprep.subr.mxu0 0.0
  %114 = vmatpush1.msra.mxu0 0.0
  %115 = vmatprep.mubr.f32.mxu0 0.0
  %116 = vmatmul.mubr.f32.gmra.mrb[0].mxu0 %v45
  %v117 = vpop.f32.mrb[0].mxu0
  %v118 = vadd.f32 0.0, %v117
  %v119 = vpop.f32.mrb[0].mxu0
  %120 = vdwg.mxu0
  %vm121 = vcmask 244736
  %v123 = vsel %vm121, %v41, 0
  %vm125 = vcmask 1045504
  %v127 = vsel %vm125, %v29, 0
  %129 = vmatprep.subr.mxu0 0.0
  %130 = vmatpush1.msra.mxu0 %v26
  %131 = vmatprep.subr.mxu0 0.0
  %132 = vmatpush1.msra.mxu0 %v27
  %133 = vmatprep.subr.mxu0 0.0
  %134 = vmatpush1.msra.mxu0 %v28
  %135 = vmatprep.subr.mxu0 0.0
  %136 = vmatpush1.msra.mxu0 %v127
  %137 = vmatprep.subr.mxu0 0.0
  %138 = vmatpush1.msra.mxu0 0.0
  %139 = vmatprep.subr.mxu0 0.0
  %140 = vmatpush1.msra.mxu0 0.0
  %141 = vmatprep.subr.mxu0 0.0
  %142 = vmatpush1.msra.mxu0 0.0
  %143 = vmatprep.subr.mxu0 0.0
  %144 = vmatpush1.msra.mxu0 0.0
  %145 = vmatprep.subr.mxu0 0.0
  %146 = vmatpush1.msra.mxu0 0.0
  %147 = vmatprep.subr.mxu0 0.0
  %148 = vmatpush1.msra.mxu0 0.0
  %149 = vmatprep.subr.mxu0 0.0
  %150 = vmatpush1.msra.mxu0 0.0
  %151 = vmatprep.subr.mxu0 0.0
  %152 = vmatpush1.msra.mxu0 0.0
  %153 = vmatprep.subr.mxu0 0.0
  %154 = vmatpush1.msra.mxu0 0.0
  %155 = vmatprep.subr.mxu0 0.0
  %156 = vmatpush1.msra.mxu0 0.0
  %157 = vmatprep.subr.mxu0 0.0
  %158 = vmatpush1.msra.mxu0 0.0
  %159 = vmatprep.subr.mxu0 0.0
  %160 = vmatpush1.msra.mxu0 0.0
  %161 = vmatprep.subr.mxu0 0.0
  %162 = vmatpush1.msra.mxu0 0.0
  %163 = vmatprep.subr.mxu0 0.0
  %164 = vmatpush1.msra.mxu0 0.0
  %165 = vmatprep.subr.mxu0 0.0
  %166 = vmatpush1.msra.mxu0 0.0
  %167 = vmatprep.subr.mxu0 0.0
  %168 = vmatpush1.msra.mxu0 0.0
  %169 = vmatprep.subr.mxu0 0.0
  %170 = vmatpush1.msra.mxu0 0.0
  %171 = vmatprep.subr.mxu0 0.0
  %172 = vmatpush1.msra.mxu0 0.0
  %173 = vmatprep.subr.mxu0 0.0
  %174 = vmatpush1.msra.mxu0 0.0
  %175 = vmatprep.subr.mxu0 0.0
  %176 = vmatpush1.msra.mxu0 0.0
  %177 = vmatprep.subr.mxu0 0.0
  %178 = vmatpush1.msra.mxu0 0.0
  %179 = vmatprep.subr.mxu0 0.0
  %180 = vmatpush1.msra.mxu0 0.0
  %181 = vmatprep.subr.mxu0 0.0
  %182 = vmatpush1.msra.mxu0 0.0
  %183 = vmatprep.subr.mxu0 0.0
  %184 = vmatpush1.msra.mxu0 0.0
  %185 = vmatprep.subr.mxu0 0.0
  %186 = vmatpush1.msra.mxu0 0.0
  %187 = vmatprep.subr.mxu0 0.0
  %188 = vmatpush1.msra.mxu0 0.0
  %189 = vmatprep.subr.mxu0 0.0
  %190 = vmatpush1.msra.mxu0 0.0
  %191 = vmatprep.subr.mxu0 0.0
  %192 = vmatpush1.msra.mxu0 0.0
  %193 = vmatprep.mubr.f32.mxu0 0.0
  %194 = vmatmul.mubr.f32.gmra.mrb[0].mxu0 %v123
  %v195 = vpop.f32.mrb[0].mxu0
  %v196 = vadd.f32 %v118, %v195
  %v197 = vpop.f32.mrb[0].mxu0
  %198 = vdwg.mxu0
  %v200 = vlaneseq
  %v201 = vshrl.u32 %v200, 7
  %v202 = vsub.s32 0, %v201
  %v203 = vrot.slane %v32, %v202
  %v205 = vadd.f32 %v196, %v203
  %v206 = vtanh.pop %v205
  %v208 = vlaneseq
  %v209 = vshrl.u32 %v208, 7
  %v210 = vsub.s32 0, %v209
  %v211 = vrot.slane %v37, %v210
  %vm213 = vcmask 261120
  %v215 = vsel %vm213, %v206, 0
  %217 = vmatprep.subr.mxu0 0.0
  %218 = vmatpush1.msra.mxu0 %v33
  %219 = vmatprep.subr.mxu0 0.0
  %220 = vmatpush1.msra.mxu0 %v34
  %221 = vmatprep.subr.mxu0 0.0
  %222 = vmatpush1.msra.mxu0 %v35
  %223 = vmatprep.subr.mxu0 0.0
  %224 = vmatpush1.msra.mxu0 %v36
  %225 = vmatprep.subr.mxu0 0.0
  %226 = vmatpush1.msra.mxu0 0.0
  %227 = vmatprep.subr.mxu0 0.0
  %228 = vmatpush1.msra.mxu0 0.0
  %229 = vmatprep.subr.mxu0 0.0
  %230 = vmatpush1.msra.mxu0 0.0
  %231 = vmatprep.subr.mxu0 0.0
  %232 = vmatpush1.msra.mxu0 0.0
  %233 = vmatprep.subr.mxu0 0.0
  %234 = vmatpush1.msra.mxu0 0.0
  %235 = vmatprep.subr.mxu0 0.0
  %236 = vmatpush1.msra.mxu0 0.0
  %237 = vmatprep.subr.mxu0 0.0
  %238 = vmatpush1.msra.mxu0 0.0
  %239 = vmatprep.subr.mxu0 0.0
  %240 = vmatpush1.msra.mxu0 0.0
  %241 = vmatprep.subr.mxu0 0.0
  %242 = vmatpush1.msra.mxu0 0.0
  %243 = vmatprep.subr.mxu0 0.0
  %244 = vmatpush1.msra.mxu0 0.0
  %245 = vmatprep.subr.mxu0 0.0
  %246 = vmatpush1.msra.mxu0 0.0
  %247 = vmatprep.subr.mxu0 0.0
  %248 = vmatpush1.msra.mxu0 0.0
  %249 = vmatprep.subr.mxu0 0.0
  %250 = vmatpush1.msra.mxu0 0.0
  %251 = vmatprep.subr.mxu0 0.0
  %252 = vmatpush1.msra.mxu0 0.0
  %253 = vmatprep.subr.mxu0 0.0
  %254 = vmatpush1.msra.mxu0 0.0
  %255 = vmatprep.subr.mxu0 0.0
  %256 = vmatpush1.msra.mxu0 0.0
  %257 = vmatprep.subr.mxu0 0.0
  %258 = vmatpush1.msra.mxu0 0.0
  %259 = vmatprep.subr.mxu0 0.0
  %260 = vmatpush1.msra.mxu0 0.0
  %261 = vmatprep.subr.mxu0 0.0
  %262 = vmatpush1.msra.mxu0 0.0
  %263 = vmatprep.subr.mxu0 0.0
  %264 = vmatpush1.msra.mxu0 0.0
  %265 = vmatprep.subr.mxu0 0.0
  %266 = vmatpush1.msra.mxu0 0.0
  %267 = vmatprep.subr.mxu0 0.0
  %268 = vmatpush1.msra.mxu0 0.0
  %269 = vmatprep.subr.mxu0 0.0
  %270 = vmatpush1.msra.mxu0 0.0
  %271 = vmatprep.subr.mxu0 0.0
  %272 = vmatpush1.msra.mxu0 0.0
  %273 = vmatprep.subr.mxu0 0.0
  %274 = vmatpush1.msra.mxu0 0.0
  %275 = vmatprep.subr.mxu0 0.0
  %276 = vmatpush1.msra.mxu0 0.0
  %277 = vmatprep.subr.mxu0 0.0
  %278 = vmatpush1.msra.mxu0 0.0
  %279 = vmatprep.subr.mxu0 0.0
  %280 = vmatpush1.msra.mxu0 0.0
  %281 = vmatprep.mubr.f32.mxu0 0.0
  %282 = vmatmul.mubr.f32.gmra.mrb[0].mxu0 %v215
  %v283 = vpop.f32.mrb[0].mxu0
  %v284 = vadd.f32 %v211, %v283
  %v285 = vpop.f32.mrb[0].mxu0
  %286 = vdwg.mxu0
  %s287 = scalar_lea.vmem %s7, 2
  %288 = vst.msk [vmem:[%s287] sm:$0x3] %vm39, %v284
  %s289 = scalar_lea.vmem %s0, 2
  %v290 = vld [vmem:[%s289] sm:$0x3]
  %s291 = scalar_lea.vmem %s1, 2
  %v292 = vld [vmem:[%s291] sm:$0x3]
  %v294 = vsel %vm43, %v292, 0
  %296 = vmatprep.subr.mxu0 0.0
  %297 = vmatpush1.msra.mxu0 %v30
  %298 = vmatprep.subr.mxu0 0.0
  %299 = vmatpush1.msra.mxu0 %v49
  %300 = vmatprep.subr.mxu0 0.0
  %301 = vmatpush1.msra.mxu0 0.0
  %302 = vmatprep.subr.mxu0 0.0
  %303 = vmatpush1.msra.mxu0 0.0
  %304 = vmatprep.subr.mxu0 0.0
  %305 = vmatpush1.msra.mxu0 0.0
  %306 = vmatprep.subr.mxu0 0.0
  %307 = vmatpush1.msra.mxu0 0.0
  %308 = vmatprep.subr.mxu0 0.0
  %309 = vmatpush1.msra.mxu0 0.0
  %310 = vmatprep.subr.mxu0 0.0
  %311 = vmatpush1.msra.mxu0 0.0
  %312 = vmatprep.subr.mxu0 0.0
  %313 = vmatpush1.msra.mxu0 0.0
  %314 = vmatprep.subr.mxu0 0.0
  %315 = vmatpush1.msra.mxu0 0.0
  %316 = vmatprep.subr.mxu0 0.0
  %317 = vmatpush1.msra.mxu0 0.0
  %318 = vmatprep.subr.mxu0 0.0
  %319 = vmatpush1.msra.mxu0 0.0
  %320 = vmatprep.subr.mxu0 0.0
  %321 = vmatpush1.msra.mxu0 0.0
  %322 = vmatprep.subr.mxu0 0.0
  %323 = vmatpush1.msra.mxu0 0.0
  %324 = vmatprep.subr.mxu0 0.0
  %325 = vmatpush1.msra.mxu0 0.0
  %326 = vmatprep.subr.mxu0 0.0
  %327 = vmatpush1.msra.mxu0 0.0
  %328 = vmatprep.subr.mxu0 0.0
  %329 = vmatpush1.msra.mxu0 0.0
  %330 = vmatprep.subr.mxu0 0.0
  %331 = vmatpush1.msra.mxu0 0.0
  %332 = vmatprep.subr.mxu0 0.0
  %333 = vmatpush1.msra.mxu0 0.0
  %334 = vmatprep.subr.mxu0 0.0
  %335 = vmatpush1.msra.mxu0 0.0
  %336 = vmatprep.subr.mxu0 0.0
  %337 = vmatpush1.msra.mxu0 0.0
  %338 = vmatprep.subr.mxu0 0.0
  %339 = vmatpush1.msra.mxu0 0.0
  %340 = vmatprep.subr.mxu0 0.0
  %341 = vmatpush1.msra.mxu0 0.0
  %342 = vmatprep.subr.mxu0 0.0
  %343 = vmatpush1.msra.mxu0 0.0
  %344 = vmatprep.subr.mxu0 0.0
  %345 = vmatpush1.msra.mxu0 0.0
  %346 = vmatprep.subr.mxu0 0.0
  %347 = vmatpush1.msra.mxu0 0.0
  %348 = vmatprep.subr.mxu0 0.0
  %349 = vmatpush1.msra.mxu0 0.0
  %350 = vmatprep.subr.mxu0 0.0
  %351 = vmatpush1.msra.mxu0 0.0
  %352 = vmatprep.subr.mxu0 0.0
  %353 = vmatpush1.msra.mxu0 0.0
  %354 = vmatprep.subr.mxu0 0.0
  %355 = vmatpush1.msra.mxu0 0.0
  %356 = vmatprep.subr.mxu0 0.0
  %357 = vmatpush1.msra.mxu0 0.0
  %358 = vmatprep.subr.mxu0 0.0
  %359 = vmatpush1.msra.mxu0 0.0
  %360 = vmatprep.mubr.f32.mxu0 0.0
  %361 = vmatmul.mubr.f32.gmra.mrb[0].mxu0 %v294
  %v362 = vpop.f32.mrb[0].mxu0
  %v363 = vadd.f32 0.0, %v362
  %v364 = vpop.f32.mrb[0].mxu0
  %365 = vdwg.mxu0
  %v367 = vsel %vm121, %v290, 0
  %369 = vmatprep.subr.mxu0 0.0
  %370 = vmatpush1.msra.mxu0 %v26
  %371 = vmatprep.subr.mxu0 0.0
  %372 = vmatpush1.msra.mxu0 %v27
  %373 = vmatprep.subr.mxu0 0.0
  %374 = vmatpush1.msra.mxu0 %v28
  %375 = vmatprep.subr.mxu0 0.0
  %376 = vmatpush1.msra.mxu0 %v127
  %377 = vmatprep.subr.mxu0 0.0
  %378 = vmatpush1.msra.mxu0 0.0
  %379 = vmatprep.subr.mxu0 0.0
  %380 = vmatpush1.msra.mxu0 0.0
  %381 = vmatprep.subr.mxu0 0.0
  %382 = vmatpush1.msra.mxu0 0.0
  %383 = vmatprep.subr.mxu0 0.0
  %384 = vmatpush1.msra.mxu0 0.0
  %385 = vmatprep.subr.mxu0 0.0
  %386 = vmatpush1.msra.mxu0 0.0
  %387 = vmatprep.subr.mxu0 0.0
  %388 = vmatpush1.msra.mxu0 0.0
  %389 = vmatprep.subr.mxu0 0.0
  %390 = vmatpush1.msra.mxu0 0.0
  %391 = vmatprep.subr.mxu0 0.0
  %392 = vmatpush1.msra.mxu0 0.0
  %393 = vmatprep.subr.mxu0 0.0
  %394 = vmatpush1.msra.mxu0 0.0
  %395 = vmatprep.subr.mxu0 0.0
  %396 = vmatpush1.msra.mxu0 0.0
  %397 = vmatprep.subr.mxu0 0.0
  %398 = vmatpush1.msra.mxu0 0.0
  %399 = vmatprep.subr.mxu0 0.0
  %400 = vmatpush1.msra.mxu0 0.0
  %401 = vmatprep.subr.mxu0 0.0
  %402 = vmatpush1.msra.mxu0 0.0
  %403 = vmatprep.subr.mxu0 0.0
  %404 = vmatpush1.msra.mxu0 0.0
  %405 = vmatprep.subr.mxu0 0.0
  %406 = vmatpush1.msra.mxu0 0.0
  %407 = vmatprep.subr.mxu0 0.0
  %408 = vmatpush1.msra.mxu0 0.0
  %409 = vmatprep.subr.mxu0 0.0
  %410 = vmatpush1.msra.mxu0 0.0
  %411 = vmatprep.subr.mxu0 0.0
  %412 = vmatpush1.msra.mxu0 0.0
  %413 = vmatprep.subr.mxu0 0.0
  %414 = vmatpush1.msra.mxu0 0.0
  %415 = vmatprep.subr.mxu0 0.0
  %416 = vmatpush1.msra.mxu0 0.0
  %417 = vmatprep.subr.mxu0 0.0
  %418 = vmatpush1.msra.mxu0 0.0
  %419 = vmatprep.subr.mxu0 0.0
  %420 = vmatpush1.msra.mxu0 0.0
  %421 = vmatprep.subr.mxu0 0.0
  %422 = vmatpush1.msra.mxu0 0.0
  %423 = vmatprep.subr.mxu0 0.0
  %424 = vmatpush1.msra.mxu0 0.0
  %425 = vmatprep.subr.mxu0 0.0
  %426 = vmatpush1.msra.mxu0 0.0
  %427 = vmatprep.subr.mxu0 0.0
  %428 = vmatpush1.msra.mxu0 0.0
  %429 = vmatprep.subr.mxu0 0.0
  %430 = vmatpush1.msra.mxu0 0.0
  %431 = vmatprep.subr.mxu0 0.0
  %432 = vmatpush1.msra.mxu0 0.0
  %433 = vmatprep.mubr.f32.mxu0 0.0
  %434 = vmatmul.mubr.f32.gmra.mrb[0].mxu0 %v367
  %v435 = vpop.f32.mrb[0].mxu0
  %v436 = vadd.f32 %v363, %v435
  %v437 = vpop.f32.mrb[0].mxu0
  %438 = vdwg.mxu0
  %v439 = vadd.f32 %v436, %v203
  %v440 = vtanh.pop %v439
  %v442 = vsel %vm213, %v440, 0
  %444 = vmatprep.subr.mxu0 0.0
  %445 = vmatpush1.msra.mxu0 %v33
  %446 = vmatprep.subr.mxu0 0.0
  %447 = vmatpush1.msra.mxu0 %v34
  %448 = vmatprep.subr.mxu0 0.0
  %449 = vmatpush1.msra.mxu0 %v35
  %450 = vmatprep.subr.mxu0 0.0
  %451 = vmatpush1.msra.mxu0 %v36
  %452 = vmatprep.subr.mxu0 0.0
  %453 = vmatpush1.msra.mxu0 0.0
  %454 = vmatprep.subr.mxu0 0.0
  %455 = vmatpush1.msra.mxu0 0.0
  %456 = vmatprep.subr.mxu0 0.0
  %457 = vmatpush1.msra.mxu0 0.0
  %458 = vmatprep.subr.mxu0 0.0
  %459 = vmatpush1.msra.mxu0 0.0
  %460 = vmatprep.subr.mxu0 0.0
  %461 = vmatpush1.msra.mxu0 0.0
  %462 = vmatprep.subr.mxu0 0.0
  %463 = vmatpush1.msra.mxu0 0.0
  %464 = vmatprep.subr.mxu0 0.0
  %465 = vmatpush1.msra.mxu0 0.0
  %466 = vmatprep.subr.mxu0 0.0
  %467 = vmatpush1.msra.mxu0 0.0
  %468 = vmatprep.subr.mxu0 0.0
  %469 = vmatpush1.msra.mxu0 0.0
  %470 = vmatprep.subr.mxu0 0.0
  %471 = vmatpush1.msra.mxu0 0.0
  %472 = vmatprep.subr.mxu0 0.0
  %473 = vmatpush1.msra.mxu0 0.0
  %474 = vmatprep.subr.mxu0 0.0
  %475 = vmatpush1.msra.mxu0 0.0
  %476 = vmatprep.subr.mxu0 0.0
  %477 = vmatpush1.msra.mxu0 0.0
  %478 = vmatprep.subr.mxu0 0.0
  %479 = vmatpush1.msra.mxu0 0.0
  %480 = vmatprep.subr.mxu0 0.0
  %481 = vmatpush1.msra.mxu0 0.0
  %482 = vmatprep.subr.mxu0 0.0
  %483 = vmatpush1.msra.mxu0 0.0
  %484 = vmatprep.subr.mxu0 0.0
  %485 = vmatpush1.msra.mxu0 0.0
  %486 = vmatprep.subr.mxu0 0.0
  %487 = vmatpush1.msra.mxu0 0.0
  %488 = vmatprep.subr.mxu0 0.0
  %489 = vmatpush1.msra.mxu0 0.0
  %490 = vmatprep.subr.mxu0 0.0
  %491 = vmatpush1.msra.mxu0 0.0
  %492 = vmatprep.subr.mxu0 0.0
  %493 = vmatpush1.msra.mxu0 0.0
  %494 = vmatprep.subr.mxu0 0.0
  %495 = vmatpush1.msra.mxu0 0.0
  %496 = vmatprep.subr.mxu0 0.0
  %497 = vmatpush1.msra.mxu0 0.0
  %498 = vmatprep.subr.mxu0 0.0
  %499 = vmatpush1.msra.mxu0 0.0
  %500 = vmatprep.subr.mxu0 0.0
  %501 = vmatpush1.msra.mxu0 0.0
  %502 = vmatprep.subr.mxu0 0.0
  %503 = vmatpush1.msra.mxu0 0.0
  %504 = vmatprep.subr.mxu0 0.0
  %505 = vmatpush1.msra.mxu0 0.0
  %506 = vmatprep.subr.mxu0 0.0
  %507 = vmatpush1.msra.mxu0 0.0
  %508 = vmatprep.mubr.f32.mxu0 0.0
  %509 = vmatmul.mubr.f32.gmra.mrb[0].mxu0 %v442
  %v510 = vpop.f32.mrb[0].mxu0
  %v511 = vadd.f32 %v211, %v510
  %v512 = vpop.f32.mrb[0].mxu0
  %513 = vdwg.mxu0
  %s514 = scalar_lea.vmem %s7, 4
  %515 = vst.msk [vmem:[%s514] sm:$0x3] %vm39, %v511
  %s516 = scalar_lea.vmem %s0, 4
  %v517 = vld [vmem:[%s516] sm:$0x3]
  %s518 = scalar_lea.vmem %s1, 4
  %v519 = vld [vmem:[%s518] sm:$0x3]
  %v521 = vsel %vm43, %v519, 0
  %523 = vmatprep.subr.mxu0 0.0
  %524 = vmatpush1.msra.mxu0 %v30
  %525 = vmatprep.subr.mxu0 0.0
  %526 = vmatpush1.msra.mxu0 %v49
  %527 = vmatprep.subr.mxu0 0.0
  %528 = vmatpush1.msra.mxu0 0.0
  %529 = vmatprep.subr.mxu0 0.0
  %530 = vmatpush1.msra.mxu0 0.0
  %531 = vmatprep.subr.mxu0 0.0
  %532 = vmatpush1.msra.mxu0 0.0
  %533 = vmatprep.subr.mxu0 0.0
  %534 = vmatpush1.msra.mxu0 0.0
  %535 = vmatprep.subr.mxu0 0.0
  %536 = vmatpush1.msra.mxu0 0.0
  %537 = vmatprep.subr.mxu0 0.0
  %538 = vmatpush1.msra.mxu0 0.0
  %539 = vmatprep.subr.mxu0 0.0
  %540 = vmatpush1.msra.mxu0 0.0
  %541 = vmatprep.subr.mxu0 0.0
  %542 = vmatpush1.msra.mxu0 0.0
  %543 = vmatprep.subr.mxu0 0.0
  %544 = vmatpush1.msra.mxu0 0.0
  %545 = vmatprep.subr.mxu0 0.0
  %546 = vmatpush1.msra.mxu0 0.0
  %547 = vmatprep.subr.mxu0 0.0
  %548 = vmatpush1.msra.mxu0 0.0
  %549 = vmatprep.subr.mxu0 0.0
  %550 = vmatpush1.msra.mxu0 0.0
  %551 = vmatprep.subr.mxu0 0.0
  %552 = vmatpush1.msra.mxu0 0.0
  %553 = vmatprep.subr.mxu0 0.0
  %554 = vmatpush1.msra.mxu0 0.0
  %555 = vmatprep.subr.mxu0 0.0
  %556 = vmatpush1.msra.mxu0 0.0
  %557 = vmatprep.subr.mxu0 0.0
  %558 = vmatpush1.msra.mxu0 0.0
  %559 = vmatprep.subr.mxu0 0.0
  %560 = vmatpush1.msra.mxu0 0.0
  %561 = vmatprep.subr.mxu0 0.0
  %562 = vmatpush1.msra.mxu0 0.0
  %563 = vmatprep.subr.mxu0 0.0
  %564 = vmatpush1.msra.mxu0 0.0
  %565 = vmatprep.subr.mxu0 0.0
  %566 = vmatpush1.msra.mxu0 0.0
  %567 = vmatprep.subr.mxu0 0.0
  %568 = vmatpush1.msra.mxu0 0.0
  %569 = vmatprep.subr.mxu0 0.0
  %570 = vmatpush1.msra.mxu0 0.0
  %571 = vmatprep.subr.mxu0 0.0
  %572 = vmatpush1.msra.mxu0 0.0
  %573 = vmatprep.subr.mxu0 0.0
  %574 = vmatpush1.msra.mxu0 0.0
  %575 = vmatprep.subr.mxu0 0.0
  %576 = vmatpush1.msra.mxu0 0.0
  %577 = vmatprep.subr.mxu0 0.0
  %578 = vmatpush1.msra.mxu0 0.0
  %579 = vmatprep.subr.mxu0 0.0
  %580 = vmatpush1.msra.mxu0 0.0
  %581 = vmatprep.subr.mxu0 0.0
  %582 = vmatpush1.msra.mxu0 0.0
  %583 = vmatprep.subr.mxu0 0.0
  %584 = vmatpush1.msra.mxu0 0.0
  %585 = vmatprep.subr.mxu0 0.0
  %586 = vmatpush1.msra.mxu0 0.0
  %587 = vmatprep.mubr.f32.mxu0 0.0
  %588 = vmatmul.mubr.f32.gmra.mrb[0].mxu0 %v521
  %v589 = vpop.f32.mrb[0].mxu0
  %v590 = vadd.f32 0.0, %v589
  %v591 = vpop.f32.mrb[0].mxu0
  %592 = vdwg.mxu0
  %v594 = vsel %vm121, %v517, 0
  %596 = vmatprep.subr.mxu0 0.0
  %597 = vmatpush1.msra.mxu0 %v26
  %598 = vmatprep.subr.mxu0 0.0
  %599 = vmatpush1.msra.mxu0 %v27
  %600 = vmatprep.subr.mxu0 0.0
  %601 = vmatpush1.msra.mxu0 %v28
  %602 = vmatprep.subr.mxu0 0.0
  %603 = vmatpush1.msra.mxu0 %v127
  %604 = vmatprep.subr.mxu0 0.0
  %605 = vmatpush1.msra.mxu0 0.0
  %606 = vmatprep.subr.mxu0 0.0
  %607 = vmatpush1.msra.mxu0 0.0
  %608 = vmatprep.subr.mxu0 0.0
  %609 = vmatpush1.msra.mxu0 0.0
  %610 = vmatprep.subr.mxu0 0.0
  %611 = vmatpush1.msra.mxu0 0.0
  %612 = vmatprep.subr.mxu0 0.0
  %613 = vmatpush1.msra.mxu0 0.0
  %614 = vmatprep.subr.mxu0 0.0
  %615 = vmatpush1.msra.mxu0 0.0
  %616 = vmatprep.subr.mxu0 0.0
  %617 = vmatpush1.msra.mxu0 0.0
  %618 = vmatprep.subr.mxu0 0.0
  %619 = vmatpush1.msra.mxu0 0.0
  %620 = vmatprep.subr.mxu0 0.0
  %621 = vmatpush1.msra.mxu0 0.0
  %622 = vmatprep.subr.mxu0 0.0
  %623 = vmatpush1.msra.mxu0 0.0
  %624 = vmatprep.subr.mxu0 0.0
  %625 = vmatpush1.msra.mxu0 0.0
  %626 = vmatprep.subr.mxu0 0.0
  %627 = vmatpush1.msra.mxu0 0.0
  %628 = vmatprep.subr.mxu0 0.0
  %629 = vmatpush1.msra.mxu0 0.0
  %630 = vmatprep.subr.mxu0 0.0
  %631 = vmatpush1.msra.mxu0 0.0
  %632 = vmatprep.subr.mxu0 0.0
  %633 = vmatpush1.msra.mxu0 0.0
  %634 = vmatprep.subr.mxu0 0.0
  %635 = vmatpush1.msra.mxu0 0.0
  %636 = vmatprep.subr.mxu0 0.0
  %637 = vmatpush1.msra.mxu0 0.0
  %638 = vmatprep.subr.mxu0 0.0
  %639 = vmatpush1.msra.mxu0 0.0
  %640 = vmatprep.subr.mxu0 0.0
  %641 = vmatpush1.msra.mxu0 0.0
  %642 = vmatprep.subr.mxu0 0.0
  %643 = vmatpush1.msra.mxu0 0.0
  %644 = vmatprep.subr.mxu0 0.0
  %645 = vmatpush1.msra.mxu0 0.0
  %646 = vmatprep.subr.mxu0 0.0
  %647 = vmatpush1.msra.mxu0 0.0
  %648 = vmatprep.subr.mxu0 0.0
  %649 = vmatpush1.msra.mxu0 0.0
  %650 = vmatprep.subr.mxu0 0.0
  %651 = vmatpush1.msra.mxu0 0.0
  %652 = vmatprep.subr.mxu0 0.0
  %653 = vmatpush1.msra.mxu0 0.0
  %654 = vmatprep.subr.mxu0 0.0
  %655 = vmatpush1.msra.mxu0 0.0
  %656 = vmatprep.subr.mxu0 0.0
  %657 = vmatpush1.msra.mxu0 0.0
  %658 = vmatprep.subr.mxu0 0.0
  %659 = vmatpush1.msra.mxu0 0.0
  %660 = vmatprep.mubr.f32.mxu0 0.0
  %661 = vmatmul.mubr.f32.gmra.mrb[0].mxu0 %v594
  %v662 = vpop.f32.mrb[0].mxu0
  %v663 = vadd.f32 %v590, %v662
  %v664 = vpop.f32.mrb[0].mxu0
  %665 = vdwg.mxu0
  %v666 = vadd.f32 %v663, %v203
  %v667 = vtanh.pop %v666
  %v669 = vsel %vm213, %v667, 0
  %671 = vmatprep.subr.mxu0 0.0
  %672 = vmatpush1.msra.mxu0 %v33
  %673 = vmatprep.subr.mxu0 0.0
  %674 = vmatpush1.msra.mxu0 %v34
  %675 = vmatprep.subr.mxu0 0.0
  %676 = vmatpush1.msra.mxu0 %v35
  %677 = vmatprep.subr.mxu0 0.0
  %678 = vmatpush1.msra.mxu0 %v36
  %679 = vmatprep.subr.mxu0 0.0
  %680 = vmatpush1.msra.mxu0 0.0
  %681 = vmatprep.subr.mxu0 0.0
  %682 = vmatpush1.msra.mxu0 0.0
  %683 = vmatprep.subr.mxu0 0.0
  %684 = vmatpush1.msra.mxu0 0.0
  %685 = vmatprep.subr.mxu0 0.0
  %686 = vmatpush1.msra.mxu0 0.0
  %687 = vmatprep.subr.mxu0 0.0
  %688 = vmatpush1.msra.mxu0 0.0
  %689 = vmatprep.subr.mxu0 0.0
  %690 = vmatpush1.msra.mxu0 0.0
  %691 = vmatprep.subr.mxu0 0.0
  %692 = vmatpush1.msra.mxu0 0.0
  %693 = vmatprep.subr.mxu0 0.0
  %694 = vmatpush1.msra.mxu0 0.0
  %695 = vmatprep.subr.mxu0 0.0
  %696 = vmatpush1.msra.mxu0 0.0
  %697 = vmatprep.subr.mxu0 0.0
  %698 = vmatpush1.msra.mxu0 0.0
  %699 = vmatprep.subr.mxu0 0.0
  %700 = vmatpush1.msra.mxu0 0.0
  %701 = vmatprep.subr.mxu0 0.0
  %702 = vmatpush1.msra.mxu0 0.0
  %703 = vmatprep.subr.mxu0 0.0
  %704 = vmatpush1.msra.mxu0 0.0
  %705 = vmatprep.subr.mxu0 0.0
  %706 = vmatpush1.msra.mxu0 0.0
  %707 = vmatprep.subr.mxu0 0.0
  %708 = vmatpush1.msra.mxu0 0.0
  %709 = vmatprep.subr.mxu0 0.0
  %710 = vmatpush1.msra.mxu0 0.0
  %711 = vmatprep.subr.mxu0 0.0
  %712 = vmatpush1.msra.mxu0 0.0
  %713 = vmatprep.subr.mxu0 0.0
  %714 = vmatpush1.msra.mxu0 0.0
  %715 = vmatprep.subr.mxu0 0.0
  %716 = vmatpush1.msra.mxu0 0.0
  %717 = vmatprep.subr.mxu0 0.0
  %718 = vmatpush1.msra.mxu0 0.0
  %719 = vmatprep.subr.mxu0 0.0
  %720 = vmatpush1.msra.mxu0 0.0
  %721 = vmatprep.subr.mxu0 0.0
  %722 = vmatpush1.msra.mxu0 0.0
  %723 = vmatprep.subr.mxu0 0.0
  %724 = vmatpush1.msra.mxu0 0.0
  %725 = vmatprep.subr.mxu0 0.0
  %726 = vmatpush1.msra.mxu0 0.0
  %727 = vmatprep.subr.mxu0 0.0
  %728 = vmatpush1.msra.mxu0 0.0
  %729 = vmatprep.subr.mxu0 0.0
  %730 = vmatpush1.msra.mxu0 0.0
  %731 = vmatprep.subr.mxu0 0.0
  %732 = vmatpush1.msra.mxu0 0.0
  %733 = vmatprep.subr.mxu0 0.0
  %734 = vmatpush1.msra.mxu0 0.0
  %735 = vmatprep.mubr.f32.mxu0 0.0
  %736 = vmatmul.mubr.f32.gmra.mrb[0].mxu0 %v669
  %v737 = vpop.f32.mrb[0].mxu0
  %v738 = vadd.f32 %v211, %v737
  %v739 = vpop.f32.mrb[0].mxu0
  %740 = vdwg.mxu0
  %s741 = scalar_lea.vmem %s7, 6
  %742 = vst.msk [vmem:[%s741] sm:$0x3] %vm39, %v738
  %s743 = scalar_lea.vmem %s0, 6
  %v744 = vld [vmem:[%s743] sm:$0x3]
  %s745 = scalar_lea.vmem %s1, 6
  %v746 = vld [vmem:[%s745] sm:$0x3]
  %v748 = vsel %vm43, %v746, 0
  %750 = vmatprep.subr.mxu0 0.0
  %751 = vmatpush1.msra.mxu0 %v30
  %752 = vmatprep.subr.mxu0 0.0
  %753 = vmatpush1.msra.mxu0 %v49
  %754 = vmatprep.subr.mxu0 0.0
  %755 = vmatpush1.msra.mxu0 0.0
  %756 = vmatprep.subr.mxu0 0.0
  %757 = vmatpush1.msra.mxu0 0.0
  %758 = vmatprep.subr.mxu0 0.0
  %759 = vmatpush1.msra.mxu0 0.0
  %760 = vmatprep.subr.mxu0 0.0
  %761 = vmatpush1.msra.mxu0 0.0
  %762 = vmatprep.subr.mxu0 0.0
  %763 = vmatpush1.msra.mxu0 0.0
  %764 = vmatprep.subr.mxu0 0.0
  %765 = vmatpush1.msra.mxu0 0.0
  %766 = vmatprep.subr.mxu0 0.0
  %767 = vmatpush1.msra.mxu0 0.0
  %768 = vmatprep.subr.mxu0 0.0
  %769 = vmatpush1.msra.mxu0 0.0
  %770 = vmatprep.subr.mxu0 0.0
  %771 = vmatpush1.msra.mxu0 0.0
  %772 = vmatprep.subr.mxu0 0.0
  %773 = vmatpush1.msra.mxu0 0.0
  %774 = vmatprep.subr.mxu0 0.0
  %775 = vmatpush1.msra.mxu0 0.0
  %776 = vmatprep.subr.mxu0 0.0
  %777 = vmatpush1.msra.mxu0 0.0
  %778 = vmatprep.subr.mxu0 0.0
  %779 = vmatpush1.msra.mxu0 0.0
  %780 = vmatprep.subr.mxu0 0.0
  %781 = vmatpush1.msra.mxu0 0.0
  %782 = vmatprep.subr.mxu0 0.0
  %783 = vmatpush1.msra.mxu0 0.0
  %784 = vmatprep.subr.mxu0 0.0
  %785 = vmatpush1.msra.mxu0 0.0
  %786 = vmatprep.subr.mxu0 0.0
  %787 = vmatpush1.msra.mxu0 0.0
  %788 = vmatprep.subr.mxu0 0.0
  %789 = vmatpush1.msra.mxu0 0.0
  %790 = vmatprep.subr.mxu0 0.0
  %791 = vmatpush1.msra.mxu0 0.0
  %792 = vmatprep.subr.mxu0 0.0
  %793 = vmatpush1.msra.mxu0 0.0
  %794 = vmatprep.subr.mxu0 0.0
  %795 = vmatpush1.msra.mxu0 0.0
  %796 = vmatprep.subr.mxu0 0.0
  %797 = vmatpush1.msra.mxu0 0.0
  %798 = vmatprep.subr.mxu0 0.0
  %799 = vmatpush1.msra.mxu0 0.0
  %800 = vmatprep.subr.mxu0 0.0
  %801 = vmatpush1.msra.mxu0 0.0
  %802 = vmatprep.subr.mxu0 0.0
  %803 = vmatpush1.msra.mxu0 0.0
  %804 = vmatprep.subr.mxu0 0.0
  %805 = vmatpush1.msra.mxu0 0.0
  %806 = vmatprep.subr.mxu0 0.0
  %807 = vmatpush1.msra.mxu0 0.0
  %808 = vmatprep.subr.mxu0 0.0
  %809 = vmatpush1.msra.mxu0 0.0
  %810 = vmatprep.subr.mxu0 0.0
  %811 = vmatpush1.msra.mxu0 0.0
  %812 = vmatprep.subr.mxu0 0.0
  %813 = vmatpush1.msra.mxu0 0.0
  %814 = vmatprep.mubr.f32.mxu0 0.0
  %815 = vmatmul.mubr.f32.gmra.mrb[0].mxu0 %v748
  %v816 = vpop.f32.mrb[0].mxu0
  %v817 = vadd.f32 0.0, %v816
  %v818 = vpop.f32.mrb[0].mxu0
  %819 = vdwg.mxu0
  %v821 = vsel %vm121, %v744, 0
  %823 = vmatprep.subr.mxu0 0.0
  %824 = vmatpush1.msra.mxu0 %v26
  %825 = vmatprep.subr.mxu0 0.0
  %826 = vmatpush1.msra.mxu0 %v27
  %827 = vmatprep.subr.mxu0 0.0
  %828 = vmatpush1.msra.mxu0 %v28
  %829 = vmatprep.subr.mxu0 0.0
  %830 = vmatpush1.msra.mxu0 %v127
  %831 = vmatprep.subr.mxu0 0.0
  %832 = vmatpush1.msra.mxu0 0.0
  %833 = vmatprep.subr.mxu0 0.0
  %834 = vmatpush1.msra.mxu0 0.0
  %835 = vmatprep.subr.mxu0 0.0
  %836 = vmatpush1.msra.mxu0 0.0
  %837 = vmatprep.subr.mxu0 0.0
  %838 = vmatpush1.msra.mxu0 0.0
  %839 = vmatprep.subr.mxu0 0.0
  %840 = vmatpush1.msra.mxu0 0.0
  %841 = vmatprep.subr.mxu0 0.0
  %842 = vmatpush1.msra.mxu0 0.0
  %843 = vmatprep.subr.mxu0 0.0
  %844 = vmatpush1.msra.mxu0 0.0
  %845 = vmatprep.subr.mxu0 0.0
  %846 = vmatpush1.msra.mxu0 0.0
  %847 = vmatprep.subr.mxu0 0.0
  %848 = vmatpush1.msra.mxu0 0.0
  %849 = vmatprep.subr.mxu0 0.0
  %850 = vmatpush1.msra.mxu0 0.0
  %851 = vmatprep.subr.mxu0 0.0
  %852 = vmatpush1.msra.mxu0 0.0
  %853 = vmatprep.subr.mxu0 0.0
  %854 = vmatpush1.msra.mxu0 0.0
  %855 = vmatprep.subr.mxu0 0.0
  %856 = vmatpush1.msra.mxu0 0.0
  %857 = vmatprep.subr.mxu0 0.0
  %858 = vmatpush1.msra.mxu0 0.0
  %859 = vmatprep.subr.mxu0 0.0
  %860 = vmatpush1.msra.mxu0 0.0
  %861 = vmatprep.subr.mxu0 0.0
  %862 = vmatpush1.msra.mxu0 0.0
  %863 = vmatprep.subr.mxu0 0.0
  %864 = vmatpush1.msra.mxu0 0.0
  %865 = vmatprep.subr.mxu0 0.0
  %866 = vmatpush1.msra.mxu0 0.0
  %867 = vmatprep.subr.mxu0 0.0
  %868 = vmatpush1.msra.mxu0 0.0
  %869 = vmatprep.subr.mxu0 0.0
  %870 = vmatpush1.msra.mxu0 0.0
  %871 = vmatprep.subr.mxu0 0.0
  %872 = vmatpush1.msra.mxu0 0.0
  %873 = vmatprep.subr.mxu0 0.0
  %874 = vmatpush1.msra.mxu0 0.0
  %875 = vmatprep.subr.mxu0 0.0
  %876 = vmatpush1.msra.mxu0 0.0
  %877 = vmatprep.subr.mxu0 0.0
  %878 = vmatpush1.msra.mxu0 0.0
  %879 = vmatprep.subr.mxu0 0.0
  %880 = vmatpush1.msra.mxu0 0.0
  %881 = vmatprep.subr.mxu0 0.0
  %882 = vmatpush1.msra.mxu0 0.0
  %883 = vmatprep.subr.mxu0 0.0
  %884 = vmatpush1.msra.mxu0 0.0
  %885 = vmatprep.subr.mxu0 0.0
  %886 = vmatpush1.msra.mxu0 0.0
  %887 = vmatprep.mubr.f32.mxu0 0.0
  %888 = vmatmul.mubr.f32.gmra.mrb[0].mxu0 %v821
  %v889 = vpop.f32.mrb[0].mxu0
  %v890 = vadd.f32 %v817, %v889
  %v891 = vpop.f32.mrb[0].mxu0
  %892 = vdwg.mxu0
  %v893 = vadd.f32 %v890, %v203
  %v894 = vtanh.pop %v893
  %v896 = vsel %vm213, %v894, 0
  %898 = vmatprep.subr.mxu0 0.0
  %899 = vmatpush1.msra.mxu0 %v33
  %900 = vmatprep.subr.mxu0 0.0
  %901 = vmatpush1.msra.mxu0 %v34
  %902 = vmatprep.subr.mxu0 0.0
  %903 = vmatpush1.msra.mxu0 %v35
  %904 = vmatprep.subr.mxu0 0.0
  %905 = vmatpush1.msra.mxu0 %v36
  %906 = vmatprep.subr.mxu0 0.0
  %907 = vmatpush1.msra.mxu0 0.0
  %908 = vmatprep.subr.mxu0 0.0
  %909 = vmatpush1.msra.mxu0 0.0
  %910 = vmatprep.subr.mxu0 0.0
  %911 = vmatpush1.msra.mxu0 0.0
  %912 = vmatprep.subr.mxu0 0.0
  %913 = vmatpush1.msra.mxu0 0.0
  %914 = vmatprep.subr.mxu0 0.0
  %915 = vmatpush1.msra.mxu0 0.0
  %916 = vmatprep.subr.mxu0 0.0
  %917 = vmatpush1.msra.mxu0 0.0
  %918 = vmatprep.subr.mxu0 0.0
  %919 = vmatpush1.msra.mxu0 0.0
  %920 = vmatprep.subr.mxu0 0.0
  %921 = vmatpush1.msra.mxu0 0.0
  %922 = vmatprep.subr.mxu0 0.0
  %923 = vmatpush1.msra.mxu0 0.0
  %924 = vmatprep.subr.mxu0 0.0
  %925 = vmatpush1.msra.mxu0 0.0
  %926 = vmatprep.subr.mxu0 0.0
  %927 = vmatpush1.msra.mxu0 0.0
  %928 = vmatprep.subr.mxu0 0.0
  %929 = vmatpush1.msra.mxu0 0.0
  %930 = vmatprep.subr.mxu0 0.0
  %931 = vmatpush1.msra.mxu0 0.0
  %932 = vmatprep.subr.mxu0 0.0
  %933 = vmatpush1.msra.mxu0 0.0
  %934 = vmatprep.subr.mxu0 0.0
  %935 = vmatpush1.msra.mxu0 0.0
  %936 = vmatprep.subr.mxu0 0.0
  %937 = vmatpush1.msra.mxu0 0.0
  %938 = vmatprep.subr.mxu0 0.0
  %939 = vmatpush1.msra.mxu0 0.0
  %940 = vmatprep.subr.mxu0 0.0
  %941 = vmatpush1.msra.mxu0 0.0
  %942 = vmatprep.subr.mxu0 0.0
  %943 = vmatpush1.msra.mxu0 0.0
  %944 = vmatprep.subr.mxu0 0.0
  %945 = vmatpush1.msra.mxu0 0.0
  %946 = vmatprep.subr.mxu0 0.0
  %947 = vmatpush1.msra.mxu0 0.0
  %948 = vmatprep.subr.mxu0 0.0
  %949 = vmatpush1.msra.mxu0 0.0
  %950 = vmatprep.subr.mxu0 0.0
  %951 = vmatpush1.msra.mxu0 0.0
  %952 = vmatprep.subr.mxu0 0.0
  %953 = vmatpush1.msra.mxu0 0.0
  %954 = vmatprep.subr.mxu0 0.0
  %955 = vmatpush1.msra.mxu0 0.0
  %956 = vmatprep.subr.mxu0 0.0
  %957 = vmatpush1.msra.mxu0 0.0
  %958 = vmatprep.subr.mxu0 0.0
  %959 = vmatpush1.msra.mxu0 0.0
  %960 = vmatprep.subr.mxu0 0.0
  %961 = vmatpush1.msra.mxu0 0.0
  %962 = vmatprep.mubr.f32.mxu0 0.0
  %963 = vmatmul.mubr.f32.gmra.mrb[0].mxu0 %v896
  %v964 = vpop.f32.mrb[0].mxu0
  %v965 = vadd.f32 %v211, %v964
  %v966 = vpop.f32.mrb[0].mxu0
  %967 = vdwg.mxu0
  %s968 = scalar_lea.vmem %s7, 8
  %969 = vst.msk [vmem:[%s968] sm:$0x3] %vm39, %v965
  %s970 = scalar_lea.vmem %s1, 8
  %v971 = vld [vmem:[%s970] sm:$0x3]
  %v973 = vsel %vm43, %v971, 0
  %975 = vmatprep.subr.mxu0 0.0
  %976 = vmatpush1.msra.mxu0 %v30
  %977 = vmatprep.subr.mxu0 0.0
  %978 = vmatpush1.msra.mxu0 %v49
  %979 = vmatprep.subr.mxu0 0.0
  %980 = vmatpush1.msra.mxu0 0.0
  %981 = vmatprep.subr.mxu0 0.0
  %982 = vmatpush1.msra.mxu0 0.0
  %983 = vmatprep.subr.mxu0 0.0
  %984 = vmatpush1.msra.mxu0 0.0
  %985 = vmatprep.subr.mxu0 0.0
  %986 = vmatpush1.msra.mxu0 0.0
  %987 = vmatprep.subr.mxu0 0.0
  %988 = vmatpush1.msra.mxu0 0.0
  %989 = vmatprep.subr.mxu0 0.0
  %990 = vmatpush1.msra.mxu0 0.0
  %991 = vmatprep.subr.mxu0 0.0
  %992 = vmatpush1.msra.mxu0 0.0
  %993 = vmatprep.subr.mxu0 0.0
  %994 = vmatpush1.msra.mxu0 0.0
  %995 = vmatprep.subr.mxu0 0.0
  %996 = vmatpush1.msra.mxu0 0.0
  %997 = vmatprep.subr.mxu0 0.0
  %998 = vmatpush1.msra.mxu0 0.0
  %999 = vmatprep.subr.mxu0 0.0
  %1000 = vmatpush1.msra.mxu0 0.0
  %1001 = vmatprep.subr.mxu0 0.0
  %1002 = vmatpush1.msra.mxu0 0.0
  %1003 = vmatprep.subr.mxu0 0.0
  %1004 = vmatpush1.msra.mxu0 0.0
  %1005 = vmatprep.subr.mxu0 0.0
  %1006 = vmatpush1.msra.mxu0 0.0
  %1007 = vmatprep.subr.mxu0 0.0
  %1008 = vmatpush1.msra.mxu0 0.0
  %1009 = vmatprep.subr.mxu0 0.0
  %1010 = vmatpush1.msra.mxu0 0.0
  %1011 = vmatprep.subr.mxu0 0.0
  %1012 = vmatpush1.msra.mxu0 0.0
  %1013 = vmatprep.subr.mxu0 0.0
  %1014 = vmatpush1.msra.mxu0 0.0
  %1015 = vmatprep.subr.mxu0 0.0
  %1016 = vmatpush1.msra.mxu0 0.0
  %1017 = vmatprep.subr.mxu0 0.0
  %1018 = vmatpush1.msra.mxu0 0.0
  %1019 = vmatprep.subr.mxu0 0.0
  %1020 = vmatpush1.msra.mxu0 0.0
  %1021 = vmatprep.subr.mxu0 0.0
  %1022 = vmatpush1.msra.mxu0 0.0
  %1023 = vmatprep.subr.mxu0 0.0
  %1024 = vmatpush1.msra.mxu0 0.0
  %1025 = vmatprep.subr.mxu0 0.0
  %1026 = vmatpush1.msra.mxu0 0.0
  %1027 = vmatprep.subr.mxu0 0.0
  %1028 = vmatpush1.msra.mxu0 0.0
  %1029 = vmatprep.subr.mxu0 0.0
  %1030 = vmatpush1.msra.mxu0 0.0
  %1031 = vmatprep.subr.mxu0 0.0
  %1032 = vmatpush1.msra.mxu0 0.0
  %1033 = vmatprep.subr.mxu0 0.0
  %1034 = vmatpush1.msra.mxu0 0.0
  %1035 = vmatprep.subr.mxu0 0.0
  %1036 = vmatpush1.msra.mxu0 0.0
  %1037 = vmatprep.subr.mxu0 0.0
  %1038 = vmatpush1.msra.mxu0 0.0
  %1039 = vmatprep.mubr.f32.mxu0 0.0
  %1040 = vmatmul.mubr.f32.gmra.mrb[0].mxu0 %v973
  %v1041 = vpop.f32.mrb[0].mxu0
  %v1042 = vadd.f32 0.0, %v1041
  %v1043 = vpop.f32.mrb[0].mxu0
  %1044 = vdwg.mxu0
  %v1046 = vsel %vm121, %v965, 0
  %1048 = vmatprep.subr.mxu0 0.0
  %1049 = vmatpush1.msra.mxu0 %v26
  %1050 = vmatprep.subr.mxu0 0.0
  %1051 = vmatpush1.msra.mxu0 %v27
  %1052 = vmatprep.subr.mxu0 0.0
  %1053 = vmatpush1.msra.mxu0 %v28
  %1054 = vmatprep.subr.mxu0 0.0
  %1055 = vmatpush1.msra.mxu0 %v127
  %1056 = vmatprep.subr.mxu0 0.0
  %1057 = vmatpush1.msra.mxu0 0.0
  %1058 = vmatprep.subr.mxu0 0.0
  %1059 = vmatpush1.msra.mxu0 0.0
  %1060 = vmatprep.subr.mxu0 0.0
  %1061 = vmatpush1.msra.mxu0 0.0
  %1062 = vmatprep.subr.mxu0 0.0
  %1063 = vmatpush1.msra.mxu0 0.0
  %1064 = vmatprep.subr.mxu0 0.0
  %1065 = vmatpush1.msra.mxu0 0.0
  %1066 = vmatprep.subr.mxu0 0.0
  %1067 = vmatpush1.msra.mxu0 0.0
  %1068 = vmatprep.subr.mxu0 0.0
  %1069 = vmatpush1.msra.mxu0 0.0
  %1070 = vmatprep.subr.mxu0 0.0
  %1071 = vmatpush1.msra.mxu0 0.0
  %1072 = vmatprep.subr.mxu0 0.0
  %1073 = vmatpush1.msra.mxu0 0.0
  %1074 = vmatprep.subr.mxu0 0.0
  %1075 = vmatpush1.msra.mxu0 0.0
  %1076 = vmatprep.subr.mxu0 0.0
  %1077 = vmatpush1.msra.mxu0 0.0
  %1078 = vmatprep.subr.mxu0 0.0
  %1079 = vmatpush1.msra.mxu0 0.0
  %1080 = vmatprep.subr.mxu0 0.0
  %1081 = vmatpush1.msra.mxu0 0.0
  %1082 = vmatprep.subr.mxu0 0.0
  %1083 = vmatpush1.msra.mxu0 0.0
  %1084 = vmatprep.subr.mxu0 0.0
  %1085 = vmatpush1.msra.mxu0 0.0
  %1086 = vmatprep.subr.mxu0 0.0
  %1087 = vmatpush1.msra.mxu0 0.0
  %1088 = vmatprep.subr.mxu0 0.0
  %1089 = vmatpush1.msra.mxu0 0.0
  %1090 = vmatprep.subr.mxu0 0.0
  %1091 = vmatpush1.msra.mxu0 0.0
  %1092 = vmatprep.subr.mxu0 0.0
  %1093 = vmatpush1.msra.mxu0 0.0
  %1094 = vmatprep.subr.mxu0 0.0
  %1095 = vmatpush1.msra.mxu0 0.0
  %1096 = vmatprep.subr.mxu0 0.0
  %1097 = vmatpush1.msra.mxu0 0.0
  %1098 = vmatprep.subr.mxu0 0.0
  %1099 = vmatpush1.msra.mxu0 0.0
  %1100 = vmatprep.subr.mxu0 0.0
  %1101 = vmatpush1.msra.mxu0 0.0
  %1102 = vmatprep.subr.mxu0 0.0
  %1103 = vmatpush1.msra.mxu0 0.0
  %1104 = vmatprep.subr.mxu0 0.0
  %1105 = vmatpush1.msra.mxu0 0.0
  %1106 = vmatprep.subr.mxu0 0.0
  %1107 = vmatpush1.msra.mxu0 0.0
  %1108 = vmatprep.subr.mxu0 0.0
  %1109 = vmatpush1.msra.mxu0 0.0
  %1110 = vmatprep.subr.mxu0 0.0
  %1111 = vmatpush1.msra.mxu0 0.0
  %1112 = vmatprep.mubr.f32.mxu0 0.0
  %1113 = vmatmul.mubr.f32.gmra.mrb[0].mxu0 %v1046
  %v1114 = vpop.f32.mrb[0].mxu0
  %v1115 = vadd.f32 %v1042, %v1114
  %v1116 = vpop.f32.mrb[0].mxu0
  %1117 = vdwg.mxu0
  %v1118 = vadd.f32 %v1115, %v203
  %v1119 = vtanh.pop %v1118
  %v1121 = vsel %vm213, %v1119, 0
  %1123 = vmatprep.subr.mxu0 0.0
  %1124 = vmatpush1.msra.mxu0 %v33
  %1125 = vmatprep.subr.mxu0 0.0
  %1126 = vmatpush1.msra.mxu0 %v34
  %1127 = vmatprep.subr.mxu0 0.0
  %1128 = vmatpush1.msra.mxu0 %v35
  %1129 = vmatprep.subr.mxu0 0.0
  %1130 = vmatpush1.msra.mxu0 %v36
  %1131 = vmatprep.subr.mxu0 0.0
  %1132 = vmatpush1.msra.mxu0 0.0
  %1133 = vmatprep.subr.mxu0 0.0
  %1134 = vmatpush1.msra.mxu0 0.0
  %1135 = vmatprep.subr.mxu0 0.0
  %1136 = vmatpush1.msra.mxu0 0.0
  %1137 = vmatprep.subr.mxu0 0.0
  %1138 = vmatpush1.msra.mxu0 0.0
  %1139 = vmatprep.subr.mxu0 0.0
  %1140 = vmatpush1.msra.mxu0 0.0
  %1141 = vmatprep.subr.mxu0 0.0
  %1142 = vmatpush1.msra.mxu0 0.0
  %1143 = vmatprep.subr.mxu0 0.0
  %1144 = vmatpush1.msra.mxu0 0.0
  %1145 = vmatprep.subr.mxu0 0.0
  %1146 = vmatpush1.msra.mxu0 0.0
  %1147 = vmatprep.subr.mxu0 0.0
  %1148 = vmatpush1.msra.mxu0 0.0
  %1149 = vmatprep.subr.mxu0 0.0
  %1150 = vmatpush1.msra.mxu0 0.0
  %1151 = vmatprep.subr.mxu0 0.0
  %1152 = vmatpush1.msra.mxu0 0.0
  %1153 = vmatprep.subr.mxu0 0.0
  %1154 = vmatpush1.msra.mxu0 0.0
  %1155 = vmatprep.subr.mxu0 0.0
  %1156 = vmatpush1.msra.mxu0 0.0
  %1157 = vmatprep.subr.mxu0 0.0
  %1158 = vmatpush1.msra.mxu0 0.0
  %1159 = vmatprep.subr.mxu0 0.0
  %1160 = vmatpush1.msra.mxu0 0.0
  %1161 = vmatprep.subr.mxu0 0.0
  %1162 = vmatpush1.msra.mxu0 0.0
  %1163 = vmatprep.subr.mxu0 0.0
  %1164 = vmatpush1.msra.mxu0 0.0
  %1165 = vmatprep.subr.mxu0 0.0
  %1166 = vmatpush1.msra.mxu0 0.0
  %1167 = vmatprep.subr.mxu0 0.0
  %1168 = vmatpush1.msra.mxu0 0.0
  %1169 = vmatprep.subr.mxu0 0.0
  %1170 = vmatpush1.msra.mxu0 0.0
  %1171 = vmatprep.subr.mxu0 0.0
  %1172 = vmatpush1.msra.mxu0 0.0
  %1173 = vmatprep.subr.mxu0 0.0
  %1174 = vmatpush1.msra.mxu0 0.0
  %1175 = vmatprep.subr.mxu0 0.0
  %1176 = vmatpush1.msra.mxu0 0.0
  %1177 = vmatprep.subr.mxu0 0.0
  %1178 = vmatpush1.msra.mxu0 0.0
  %1179 = vmatprep.subr.mxu0 0.0
  %1180 = vmatpush1.msra.mxu0 0.0
  %1181 = vmatprep.subr.mxu0 0.0
  %1182 = vmatpush1.msra.mxu0 0.0
  %1183 = vmatprep.subr.mxu0 0.0
  %1184 = vmatpush1.msra.mxu0 0.0
  %1185 = vmatprep.subr.mxu0 0.0
  %1186 = vmatpush1.msra.mxu0 0.0
  %1187 = vmatprep.mubr.f32.mxu0 0.0
  %1188 = vmatmul.mubr.f32.gmra.mrb[0].mxu0 %v1121
  %v1189 = vpop.f32.mrb[0].mxu0
  %v1190 = vadd.f32 %v211, %v1189
  %v1191 = vpop.f32.mrb[0].mxu0
  %1192 = vdwg.mxu0
  %s1193 = scalar_lea.vmem %s7, 10
  %1194 = vst.msk [vmem:[%s1193] sm:$0x3] %vm39, %v1190
  %s1195 = scalar_lea.vmem %s1, 10
  %v1196 = vld [vmem:[%s1195] sm:$0x3]
  %v1198 = vsel %vm43, %v1196, 0
  %1200 = vmatprep.subr.mxu0 0.0
  %1201 = vmatpush1.msra.mxu0 %v30
  %1202 = vmatprep.subr.mxu0 0.0
  %1203 = vmatpush1.msra.mxu0 %v49
  %1204 = vmatprep.subr.mxu0 0.0
  %1205 = vmatpush1.msra.mxu0 0.0
  %1206 = vmatprep.subr.mxu0 0.0
  %1207 = vmatpush1.msra.mxu0 0.0
  %1208 = vmatprep.subr.mxu0 0.0
  %1209 = vmatpush1.msra.mxu0 0.0
  %1210 = vmatprep.subr.mxu0 0.0
  %1211 = vmatpush1.msra.mxu0 0.0
  %1212 = vmatprep.subr.mxu0 0.0
  %1213 = vmatpush1.msra.mxu0 0.0
  %1214 = vmatprep.subr.mxu0 0.0
  %1215 = vmatpush1.msra.mxu0 0.0
  %1216 = vmatprep.subr.mxu0 0.0
  %1217 = vmatpush1.msra.mxu0 0.0
  %1218 = vmatprep.subr.mxu0 0.0
  %1219 = vmatpush1.msra.mxu0 0.0
  %1220 = vmatprep.subr.mxu0 0.0
  %1221 = vmatpush1.msra.mxu0 0.0
  %1222 = vmatprep.subr.mxu0 0.0
  %1223 = vmatpush1.msra.mxu0 0.0
  %1224 = vmatprep.subr.mxu0 0.0
  %1225 = vmatpush1.msra.mxu0 0.0
  %1226 = vmatprep.subr.mxu0 0.0
  %1227 = vmatpush1.msra.mxu0 0.0
  %1228 = vmatprep.subr.mxu0 0.0
  %1229 = vmatpush1.msra.mxu0 0.0
  %1230 = vmatprep.subr.mxu0 0.0
  %1231 = vmatpush1.msra.mxu0 0.0
  %1232 = vmatprep.subr.mxu0 0.0
  %1233 = vmatpush1.msra.mxu0 0.0
  %1234 = vmatprep.subr.mxu0 0.0
  %1235 = vmatpush1.msra.mxu0 0.0
  %1236 = vmatprep.subr.mxu0 0.0
  %1237 = vmatpush1.msra.mxu0 0.0
  %1238 = vmatprep.subr.mxu0 0.0
  %1239 = vmatpush1.msra.mxu0 0.0
  %1240 = vmatprep.subr.mxu0 0.0
  %1241 = vmatpush1.msra.mxu0 0.0
  %1242 = vmatprep.subr.mxu0 0.0
  %1243 = vmatpush1.msra.mxu0 0.0
  %1244 = vmatprep.subr.mxu0 0.0
  %1245 = vmatpush1.msra.mxu0 0.0
  %1246 = vmatprep.subr.mxu0 0.0
  %1247 = vmatpush1.msra.mxu0 0.0
  %1248 = vmatprep.subr.mxu0 0.0
  %1249 = vmatpush1.msra.mxu0 0.0
  %1250 = vmatprep.subr.mxu0 0.0
  %1251 = vmatpush1.msra.mxu0 0.0
  %1252 = vmatprep.subr.mxu0 0.0
  %1253 = vmatpush1.msra.mxu0 0.0
  %1254 = vmatprep.subr.mxu0 0.0
  %1255 = vmatpush1.msra.mxu0 0.0
  %1256 = vmatprep.subr.mxu0 0.0
  %1257 = vmatpush1.msra.mxu0 0.0
  %1258 = vmatprep.subr.mxu0 0.0
  %1259 = vmatpush1.msra.mxu0 0.0
  %1260 = vmatprep.subr.mxu0 0.0
  %1261 = vmatpush1.msra.mxu0 0.0
  %1262 = vmatprep.subr.mxu0 0.0
  %1263 = vmatpush1.msra.mxu0 0.0
  %1264 = vmatprep.mubr.f32.mxu0 0.0
  %1265 = vmatmul.mubr.f32.gmra.mrb[0].mxu0 %v1198
  %v1266 = vpop.f32.mrb[0].mxu0
  %v1267 = vadd.f32 0.0, %v1266
  %v1268 = vpop.f32.mrb[0].mxu0
  %1269 = vdwg.mxu0
  %v1271 = vsel %vm121, %v1190, 0
  %1273 = vmatprep.subr.mxu0 0.0
  %1274 = vmatpush1.msra.mxu0 %v26
  %1275 = vmatprep.subr.mxu0 0.0
  %1276 = vmatpush1.msra.mxu0 %v27
  %1277 = vmatprep.subr.mxu0 0.0
  %1278 = vmatpush1.msra.mxu0 %v28
  %1279 = vmatprep.subr.mxu0 0.0
  %1280 = vmatpush1.msra.mxu0 %v127
  %1281 = vmatprep.subr.mxu0 0.0
  %1282 = vmatpush1.msra.mxu0 0.0
  %1283 = vmatprep.subr.mxu0 0.0
  %1284 = vmatpush1.msra.mxu0 0.0
  %1285 = vmatprep.subr.mxu0 0.0
  %1286 = vmatpush1.msra.mxu0 0.0
  %1287 = vmatprep.subr.mxu0 0.0
  %1288 = vmatpush1.msra.mxu0 0.0
  %1289 = vmatprep.subr.mxu0 0.0
  %1290 = vmatpush1.msra.mxu0 0.0
  %1291 = vmatprep.subr.mxu0 0.0
  %1292 = vmatpush1.msra.mxu0 0.0
  %1293 = vmatprep.subr.mxu0 0.0
  %1294 = vmatpush1.msra.mxu0 0.0
  %1295 = vmatprep.subr.mxu0 0.0
  %1296 = vmatpush1.msra.mxu0 0.0
  %1297 = vmatprep.subr.mxu0 0.0
  %1298 = vmatpush1.msra.mxu0 0.0
  %1299 = vmatprep.subr.mxu0 0.0
  %1300 = vmatpush1.msra.mxu0 0.0
  %1301 = vmatprep.subr.mxu0 0.0
  %1302 = vmatpush1.msra.mxu0 0.0
  %1303 = vmatprep.subr.mxu0 0.0
  %1304 = vmatpush1.msra.mxu0 0.0
  %1305 = vmatprep.subr.mxu0 0.0
  %1306 = vmatpush1.msra.mxu0 0.0
  %1307 = vmatprep.subr.mxu0 0.0
  %1308 = vmatpush1.msra.mxu0 0.0
  %1309 = vmatprep.subr.mxu0 0.0
  %1310 = vmatpush1.msra.mxu0 0.0
  %1311 = vmatprep.subr.mxu0 0.0
  %1312 = vmatpush1.msra.mxu0 0.0
  %1313 = vmatprep.subr.mxu0 0.0
  %1314 = vmatpush1.msra.mxu0 0.0
  %1315 = vmatprep.subr.mxu0 0.0
  %1316 = vmatpush1.msra.mxu0 0.0
  %1317 = vmatprep.subr.mxu0 0.0
  %1318 = vmatpush1.msra.mxu0 0.0
  %1319 = vmatprep.subr.mxu0 0.0
  %1320 = vmatpush1.msra.mxu0 0.0
  %1321 = vmatprep.subr.mxu0 0.0
  %1322 = vmatpush1.msra.mxu0 0.0
  %1323 = vmatprep.subr.mxu0 0.0
  %1324 = vmatpush1.msra.mxu0 0.0
  %1325 = vmatprep.subr.mxu0 0.0
  %1326 = vmatpush1.msra.mxu0 0.0
  %1327 = vmatprep.subr.mxu0 0.0
  %1328 = vmatpush1.msra.mxu0 0.0
  %1329 = vmatprep.subr.mxu0 0.0
  %1330 = vmatpush1.msra.mxu0 0.0
  %1331 = vmatprep.subr.mxu0 0.0
  %1332 = vmatpush1.msra.mxu0 0.0
  %1333 = vmatprep.subr.mxu0 0.0
  %1334 = vmatpush1.msra.mxu0 0.0
  %1335 = vmatprep.subr.mxu0 0.0
  %1336 = vmatpush1.msra.mxu0 0.0
  %1337 = vmatprep.mubr.f32.mxu0 0.0
  %1338 = vmatmul.mubr.f32.gmra.mrb[0].mxu0 %v1271
  %v1339 = vpop.f32.mrb[0].mxu0
  %v1340 = vadd.f32 %v1267, %v1339
  %v1341 = vpop.f32.mrb[0].mxu0
  %1342 = vdwg.mxu0
  %v1343 = vadd.f32 %v1340, %v203
  %v1344 = vtanh.pop %v1343
  %v1346 = vsel %vm213, %v1344, 0
  %1348 = vmatprep.subr.mxu0 0.0
  %1349 = vmatpush1.msra.mxu0 %v33
  %1350 = vmatprep.subr.mxu0 0.0
  %1351 = vmatpush1.msra.mxu0 %v34
  %1352 = vmatprep.subr.mxu0 0.0
  %1353 = vmatpush1.msra.mxu0 %v35
  %1354 = vmatprep.subr.mxu0 0.0
  %1355 = vmatpush1.msra.mxu0 %v36
  %1356 = vmatprep.subr.mxu0 0.0
  %1357 = vmatpush1.msra.mxu0 0.0
  %1358 = vmatprep.subr.mxu0 0.0
  %1359 = vmatpush1.msra.mxu0 0.0
  %1360 = vmatprep.subr.mxu0 0.0
  %1361 = vmatpush1.msra.mxu0 0.0
  %1362 = vmatprep.subr.mxu0 0.0
  %1363 = vmatpush1.msra.mxu0 0.0
  %1364 = vmatprep.subr.mxu0 0.0
  %1365 = vmatpush1.msra.mxu0 0.0
  %1366 = vmatprep.subr.mxu0 0.0
  %1367 = vmatpush1.msra.mxu0 0.0
  %1368 = vmatprep.subr.mxu0 0.0
  %1369 = vmatpush1.msra.mxu0 0.0
  %1370 = vmatprep.subr.mxu0 0.0
  %1371 = vmatpush1.msra.mxu0 0.0
  %1372 = vmatprep.subr.mxu0 0.0
  %1373 = vmatpush1.msra.mxu0 0.0
  %1374 = vmatprep.subr.mxu0 0.0
  %1375 = vmatpush1.msra.mxu0 0.0
  %1376 = vmatprep.subr.mxu0 0.0
  %1377 = vmatpush1.msra.mxu0 0.0
  %1378 = vmatprep.subr.mxu0 0.0
  %1379 = vmatpush1.msra.mxu0 0.0
  %1380 = vmatprep.subr.mxu0 0.0
  %1381 = vmatpush1.msra.mxu0 0.0
  %1382 = vmatprep.subr.mxu0 0.0
  %1383 = vmatpush1.msra.mxu0 0.0
  %1384 = vmatprep.subr.mxu0 0.0
  %1385 = vmatpush1.msra.mxu0 0.0
  %1386 = vmatprep.subr.mxu0 0.0
  %1387 = vmatpush1.msra.mxu0 0.0
  %1388 = vmatprep.subr.mxu0 0.0
  %1389 = vmatpush1.msra.mxu0 0.0
  %1390 = vmatprep.subr.mxu0 0.0
  %1391 = vmatpush1.msra.mxu0 0.0
  %1392 = vmatprep.subr.mxu0 0.0
  %1393 = vmatpush1.msra.mxu0 0.0
  %1394 = vmatprep.subr.mxu0 0.0
  %1395 = vmatpush1.msra.mxu0 0.0
  %1396 = vmatprep.subr.mxu0 0.0
  %1397 = vmatpush1.msra.mxu0 0.0
  %1398 = vmatprep.subr.mxu0 0.0
  %1399 = vmatpush1.msra.mxu0 0.0
  %1400 = vmatprep.subr.mxu0 0.0
  %1401 = vmatpush1.msra.mxu0 0.0
  %1402 = vmatprep.subr.mxu0 0.0
  %1403 = vmatpush1.msra.mxu0 0.0
  %1404 = vmatprep.subr.mxu0 0.0
  %1405 = vmatpush1.msra.mxu0 0.0
  %1406 = vmatprep.subr.mxu0 0.0
  %1407 = vmatpush1.msra.mxu0 0.0
  %1408 = vmatprep.subr.mxu0 0.0
  %1409 = vmatpush1.msra.mxu0 0.0
  %1410 = vmatprep.subr.mxu0 0.0
  %1411 = vmatpush1.msra.mxu0 0.0
  %1412 = vmatprep.mubr.f32.mxu0 0.0
  %1413 = vmatmul.mubr.f32.gmra.mrb[0].mxu0 %v1346
  %v1414 = vpop.f32.mrb[0].mxu0
  %v1415 = vadd.f32 %v211, %v1414
  %v1416 = vpop.f32.mrb[0].mxu0
  %1417 = vdwg.mxu0
  %s1418 = scalar_lea.vmem %s7, 12
  %1419 = vst.msk [vmem:[%s1418] sm:$0x3] %vm39, %v1415
  %s1420 = scalar_lea.vmem %s1, 12
  %v1421 = vld [vmem:[%s1420] sm:$0x3]
  %v1423 = vsel %vm43, %v1421, 0
  %1425 = vmatprep.subr.mxu0 0.0
  %1426 = vmatpush1.msra.mxu0 %v30
  %1427 = vmatprep.subr.mxu0 0.0
  %1428 = vmatpush1.msra.mxu0 %v49
  %1429 = vmatprep.subr.mxu0 0.0
  %1430 = vmatpush1.msra.mxu0 0.0
  %1431 = vmatprep.subr.mxu0 0.0
  %1432 = vmatpush1.msra.mxu0 0.0
  %1433 = vmatprep.subr.mxu0 0.0
  %1434 = vmatpush1.msra.mxu0 0.0
  %1435 = vmatprep.subr.mxu0 0.0
  %1436 = vmatpush1.msra.mxu0 0.0
  %1437 = vmatprep.subr.mxu0 0.0
  %1438 = vmatpush1.msra.mxu0 0.0
  %1439 = vmatprep.subr.mxu0 0.0
  %1440 = vmatpush1.msra.mxu0 0.0
  %1441 = vmatprep.subr.mxu0 0.0
  %1442 = vmatpush1.msra.mxu0 0.0
  %1443 = vmatprep.subr.mxu0 0.0
  %1444 = vmatpush1.msra.mxu0 0.0
  %1445 = vmatprep.subr.mxu0 0.0
  %1446 = vmatpush1.msra.mxu0 0.0
  %1447 = vmatprep.subr.mxu0 0.0
  %1448 = vmatpush1.msra.mxu0 0.0
  %1449 = vmatprep.subr.mxu0 0.0
  %1450 = vmatpush1.msra.mxu0 0.0
  %1451 = vmatprep.subr.mxu0 0.0
  %1452 = vmatpush1.msra.mxu0 0.0
  %1453 = vmatprep.subr.mxu0 0.0
  %1454 = vmatpush1.msra.mxu0 0.0
  %1455 = vmatprep.subr.mxu0 0.0
  %1456 = vmatpush1.msra.mxu0 0.0
  %1457 = vmatprep.subr.mxu0 0.0
  %1458 = vmatpush1.msra.mxu0 0.0
  %1459 = vmatprep.subr.mxu0 0.0
  %1460 = vmatpush1.msra.mxu0 0.0
  %1461 = vmatprep.subr.mxu0 0.0
  %1462 = vmatpush1.msra.mxu0 0.0
  %1463 = vmatprep.subr.mxu0 0.0
  %1464 = vmatpush1.msra.mxu0 0.0
  %1465 = vmatprep.subr.mxu0 0.0
  %1466 = vmatpush1.msra.mxu0 0.0
  %1467 = vmatprep.subr.mxu0 0.0
  %1468 = vmatpush1.msra.mxu0 0.0
  %1469 = vmatprep.subr.mxu0 0.0
  %1470 = vmatpush1.msra.mxu0 0.0
  %1471 = vmatprep.subr.mxu0 0.0
  %1472 = vmatpush1.msra.mxu0 0.0
  %1473 = vmatprep.subr.mxu0 0.0
  %1474 = vmatpush1.msra.mxu0 0.0
  %1475 = vmatprep.subr.mxu0 0.0
  %1476 = vmatpush1.msra.mxu0 0.0
  %1477 = vmatprep.subr.mxu0 0.0
  %1478 = vmatpush1.msra.mxu0 0.0
  %1479 = vmatprep.subr.mxu0 0.0
  %1480 = vmatpush1.msra.mxu0 0.0
  %1481 = vmatprep.subr.mxu0 0.0
  %1482 = vmatpush1.msra.mxu0 0.0
  %1483 = vmatprep.subr.mxu0 0.0
  %1484 = vmatpush1.msra.mxu0 0.0
  %1485 = vmatprep.subr.mxu0 0.0
  %1486 = vmatpush1.msra.mxu0 0.0
  %1487 = vmatprep.subr.mxu0 0.0
  %1488 = vmatpush1.msra.mxu0 0.0
  %1489 = vmatprep.mubr.f32.mxu0 0.0
  %1490 = vmatmul.mubr.f32.gmra.mrb[0].mxu0 %v1423
  %v1491 = vpop.f32.mrb[0].mxu0
  %v1492 = vadd.f32 0.0, %v1491
  %v1493 = vpop.f32.mrb[0].mxu0
  %1494 = vdwg.mxu0
  %v1496 = vsel %vm121, %v1415, 0
  %1498 = vmatprep.subr.mxu0 0.0
  %1499 = vmatpush1.msra.mxu0 %v26
  %1500 = vmatprep.subr.mxu0 0.0
  %1501 = vmatpush1.msra.mxu0 %v27
  %1502 = vmatprep.subr.mxu0 0.0
  %1503 = vmatpush1.msra.mxu0 %v28
  %1504 = vmatprep.subr.mxu0 0.0
  %1505 = vmatpush1.msra.mxu0 %v127
  %1506 = vmatprep.subr.mxu0 0.0
  %1507 = vmatpush1.msra.mxu0 0.0
  %1508 = vmatprep.subr.mxu0 0.0
  %1509 = vmatpush1.msra.mxu0 0.0
  %1510 = vmatprep.subr.mxu0 0.0
  %1511 = vmatpush1.msra.mxu0 0.0
  %1512 = vmatprep.subr.mxu0 0.0
  %1513 = vmatpush1.msra.mxu0 0.0
  %1514 = vmatprep.subr.mxu0 0.0
  %1515 = vmatpush1.msra.mxu0 0.0
  %1516 = vmatprep.subr.mxu0 0.0
  %1517 = vmatpush1.msra.mxu0 0.0
  %1518 = vmatprep.subr.mxu0 0.0
  %1519 = vmatpush1.msra.mxu0 0.0
  %1520 = vmatprep.subr.mxu0 0.0
  %1521 = vmatpush1.msra.mxu0 0.0
  %1522 = vmatprep.subr.mxu0 0.0
  %1523 = vmatpush1.msra.mxu0 0.0
  %1524 = vmatprep.subr.mxu0 0.0
  %1525 = vmatpush1.msra.mxu0 0.0
  %1526 = vmatprep.subr.mxu0 0.0
  %1527 = vmatpush1.msra.mxu0 0.0
  %1528 = vmatprep.subr.mxu0 0.0
  %1529 = vmatpush1.msra.mxu0 0.0
  %1530 = vmatprep.subr.mxu0 0.0
  %1531 = vmatpush1.msra.mxu0 0.0
  %1532 = vmatprep.subr.mxu0 0.0
  %1533 = vmatpush1.msra.mxu0 0.0
  %1534 = vmatprep.subr.mxu0 0.0
  %1535 = vmatpush1.msra.mxu0 0.0
  %1536 = vmatprep.subr.mxu0 0.0
  %1537 = vmatpush1.msra.mxu0 0.0
  %1538 = vmatprep.subr.mxu0 0.0
  %1539 = vmatpush1.msra.mxu0 0.0
  %1540 = vmatprep.subr.mxu0 0.0
  %1541 = vmatpush1.msra.mxu0 0.0
  %1542 = vmatprep.subr.mxu0 0.0
  %1543 = vmatpush1.msra.mxu0 0.0
  %1544 = vmatprep.subr.mxu0 0.0
  %1545 = vmatpush1.msra.mxu0 0.0
  %1546 = vmatprep.subr.mxu0 0.0
  %1547 = vmatpush1.msra.mxu0 0.0
  %1548 = vmatprep.subr.mxu0 0.0
  %1549 = vmatpush1.msra.mxu0 0.0
  %1550 = vmatprep.subr.mxu0 0.0
  %1551 = vmatpush1.msra.mxu0 0.0
  %1552 = vmatprep.subr.mxu0 0.0
  %1553 = vmatpush1.msra.mxu0 0.0
  %1554 = vmatprep.subr.mxu0 0.0
  %1555 = vmatpush1.msra.mxu0 0.0
  %1556 = vmatprep.subr.mxu0 0.0
  %1557 = vmatpush1.msra.mxu0 0.0
  %1558 = vmatprep.subr.mxu0 0.0
  %1559 = vmatpush1.msra.mxu0 0.0
  %1560 = vmatprep.subr.mxu0 0.0
  %1561 = vmatpush1.msra.mxu0 0.0
  %1562 = vmatprep.mubr.f32.mxu0 0.0
  %1563 = vmatmul.mubr.f32.gmra.mrb[0].mxu0 %v1496
  %v1564 = vpop.f32.mrb[0].mxu0
  %v1565 = vadd.f32 %v1492, %v1564
  %v1566 = vpop.f32.mrb[0].mxu0
  %1567 = vdwg.mxu0
  %v1568 = vadd.f32 %v1565, %v203
  %v1569 = vtanh.pop %v1568
  %v1571 = vsel %vm213, %v1569, 0
  %1573 = vmatprep.subr.mxu0 0.0
  %1574 = vmatpush1.msra.mxu0 %v33
  %1575 = vmatprep.subr.mxu0 0.0
  %1576 = vmatpush1.msra.mxu0 %v34
  %1577 = vmatprep.subr.mxu0 0.0
  %1578 = vmatpush1.msra.mxu0 %v35
  %1579 = vmatprep.subr.mxu0 0.0
  %1580 = vmatpush1.msra.mxu0 %v36
  %1581 = vmatprep.subr.mxu0 0.0
  %1582 = vmatpush1.msra.mxu0 0.0
  %1583 = vmatprep.subr.mxu0 0.0
  %1584 = vmatpush1.msra.mxu0 0.0
  %1585 = vmatprep.subr.mxu0 0.0
  %1586 = vmatpush1.msra.mxu0 0.0
  %1587 = vmatprep.subr.mxu0 0.0
  %1588 = vmatpush1.msra.mxu0 0.0
  %1589 = vmatprep.subr.mxu0 0.0
  %1590 = vmatpush1.msra.mxu0 0.0
  %1591 = vmatprep.subr.mxu0 0.0
  %1592 = vmatpush1.msra.mxu0 0.0
  %1593 = vmatprep.subr.mxu0 0.0
  %1594 = vmatpush1.msra.mxu0 0.0
  %1595 = vmatprep.subr.mxu0 0.0
  %1596 = vmatpush1.msra.mxu0 0.0
  %1597 = vmatprep.subr.mxu0 0.0
  %1598 = vmatpush1.msra.mxu0 0.0
  %1599 = vmatprep.subr.mxu0 0.0
  %1600 = vmatpush1.msra.mxu0 0.0
  %1601 = vmatprep.subr.mxu0 0.0
  %1602 = vmatpush1.msra.mxu0 0.0
  %1603 = vmatprep.subr.mxu0 0.0
  %1604 = vmatpush1.msra.mxu0 0.0
  %1605 = vmatprep.subr.mxu0 0.0
  %1606 = vmatpush1.msra.mxu0 0.0
  %1607 = vmatprep.subr.mxu0 0.0
  %1608 = vmatpush1.msra.mxu0 0.0
  %1609 = vmatprep.subr.mxu0 0.0
  %1610 = vmatpush1.msra.mxu0 0.0
  %1611 = vmatprep.subr.mxu0 0.0
  %1612 = vmatpush1.msra.mxu0 0.0
  %1613 = vmatprep.subr.mxu0 0.0
  %1614 = vmatpush1.msra.mxu0 0.0
  %1615 = vmatprep.subr.mxu0 0.0
  %1616 = vmatpush1.msra.mxu0 0.0
  %1617 = vmatprep.subr.mxu0 0.0
  %1618 = vmatpush1.msra.mxu0 0.0
  %1619 = vmatprep.subr.mxu0 0.0
  %1620 = vmatpush1.msra.mxu0 0.0
  %1621 = vmatprep.subr.mxu0 0.0
  %1622 = vmatpush1.msra.mxu0 0.0
  %1623 = vmatprep.subr.mxu0 0.0
  %1624 = vmatpush1.msra.mxu0 0.0
  %1625 = vmatprep.subr.mxu0 0.0
  %1626 = vmatpush1.msra.mxu0 0.0
  %1627 = vmatprep.subr.mxu0 0.0
  %1628 = vmatpush1.msra.mxu0 0.0
  %1629 = vmatprep.subr.mxu0 0.0
  %1630 = vmatpush1.msra.mxu0 0.0
  %1631 = vmatprep.subr.mxu0 0.0
  %1632 = vmatpush1.msra.mxu0 0.0
  %1633 = vmatprep.subr.mxu0 0.0
  %1634 = vmatpush1.msra.mxu0 0.0
  %1635 = vmatprep.subr.mxu0 0.0
  %1636 = vmatpush1.msra.mxu0 0.0
  %1637 = vmatprep.mubr.f32.mxu0 0.0
  %1638 = vmatmul.mubr.f32.gmra.mrb[0].mxu0 %v1571
  %v1639 = vpop.f32.mrb[0].mxu0
  %v1640 = vadd.f32 %v211, %v1639
  %v1641 = vpop.f32.mrb[0].mxu0
  %1642 = vdwg.mxu0
  %s1643 = scalar_lea.vmem %s7, 14
  %1644 = vst.msk [vmem:[%s1643] sm:$0x3] %vm39, %v1640
  // Predicated region
  $region30: #{object_animation_forward.6} parent=0 // pred_check
    _
  $region31: #{object_animation_forward.6} parent=0 // pred_check_branch
    %1646 = sbr.rel (0) target = $region33
  $region32: #{object_animation_forward.6} parent=0 // pred_region
    _
  $region33: #{object_animation_forward.6} parent=0 // pred_fallthru
    _
  // Predicated region
  $region34: #{object_animation_forward.6} parent=0 // pred_check
    _
  $region35: #{object_animation_forward.6} parent=0 // pred_check_branch
    %1648 = sbr.rel (0) target = $region37
  $region36: #{object_animation_forward.6} parent=0 // pred_region
    _
  $region37: #{object_animation_forward.6} parent=0 // pred_fallthru
    _

// kernel: object_animation_forward.5
$region0: #{object_animation_forward.5}
  #allocation0 [shape = 'u32[]', space=smem, size = 0x4, offset = 0x4, fixed_abs, tag = 'smem constant byte address 0x4 - core index']
  #allocation1 [shape = 'u32[144,128]{1,0:T(1,128)}', space=vmem, size = 0x12000, scoped, tag = 'internal scratch']
  %s0 = inlined_call_operand.vmem [shape: f32[16,14], index: 0, kind: input, shape index: {}]
  %s1 = inlined_call_operand.vmem [shape: f32[16,8], index: 1, kind: input, shape index: {}]
  %s2 = inlined_call_operand.vmem [shape: f32[16,8], index: 2, kind: input, shape index: {}]
  %s3 = inlined_call_operand.vmem [shape: f32[16,4], index: 3, kind: input, shape index: {}]
  %s4 = inlined_call_operand.vmem [shape: f32[16,1], index: 4, kind: input, shape index: {}]
  %s5 = inlined_call_operand.vmem [shape: f32[4,8], index: 5, kind: input, shape index: {}, may-alias: {5,19}]
  %s6 = inlined_call_operand.vmem [shape: f32[14,32], index: 6, kind: input, shape index: {}]
  %s7 = inlined_call_operand.vmem [shape: f32[1,32], index: 7, kind: input, shape index: {}]
  %s8 = inlined_call_operand.vmem [shape: f32[32,16], index: 8, kind: input, shape index: {}]
  %s9 = inlined_call_operand.vmem [shape: f32[1,16], index: 9, kind: input, shape index: {}]
  %s10 = inlined_call_operand.vmem [shape: f32[8,32], index: 10, kind: input, shape index: {}]
  %s11 = inlined_call_operand.vmem [shape: f32[8,32], index: 11, kind: input, shape index: {}]
  %s12 = inlined_call_operand.vmem [shape: f32[1,32], index: 12, kind: input, shape index: {}]
  %s13 = inlined_call_operand.vmem [shape: f32[32,16], index: 13, kind: input, shape index: {}]
  %s14 = inlined_call_operand.vmem [shape: f32[1,16], index: 14, kind: input, shape index: {}]
  %s15 = inlined_call_operand.vmem [shape: f32[8,32], index: 15, kind: input, shape index: {}]
  %s16 = inlined_call_operand.vmem [shape: f32[1,32], index: 16, kind: input, shape index: {}]
  %s17 = inlined_call_operand.vmem [shape: f32[32,4], index: 17, kind: input, shape index: {}]
  %s18 = inlined_call_operand.vmem [shape: f32[1,4], index: 18, kind: input, shape index: {}]
  %s19 = inlined_call_operand.vmem [shape: f32[4,8], index: 19, kind: output, shape index: {0}, may-alias: {5,19}]
  %s20 = inlined_call_operand.vmem [shape: f32[16,128], index: 20, kind: output, shape index: {1}]
  %21 = xla_tuple %s19, %s20
  %s22 = sld [smem:[#allocation0]]
  $region94: #{object_animation_forward.5} parent=0
    _
  %s24 = ssub.s32 1, %s22
  %s25 = scalar_select 0, %s24, %s22
  // Predicated region
  $region2: #{object_animation_forward.5} parent=0 // pred_check
    _
  $region3: #{object_animation_forward.5} parent=0 // pred_check_branch
    %27 = sbr.rel (0) target = $region5
  $region4: #{object_animation_forward.5} parent=0 // pred_region
    _
  $region5: #{object_animation_forward.5} parent=0 // pred_fallthru
    _
  // Predicated region
  $region6: #{object_animation_forward.5} parent=0 // pred_check
    _
  $region7: #{object_animation_forward.5} parent=0 // pred_check_branch
    %29 = sbr.rel (0) target = $region9
  $region8: #{object_animation_forward.5} parent=0 // pred_region
    _
  $region9: #{object_animation_forward.5} parent=0 // pred_fallthru
    _
  // Predicated region
  $region10: #{object_animation_forward.5} parent=0 // pred_check
    _
  $region11: #{object_animation_forward.5} parent=0 // pred_check_branch
    %31 = sbr.rel (0) target = $region13
  $region12: #{object_animation_forward.5} parent=0 // pred_region
    _
  $region13: #{object_animation_forward.5} parent=0 // pred_fallthru
    _
  // Predicated region
  $region14: #{object_animation_forward.5} parent=0 // pred_check
    _
  $region15: #{object_animation_forward.5} parent=0 // pred_check_branch
    %33 = sbr.rel (0) target = $region17
  $region16: #{object_animation_forward.5} parent=0 // pred_region
    _
  $region17: #{object_animation_forward.5} parent=0 // pred_fallthru
    _
  // Predicated region
  $region18: #{object_animation_forward.5} parent=0 // pred_check
    _
  $region19: #{object_animation_forward.5} parent=0 // pred_check_branch
    %35 = sbr.rel (0) target = $region21
  $region20: #{object_animation_forward.5} parent=0 // pred_region
    _
  $region21: #{object_animation_forward.5} parent=0 // pred_fallthru
    _
  // Predicated region
  $region22: #{object_animation_forward.5} parent=0 // pred_check
    _
  $region23: #{object_animation_forward.5} parent=0 // pred_check_branch
    %37 = sbr.rel (0) target = $region25
  $region24: #{object_animation_forward.5} parent=0 // pred_region
    _
  $region25: #{object_animation_forward.5} parent=0 // pred_fallthru
    _
  // Predicated region
  $region26: #{object_animation_forward.5} parent=0 // pred_check
    _
  $region27: #{object_animation_forward.5} parent=0 // pred_check_branch
    %39 = sbr.rel (0) target = $region29
  $region28: #{object_animation_forward.5} parent=0 // pred_region
    _
  $region29: #{object_animation_forward.5} parent=0 // pred_fallthru
    _
  // Predicated region
  $region30: #{object_animation_forward.5} parent=0 // pred_check
    _
  $region31: #{object_animation_forward.5} parent=0 // pred_check_branch
    %41 = sbr.rel (0) target = $region33
  $region32: #{object_animation_forward.5} parent=0 // pred_region
    _
  $region33: #{object_animation_forward.5} parent=0 // pred_fallthru
    _
  // Predicated region
  $region34: #{object_animation_forward.5} parent=0 // pred_check
    _
  $region35: #{object_animation_forward.5} parent=0 // pred_check_branch
    %43 = sbr.rel (0) target = $region37
  $region36: #{object_animation_forward.5} parent=0 // pred_region
    _
  $region37: #{object_animation_forward.5} parent=0 // pred_fallthru
    _
  // Predicated region
  $region38: #{object_animation_forward.5} parent=0 // pred_check
    _
  $region39: #{object_animation_forward.5} parent=0 // pred_check_branch
    %45 = sbr.rel (0) target = $region41
  $region40: #{object_animation_forward.5} parent=0 // pred_region
    _
  $region41: #{object_animation_forward.5} parent=0 // pred_fallthru
    _
  // Predicated region
  $region42: #{object_animation_forward.5} parent=0 // pred_check
    _
  $region43: #{object_animation_forward.5} parent=0 // pred_check_branch
    %47 = sbr.rel (0) target = $region45
  $region44: #{object_animation_forward.5} parent=0 // pred_region
    _
  $region45: #{object_animation_forward.5} parent=0 // pred_fallthru
    _
  // Predicated region
  $region46: #{object_animation_forward.5} parent=0 // pred_check
    _
  $region47: #{object_animation_forward.5} parent=0 // pred_check_branch
    %49 = sbr.rel (0) target = $region49
  $region48: #{object_animation_forward.5} parent=0 // pred_region
    _
  $region49: #{object_animation_forward.5} parent=0 // pred_fallthru
    _
  // Predicated region
  $region50: #{object_animation_forward.5} parent=0 // pred_check
    _
  $region51: #{object_animation_forward.5} parent=0 // pred_check_branch
    %51 = sbr.rel (0) target = $region53
  $region52: #{object_animation_forward.5} parent=0 // pred_region
    _
  $region53: #{object_animation_forward.5} parent=0 // pred_fallthru
    _
  // Predicated region
  $region54: #{object_animation_forward.5} parent=0 // pred_check
    _
  $region55: #{object_animation_forward.5} parent=0 // pred_check_branch
    %53 = sbr.rel (0) target = $region57
  $region56: #{object_animation_forward.5} parent=0 // pred_region
    _
  $region57: #{object_animation_forward.5} parent=0 // pred_fallthru
    _
  // Predicated region
  $region58: #{object_animation_forward.5} parent=0 // pred_check
    _
  $region59: #{object_animation_forward.5} parent=0 // pred_check_branch
    %55 = sbr.rel (0) target = $region61
  $region60: #{object_animation_forward.5} parent=0 // pred_region
    _
  $region61: #{object_animation_forward.5} parent=0 // pred_fallthru
    _
  // Predicated region
  $region62: #{object_animation_forward.5} parent=0 // pred_check
    _
  $region63: #{object_animation_forward.5} parent=0 // pred_check_branch
    %57 = sbr.rel (0) target = $region65
  $region64: #{object_animation_forward.5} parent=0 // pred_region
    _
  $region65: #{object_animation_forward.5} parent=0 // pred_fallthru
    _
  // Predicated region
  $region66: #{object_animation_forward.5} parent=0 // pred_check
    _
  $region67: #{object_animation_forward.5} parent=0 // pred_check_branch
    %59 = sbr.rel (0) target = $region69
  $region68: #{object_animation_forward.5} parent=0 // pred_region
    _
  $region69: #{object_animation_forward.5} parent=0 // pred_fallthru
    _
  // Predicated region
  $region70: #{object_animation_forward.5} parent=0 // pred_check
    _
  $region71: #{object_animation_forward.5} parent=0 // pred_check_branch
    %61 = sbr.rel (0) target = $region73
  $region72: #{object_animation_forward.5} parent=0 // pred_region
    _
  $region73: #{object_animation_forward.5} parent=0 // pred_fallthru
    _
  // Predicated region
  $region74: #{object_animation_forward.5} parent=0 // pred_check
    _
  $region75: #{object_animation_forward.5} parent=0 // pred_check_branch
    %63 = sbr.rel (0) target = $region77
  $region76: #{object_animation_forward.5} parent=0 // pred_region
    _
  $region77: #{object_animation_forward.5} parent=0 // pred_fallthru
    _
  %v64 = vld [vmem:[%s0] sm:$0xff]
  %v65 = vld [vmem:[%s0 + $0x8] sm:$0xff]
  %v66 = vld [vmem:[%s1] sm:$0xff]
  %v67 = vld [vmem:[%s1 + $0x8] sm:$0xff]
  %v68 = vld [vmem:[%s2] sm:$0xff]
  %v69 = vld [vmem:[%s2 + $0x8] sm:$0xff]
  %v70 = vld [vmem:[%s3] sm:$0xff]
  %v71 = vld [vmem:[%s3 + $0x8] sm:$0xff]
  %v72 = vld [vmem:[%s6] sm:$0xff]
  %v73 = vld [vmem:[%s6 + $0x8] sm:$0x3f]
  %v74 = vld [vmem:[%s7] sm:$0x1]
  %v75 = vld [vmem:[%s8] sm:$0xff]
  %v76 = vld [vmem:[%s8 + $0x8] sm:$0xff]
  %v77 = vld [vmem:[%s8 + $0x10] sm:$0xff]
  %v78 = vld [vmem:[%s8 + $0x18] sm:$0xff]
  %v79 = vld [vmem:[%s9] sm:$0x1]
  %v80 = vld [vmem:[%s10] sm:$0xff]
  %v81 = vld [vmem:[%s11] sm:$0xff]
  %v82 = vld [vmem:[%s12] sm:$0x1]
  %v83 = vld [vmem:[%s13] sm:$0xff]
  %v84 = vld [vmem:[%s13 + $0x8] sm:$0xff]
  %v85 = vld [vmem:[%s13 + $0x10] sm:$0xff]
  %v86 = vld [vmem:[%s13 + $0x18] sm:$0xff]
  %v87 = vld [vmem:[%s14] sm:$0x1]
  %v88 = vld [vmem:[%s15] sm:$0xff]
  %v89 = vld [vmem:[%s16] sm:$0x1]
  %v90 = vld [vmem:[%s17] sm:$0xff]
  %v91 = vld [vmem:[%s17 + $0x8] sm:$0xff]
  %v92 = vld [vmem:[%s17 + $0x10] sm:$0xff]
  %v93 = vld [vmem:[%s17 + $0x18] sm:$0xff]
  %v94 = vld [vmem:[%s18] sm:$0x1]
  %v96 = vlaneseq
  %v97 = vshrl.u32 %v96, 7
  %v98 = vsub.s32 0, %v97
  %v99 = vrot.slane %v74, %v98
  %vm101 = vcmask 113664
  %v103 = vsel %vm101, %v64, 0
  %v106 = vsel %vm101, %v65, 0
  %vm108 = vcmask 1045504
  %v110 = vsel %vm108, %v73, 0
  %112 = vmatprep.subr.mxu0 0.0
  %113 = vmatpush1.msra.mxu0 %v72
  %114 = vmatprep.subr.mxu0 0.0
  %115 = vmatpush1.msra.mxu0 %v110
  %116 = vmatprep.subr.mxu0 0.0
  %117 = vmatpush1.msra.mxu0 0.0
  %118 = vmatprep.subr.mxu0 0.0
  %119 = vmatpush1.msra.mxu0 0.0
  %120 = vmatprep.subr.mxu0 0.0
  %121 = vmatpush1.msra.mxu0 0.0
  %122 = vmatprep.subr.mxu0 0.0
  %123 = vmatpush1.msra.mxu0 0.0
  %124 = vmatprep.subr.mxu0 0.0
  %125 = vmatpush1.msra.mxu0 0.0
  %126 = vmatprep.subr.mxu0 0.0
  %127 = vmatpush1.msra.mxu0 0.0
  %128 = vmatprep.subr.mxu0 0.0
  %129 = vmatpush1.msra.mxu0 0.0
  %130 = vmatprep.subr.mxu0 0.0
  %131 = vmatpush1.msra.mxu0 0.0
  %132 = vmatprep.subr.mxu0 0.0
  %133 = vmatpush1.msra.mxu0 0.0
  %134 = vmatprep.subr.mxu0 0.0
  %135 = vmatpush1.msra.mxu0 0.0
  %136 = vmatprep.subr.mxu0 0.0
  %137 = vmatpush1.msra.mxu0 0.0
  %138 = vmatprep.subr.mxu0 0.0
  %139 = vmatpush1.msra.mxu0 0.0
  %140 = vmatprep.subr.mxu0 0.0
  %141 = vmatpush1.msra.mxu0 0.0
  %142 = vmatprep.subr.mxu0 0.0
  %143 = vmatpush1.msra.mxu0 0.0
  %144 = vmatprep.subr.mxu0 0.0
  %145 = vmatpush1.msra.mxu0 0.0
  %146 = vmatprep.subr.mxu0 0.0
  %147 = vmatpush1.msra.mxu0 0.0
  %148 = vmatprep.subr.mxu0 0.0
  %149 = vmatpush1.msra.mxu0 0.0
  %150 = vmatprep.subr.mxu0 0.0
  %151 = vmatpush1.msra.mxu0 0.0
  %152 = vmatprep.subr.mxu0 0.0
  %153 = vmatpush1.msra.mxu0 0.0
  %154 = vmatprep.subr.mxu0 0.0
  %155 = vmatpush1.msra.mxu0 0.0
  %156 = vmatprep.subr.mxu0 0.0
  %157 = vmatpush1.msra.mxu0 0.0
  %158 = vmatprep.subr.mxu0 0.0
  %159 = vmatpush1.msra.mxu0 0.0
  %160 = vmatprep.subr.mxu0 0.0
  %161 = vmatpush1.msra.mxu0 0.0
  %162 = vmatprep.subr.mxu0 0.0
  %163 = vmatpush1.msra.mxu0 0.0
  %164 = vmatprep.subr.mxu0 0.0
  %165 = vmatpush1.msra.mxu0 0.0
  %166 = vmatprep.subr.mxu0 0.0
  %167 = vmatpush1.msra.mxu0 0.0
  %168 = vmatprep.subr.mxu0 0.0
  %169 = vmatpush1.msra.mxu0 0.0
  %170 = vmatprep.subr.mxu0 0.0
  %171 = vmatpush1.msra.mxu0 0.0
  %172 = vmatprep.subr.mxu0 0.0
  %173 = vmatpush1.msra.mxu0 0.0
  %174 = vmatprep.subr.mxu0 0.0
  %175 = vmatpush1.msra.mxu0 0.0
  %176 = vmatprep.mubr.f32.mxu0 0.0
  %177 = vmatmul.mubr.f32.gmra.mrb[0].mxu0 %v103
  %v178 = vpop.f32.mrb[0].mxu0
  %v179 = vadd.f32 %v99, %v178
  %v180 = vpop.f32.mrb[0].mxu0
  %181 = vmatprep.mubr.f32.mxu0 0.0
  %182 = vmatmul.mubr.f32.gmra.mrb[0].mxu0 %v106
  %v183 = vpop.f32.mrb[0].mxu0
  %v184 = vadd.f32 %v99, %v183
  %v185 = vpop.f32.mrb[0].mxu0
  %186 = vdwg.mxu0
  %v187 = vtanh.pop %v179
  %v188 = vtanh.pop %v184
  %v190 = vlaneseq
  %v191 = vshrl.u32 %v190, 7
  %v192 = vsub.s32 0, %v191
  %v193 = vrot.slane %v79, %v192
  %vm195 = vcmask 261120
  %v197 = vsel %vm195, %v187, 0
  %v200 = vsel %vm195, %v188, 0
  %202 = vmatprep.subr.mxu0 0.0
  %203 = vmatpush1.msra.mxu0 %v75
  %204 = vmatprep.subr.mxu0 0.0
  %205 = vmatpush1.msra.mxu0 %v76
  %206 = vmatprep.subr.mxu0 0.0
  %207 = vmatpush1.msra.mxu0 %v77
  %208 = vmatprep.subr.mxu0 0.0
  %209 = vmatpush1.msra.mxu0 %v78
  %210 = vmatprep.subr.mxu0 0.0
  %211 = vmatpush1.msra.mxu0 0.0
  %212 = vmatprep.subr.mxu0 0.0
  %213 = vmatpush1.msra.mxu0 0.0
  %214 = vmatprep.subr.mxu0 0.0
  %215 = vmatpush1.msra.mxu0 0.0
  %216 = vmatprep.subr.mxu0 0.0
  %217 = vmatpush1.msra.mxu0 0.0
  %218 = vmatprep.subr.mxu0 0.0
  %219 = vmatpush1.msra.mxu0 0.0
  %220 = vmatprep.subr.mxu0 0.0
  %221 = vmatpush1.msra.mxu0 0.0
  %222 = vmatprep.subr.mxu0 0.0
  %223 = vmatpush1.msra.mxu0 0.0
  %224 = vmatprep.subr.mxu0 0.0
  %225 = vmatpush1.msra.mxu0 0.0
  %226 = vmatprep.subr.mxu0 0.0
  %227 = vmatpush1.msra.mxu0 0.0
  %228 = vmatprep.subr.mxu0 0.0
  %229 = vmatpush1.msra.mxu0 0.0
  %230 = vmatprep.subr.mxu0 0.0
  %231 = vmatpush1.msra.mxu0 0.0
  %232 = vmatprep.subr.mxu0 0.0
  %233 = vmatpush1.msra.mxu0 0.0
  %234 = vmatprep.subr.mxu0 0.0
  %235 = vmatpush1.msra.mxu0 0.0
  %236 = vmatprep.subr.mxu0 0.0
  %237 = vmatpush1.msra.mxu0 0.0
  %238 = vmatprep.subr.mxu0 0.0
  %239 = vmatpush1.msra.mxu0 0.0
  %240 = vmatprep.subr.mxu0 0.0
  %241 = vmatpush1.msra.mxu0 0.0
  %242 = vmatprep.subr.mxu0 0.0
  %243 = vmatpush1.msra.mxu0 0.0
  %244 = vmatprep.subr.mxu0 0.0
  %245 = vmatpush1.msra.mxu0 0.0
  %246 = vmatprep.subr.mxu0 0.0
  %247 = vmatpush1.msra.mxu0 0.0
  %248 = vmatprep.subr.mxu0 0.0
  %249 = vmatpush1.msra.mxu0 0.0
  %250 = vmatprep.subr.mxu0 0.0
  %251 = vmatpush1.msra.mxu0 0.0
  %252 = vmatprep.subr.mxu0 0.0
  %253 = vmatpush1.msra.mxu0 0.0
  %254 = vmatprep.subr.mxu0 0.0
  %255 = vmatpush1.msra.mxu0 0.0
  %256 = vmatprep.subr.mxu0 0.0
  %257 = vmatpush1.msra.mxu0 0.0
  %258 = vmatprep.subr.mxu0 0.0
  %259 = vmatpush1.msra.mxu0 0.0
  %260 = vmatprep.subr.mxu0 0.0
  %261 = vmatpush1.msra.mxu0 0.0
  %262 = vmatprep.subr.mxu0 0.0
  %263 = vmatpush1.msra.mxu0 0.0
  %264 = vmatprep.subr.mxu0 0.0
  %265 = vmatpush1.msra.mxu0 0.0
  %266 = vmatprep.mubr.f32.mxu0 0.0
  %267 = vmatmul.mubr.f32.gmra.mrb[0].mxu0 %v197
  %v268 = vpop.f32.mrb[0].mxu0
  %v269 = vadd.f32 %v193, %v268
  %v270 = vpop.f32.mrb[0].mxu0
  %271 = vmatprep.mubr.f32.mxu0 0.0
  %272 = vmatmul.mubr.f32.gmra.mrb[0].mxu0 %v200
  %v273 = vpop.f32.mrb[0].mxu0
  %v274 = vadd.f32 %v193, %v273
  %v275 = vpop.f32.mrb[0].mxu0
  %276 = vdwg.mxu0
  %v277 = vmul.f32 %v269, 0.5
  %v278 = vmul.f32 %v274, 0.5
  %v279 = vmul.f32 %v277, 1.442695
  %v280 = vpow.pop %v279
  %v281 = vmul.f32 %v278, 1.442695
  %v282 = vpow.pop %v281
  %285 = vrot.lane.b32.xlu0 %v66, 8
  %v286 = vpop.permute.xlu0 %285
  %287 = vrot.lane.b32.xlu0 %v67, 8
  %v288 = vpop.permute.xlu0 %287
  %v291 = vmul.f32 %v280, %v286
  %v292 = vmul.f32 %v282, %v288
  %295 = vrot.lane.b32.xlu0 %v291, 120
  %v296 = vpop.permute.xlu0 %295
  %297 = vrot.lane.b32.xlu0 %v292, 120
  %v298 = vpop.permute.xlu0 %297
  %v301 = vadd.f32 %v269, %v296
  %v302 = vadd.f32 %v274, %v298
  %v303 = vlaneseq
  %v304 = vshrl.u32 %v303, 7
  %v305 = vadd.s32 %v304, 8
  %v306 = vlaneseq
  %v307 = vand.u32 %v306, 127
  %v308 = vadd.s32 %v304, 1
  %v309 = vadd.s32 %v305, 1
  %vm310 = vcmp.eq.s32.totalorder %v307, %v308
  %vm311 = vcmp.eq.s32.totalorder %v307, %v309
  %v312 = vsel %vm310, 1, 0
  %v313 = vsel %vm311, 1, 0
  %v314 = vcvt.s32.f32 %v312
  %v315 = vcvt.s32.f32 %v313
  %vm316 = vcmask 130048
  %v318 = vsel %vm316, %v314, 0
  %v321 = vsel %vm316, %v315, 0
  %323 = vmatprep.subr.mxu0 0.0
  %324 = vmatpush1.msra.mxu0 %v301
  %325 = vmatprep.subr.mxu0 0.0
  %326 = vmatpush1.msra.mxu0 %v302
  %327 = vmatprep.subr.mxu0 0.0
  %328 = vmatpush1.msra.mxu0 0.0
  %329 = vmatprep.subr.mxu0 0.0
  %330 = vmatpush1.msra.mxu0 0.0
  %331 = vmatprep.subr.mxu0 0.0
  %332 = vmatpush1.msra.mxu0 0.0
  %333 = vmatprep.subr.mxu0 0.0
  %334 = vmatpush1.msra.mxu0 0.0
  %335 = vmatprep.subr.mxu0 0.0
  %336 = vmatpush1.msra.mxu0 0.0
  %337 = vmatprep.subr.mxu0 0.0
  %338 = vmatpush1.msra.mxu0 0.0
  %339 = vmatprep.subr.mxu0 0.0
  %340 = vmatpush1.msra.mxu0 0.0
  %341 = vmatprep.subr.mxu0 0.0
  %342 = vmatpush1.msra.mxu0 0.0
  %343 = vmatprep.subr.mxu0 0.0
  %344 = vmatpush1.msra.mxu0 0.0
  %345 = vmatprep.subr.mxu0 0.0
  %346 = vmatpush1.msra.mxu0 0.0
  %347 = vmatprep.subr.mxu0 0.0
  %348 = vmatpush1.msra.mxu0 0.0
  %349 = vmatprep.subr.mxu0 0.0
  %350 = vmatpush1.msra.mxu0 0.0
  %351 = vmatprep.subr.mxu0 0.0
  %352 = vmatpush1.msra.mxu0 0.0
  %353 = vmatprep.subr.mxu0 0.0
  %354 = vmatpush1.msra.mxu0 0.0
  %355 = vmatprep.subr.mxu0 0.0
  %356 = vmatpush1.msra.mxu0 0.0
  %357 = vmatprep.subr.mxu0 0.0
  %358 = vmatpush1.msra.mxu0 0.0
  %359 = vmatprep.subr.mxu0 0.0
  %360 = vmatpush1.msra.mxu0 0.0
  %361 = vmatprep.subr.mxu0 0.0
  %362 = vmatpush1.msra.mxu0 0.0
  %363 = vmatprep.subr.mxu0 0.0
  %364 = vmatpush1.msra.mxu0 0.0
  %365 = vmatprep.subr.mxu0 0.0
  %366 = vmatpush1.msra.mxu0 0.0
  %367 = vmatprep.subr.mxu0 0.0
  %368 = vmatpush1.msra.mxu0 0.0
  %369 = vmatprep.subr.mxu0 0.0
  %370 = vmatpush1.msra.mxu0 0.0
  %371 = vmatprep.subr.mxu0 0.0
  %372 = vmatpush1.msra.mxu0 0.0
  %373 = vmatprep.subr.mxu0 0.0
  %374 = vmatpush1.msra.mxu0 0.0
  %375 = vmatprep.subr.mxu0 0.0
  %376 = vmatpush1.msra.mxu0 0.0
  %377 = vmatprep.subr.mxu0 0.0
  %378 = vmatpush1.msra.mxu0 0.0
  %379 = vmatprep.subr.mxu0 0.0
  %380 = vmatpush1.msra.mxu0 0.0
  %381 = vmatprep.subr.mxu0 0.0
  %382 = vmatpush1.msra.mxu0 0.0
  %383 = vmatprep.subr.mxu0 0.0
  %384 = vmatpush1.msra.mxu0 0.0
  %385 = vmatprep.subr.mxu0 0.0
  %386 = vmatpush1.msra.mxu0 0.0
  %387 = vmatprep.mubr.f32.mxu0 0.0
  %388 = vmatmul.mubr.f32.gmra.mrb[0].mxu0 %v318
  %v389 = vpop.f32.mrb[0].mxu0
  %v390 = vadd.f32 0.0, %v389
  %v391 = vpop.f32.mrb[0].mxu0
  %392 = vmatprep.mubr.f32.mxu0 0.0
  %393 = vmatmul.mubr.f32.gmra.mrb[0].mxu0 %v321
  %v394 = vpop.f32.mrb[0].mxu0
  %v395 = vadd.f32 0.0, %v394
  %v396 = vpop.f32.mrb[0].mxu0
  %397 = vdwg.mxu0
  %vm398 = vcmask 64512
  %v400 = vsel %vm398, %v390, 0
  %v403 = vsel %vm398, %v395, 0
  %405 = vmatprep.subr.mxu0 0.0
  %406 = vmatpush1.msra.mxu0 %v81
  %407 = vmatprep.subr.mxu0 0.0
  %408 = vmatpush1.msra.mxu0 0.0
  %409 = vmatprep.subr.mxu0 0.0
  %410 = vmatpush1.msra.mxu0 0.0
  %411 = vmatprep.subr.mxu0 0.0
  %412 = vmatpush1.msra.mxu0 0.0
  %413 = vmatprep.subr.mxu0 0.0
  %414 = vmatpush1.msra.mxu0 0.0
  %415 = vmatprep.subr.mxu0 0.0
  %416 = vmatpush1.msra.mxu0 0.0
  %417 = vmatprep.subr.mxu0 0.0
  %418 = vmatpush1.msra.mxu0 0.0
  %419 = vmatprep.subr.mxu0 0.0
  %420 = vmatpush1.msra.mxu0 0.0
  %421 = vmatprep.subr.mxu0 0.0
  %422 = vmatpush1.msra.mxu0 0.0
  %423 = vmatprep.subr.mxu0 0.0
  %424 = vmatpush1.msra.mxu0 0.0
  %425 = vmatprep.subr.mxu0 0.0
  %426 = vmatpush1.msra.mxu0 0.0
  %427 = vmatprep.subr.mxu0 0.0
  %428 = vmatpush1.msra.mxu0 0.0
  %429 = vmatprep.subr.mxu0 0.0
  %430 = vmatpush1.msra.mxu0 0.0
  %431 = vmatprep.subr.mxu0 0.0
  %432 = vmatpush1.msra.mxu0 0.0
  %433 = vmatprep.subr.mxu0 0.0
  %434 = vmatpush1.msra.mxu0 0.0
  %435 = vmatprep.subr.mxu0 0.0
  %436 = vmatpush1.msra.mxu0 0.0
  %437 = vmatprep.subr.mxu0 0.0
  %438 = vmatpush1.msra.mxu0 0.0
  %439 = vmatprep.subr.mxu0 0.0
  %440 = vmatpush1.msra.mxu0 0.0
  %441 = vmatprep.subr.mxu0 0.0
  %442 = vmatpush1.msra.mxu0 0.0
  %443 = vmatprep.subr.mxu0 0.0
  %444 = vmatpush1.msra.mxu0 0.0
  %445 = vmatprep.subr.mxu0 0.0
  %446 = vmatpush1.msra.mxu0 0.0
  %447 = vmatprep.subr.mxu0 0.0
  %448 = vmatpush1.msra.mxu0 0.0
  %449 = vmatprep.subr.mxu0 0.0
  %450 = vmatpush1.msra.mxu0 0.0
  %451 = vmatprep.subr.mxu0 0.0
  %452 = vmatpush1.msra.mxu0 0.0
  %453 = vmatprep.subr.mxu0 0.0
  %454 = vmatpush1.msra.mxu0 0.0
  %455 = vmatprep.subr.mxu0 0.0
  %456 = vmatpush1.msra.mxu0 0.0
  %457 = vmatprep.subr.mxu0 0.0
  %458 = vmatpush1.msra.mxu0 0.0
  %459 = vmatprep.subr.mxu0 0.0
  %460 = vmatpush1.msra.mxu0 0.0
  %461 = vmatprep.subr.mxu0 0.0
  %462 = vmatpush1.msra.mxu0 0.0
  %463 = vmatprep.subr.mxu0 0.0
  %464 = vmatpush1.msra.mxu0 0.0
  %465 = vmatprep.subr.mxu0 0.0
  %466 = vmatpush1.msra.mxu0 0.0
  %467 = vmatprep.subr.mxu0 0.0
  %468 = vmatpush1.msra.mxu0 0.0
  %469 = vmatprep.mubr.f32.mxu0 0.0
  %470 = vmatmul.mubr.f32.gmra.mrb[0].mxu0 %v400
  %v471 = vpop.f32.mrb[0].mxu0
  %v472 = vadd.f32 0.0, %v471
  %v473 = vpop.f32.mrb[0].mxu0
  %474 = vmatprep.mubr.f32.mxu0 0.0
  %475 = vmatmul.mubr.f32.gmra.mrb[0].mxu0 %v403
  %v476 = vpop.f32.mrb[0].mxu0
  %v477 = vadd.f32 0.0, %v476
  %v478 = vpop.f32.mrb[0].mxu0
  %479 = vdwg.mxu0
  %v481 = vsel %vm398, %v301, 0
  %v484 = vsel %vm398, %v302, 0
  %486 = vmatprep.subr.mxu0 0.0
  %487 = vmatpush1.msra.mxu0 %v80
  %488 = vmatprep.subr.mxu0 0.0
  %489 = vmatpush1.msra.mxu0 0.0
  %490 = vmatprep.subr.mxu0 0.0
  %491 = vmatpush1.msra.mxu0 0.0
  %492 = vmatprep.subr.mxu0 0.0
  %493 = vmatpush1.msra.mxu0 0.0
  %494 = vmatprep.subr.mxu0 0.0
  %495 = vmatpush1.msra.mxu0 0.0
  %496 = vmatprep.subr.mxu0 0.0
  %497 = vmatpush1.msra.mxu0 0.0
  %498 = vmatprep.subr.mxu0 0.0
  %499 = vmatpush1.msra.mxu0 0.0
  %500 = vmatprep.subr.mxu0 0.0
  %501 = vmatpush1.msra.mxu0 0.0
  %502 = vmatprep.subr.mxu0 0.0
  %503 = vmatpush1.msra.mxu0 0.0
  %504 = vmatprep.subr.mxu0 0.0
  %505 = vmatpush1.msra.mxu0 0.0
  %506 = vmatprep.subr.mxu0 0.0
  %507 = vmatpush1.msra.mxu0 0.0
  %508 = vmatprep.subr.mxu0 0.0
  %509 = vmatpush1.msra.mxu0 0.0
  %510 = vmatprep.subr.mxu0 0.0
  %511 = vmatpush1.msra.mxu0 0.0
  %512 = vmatprep.subr.mxu0 0.0
  %513 = vmatpush1.msra.mxu0 0.0
  %514 = vmatprep.subr.mxu0 0.0
  %515 = vmatpush1.msra.mxu0 0.0
  %516 = vmatprep.subr.mxu0 0.0
  %517 = vmatpush1.msra.mxu0 0.0
  %518 = vmatprep.subr.mxu0 0.0
  %519 = vmatpush1.msra.mxu0 0.0
  %520 = vmatprep.subr.mxu0 0.0
  %521 = vmatpush1.msra.mxu0 0.0
  %522 = vmatprep.subr.mxu0 0.0
  %523 = vmatpush1.msra.mxu0 0.0
  %524 = vmatprep.subr.mxu0 0.0
  %525 = vmatpush1.msra.mxu0 0.0
  %526 = vmatprep.subr.mxu0 0.0
  %527 = vmatpush1.msra.mxu0 0.0
  %528 = vmatprep.subr.mxu0 0.0
  %529 = vmatpush1.msra.mxu0 0.0
  %530 = vmatprep.subr.mxu0 0.0
  %531 = vmatpush1.msra.mxu0 0.0
  %532 = vmatprep.subr.mxu0 0.0
  %533 = vmatpush1.msra.mxu0 0.0
  %534 = vmatprep.subr.mxu0 0.0
  %535 = vmatpush1.msra.mxu0 0.0
  %536 = vmatprep.subr.mxu0 0.0
  %537 = vmatpush1.msra.mxu0 0.0
  %538 = vmatprep.subr.mxu0 0.0
  %539 = vmatpush1.msra.mxu0 0.0
  %540 = vmatprep.subr.mxu0 0.0
  %541 = vmatpush1.msra.mxu0 0.0
  %542 = vmatprep.subr.mxu0 0.0
  %543 = vmatpush1.msra.mxu0 0.0
  %544 = vmatprep.subr.mxu0 0.0
  %545 = vmatpush1.msra.mxu0 0.0
  %546 = vmatprep.subr.mxu0 0.0
  %547 = vmatpush1.msra.mxu0 0.0
  %548 = vmatprep.subr.mxu0 0.0
  %549 = vmatpush1.msra.mxu0 0.0
  %550 = vmatprep.mubr.f32.mxu0 0.0
  %551 = vmatmul.mubr.f32.gmra.mrb[0].mxu0 %v481
  %v552 = vpop.f32.mrb[0].mxu0
  %v553 = vadd.f32 %v472, %v552
  %v554 = vpop.f32.mrb[0].mxu0
  %555 = vmatprep.mubr.f32.mxu0 0.0
  %556 = vmatmul.mubr.f32.gmra.mrb[0].mxu0 %v484
  %v557 = vpop.f32.mrb[0].mxu0
  %v558 = vadd.f32 %v477, %v557
  %v559 = vpop.f32.mrb[0].mxu0
  %560 = vdwg.mxu0
  %v562 = vlaneseq
  %v563 = vshrl.u32 %v562, 7
  %v564 = vsub.s32 0, %v563
  %v565 = vrot.slane %v82, %v564
  %v567 = vadd.f32 %v553, %v565
  %v568 = vadd.f32 %v558, %v565
  %v569 = vtanh.pop %v567
  %v570 = vtanh.pop %v568
  %v572 = vlaneseq
  %v573 = vshrl.u32 %v572, 7
  %v574 = vsub.s32 0, %v573
  %v575 = vrot.slane %v87, %v574
  %v578 = vsel %vm195, %v569, 0
  %v581 = vsel %vm195, %v570, 0
  %583 = vmatprep.subr.mxu0 0.0
  %584 = vmatpush1.msra.mxu0 %v83
  %585 = vmatprep.subr.mxu0 0.0
  %586 = vmatpush1.msra.mxu0 %v84
  %587 = vmatprep.subr.mxu0 0.0
  %588 = vmatpush1.msra.mxu0 %v85
  %589 = vmatprep.subr.mxu0 0.0
  %590 = vmatpush1.msra.mxu0 %v86
  %591 = vmatprep.subr.mxu0 0.0
  %592 = vmatpush1.msra.mxu0 0.0
  %593 = vmatprep.subr.mxu0 0.0
  %594 = vmatpush1.msra.mxu0 0.0
  %595 = vmatprep.subr.mxu0 0.0
  %596 = vmatpush1.msra.mxu0 0.0
  %597 = vmatprep.subr.mxu0 0.0
  %598 = vmatpush1.msra.mxu0 0.0
  %599 = vmatprep.subr.mxu0 0.0
  %600 = vmatpush1.msra.mxu0 0.0
  %601 = vmatprep.subr.mxu0 0.0
  %602 = vmatpush1.msra.mxu0 0.0
  %603 = vmatprep.subr.mxu0 0.0
  %604 = vmatpush1.msra.mxu0 0.0
  %605 = vmatprep.subr.mxu0 0.0
  %606 = vmatpush1.msra.mxu0 0.0
  %607 = vmatprep.subr.mxu0 0.0
  %608 = vmatpush1.msra.mxu0 0.0
  %609 = vmatprep.subr.mxu0 0.0
  %610 = vmatpush1.msra.mxu0 0.0
  %611 = vmatprep.subr.mxu0 0.0
  %612 = vmatpush1.msra.mxu0 0.0
  %613 = vmatprep.subr.mxu0 0.0
  %614 = vmatpush1.msra.mxu0 0.0
  %615 = vmatprep.subr.mxu0 0.0
  %616 = vmatpush1.msra.mxu0 0.0
  %617 = vmatprep.subr.mxu0 0.0
  %618 = vmatpush1.msra.mxu0 0.0
  %619 = vmatprep.subr.mxu0 0.0
  %620 = vmatpush1.msra.mxu0 0.0
  %621 = vmatprep.subr.mxu0 0.0
  %622 = vmatpush1.msra.mxu0 0.0
  %623 = vmatprep.subr.mxu0 0.0
  %624 = vmatpush1.msra.mxu0 0.0
  %625 = vmatprep.subr.mxu0 0.0
  %626 = vmatpush1.msra.mxu0 0.0
  %627 = vmatprep.subr.mxu0 0.0
  %628 = vmatpush1.msra.mxu0 0.0
  %629 = vmatprep.subr.mxu0 0.0
  %630 = vmatpush1.msra.mxu0 0.0
  %631 = vmatprep.subr.mxu0 0.0
  %632 = vmatpush1.msra.mxu0 0.0
  %633 = vmatprep.subr.mxu0 0.0
  %634 = vmatpush1.msra.mxu0 0.0
  %635 = vmatprep.subr.mxu0 0.0
  %636 = vmatpush1.msra.mxu0 0.0
  %637 = vmatprep.subr.mxu0 0.0
  %638 = vmatpush1.msra.mxu0 0.0
  %639 = vmatprep.subr.mxu0 0.0
  %640 = vmatpush1.msra.mxu0 0.0
  %641 = vmatprep.subr.mxu0 0.0
  %642 = vmatpush1.msra.mxu0 0.0
  %643 = vmatprep.subr.mxu0 0.0
  %644 = vmatpush1.msra.mxu0 0.0
  %645 = vmatprep.subr.mxu0 0.0
  %646 = vmatpush1.msra.mxu0 0.0
  %647 = vmatprep.mubr.f32.mxu0 0.0
  %648 = vmatmul.mubr.f32.gmra.mrb[0].mxu0 %v578
  %v649 = vpop.f32.mrb[0].mxu0
  %v650 = vadd.f32 %v575, %v649
  %v651 = vpop.f32.mrb[0].mxu0
  %652 = vmatprep.mubr.f32.mxu0 0.0
  %653 = vmatmul.mubr.f32.gmra.mrb[0].mxu0 %v581
  %v654 = vpop.f32.mrb[0].mxu0
  %v655 = vadd.f32 %v575, %v654
  %v656 = vpop.f32.mrb[0].mxu0
  %657 = vdwg.mxu0
  %v658 = vmul.f32 %v650, 0.5
  %v659 = vmul.f32 %v655, 0.5
  %v660 = vmul.f32 %v658, 1.442695
  %v661 = vpow.pop %v660
  %v662 = vmul.f32 %v659, 1.442695
  %v663 = vpow.pop %v662
  %666 = vrot.lane.b32.xlu0 %v68, 8
  %v667 = vpop.permute.xlu0 %666
  %668 = vrot.lane.b32.xlu0 %v69, 8
  %v669 = vpop.permute.xlu0 %668
  %v672 = vmul.f32 %v661, %v667
  %v673 = vmul.f32 %v663, %v669
  %676 = vrot.lane.b32.xlu0 %v672, 120
  %v677 = vpop.permute.xlu0 %676
  %678 = vrot.lane.b32.xlu0 %v673, 120
  %v679 = vpop.permute.xlu0 %678
  %v682 = vadd.f32 %v650, %v677
  %v683 = vadd.f32 %v655, %v679
  %v685 = vlaneseq
  %v686 = vshrl.u32 %v685, 7
  %v687 = vsub.s32 0, %v686
  %v688 = vrot.slane %v89, %v687
  %v691 = vsel %vm398, %v682, 0
  %v694 = vsel %vm398, %v683, 0
  %696 = vmatprep.subr.mxu0 0.0
  %697 = vmatpush1.msra.mxu0 %v88
  %698 = vmatprep.subr.mxu0 0.0
  %699 = vmatpush1.msra.mxu0 0.0
  %700 = vmatprep.subr.mxu0 0.0
  %701 = vmatpush1.msra.mxu0 0.0
  %702 = vmatprep.subr.mxu0 0.0
  %703 = vmatpush1.msra.mxu0 0.0
  %704 = vmatprep.subr.mxu0 0.0
  %705 = vmatpush1.msra.mxu0 0.0
  %706 = vmatprep.subr.mxu0 0.0
  %707 = vmatpush1.msra.mxu0 0.0
  %708 = vmatprep.subr.mxu0 0.0
  %709 = vmatpush1.msra.mxu0 0.0
  %710 = vmatprep.subr.mxu0 0.0
  %711 = vmatpush1.msra.mxu0 0.0
  %712 = vmatprep.subr.mxu0 0.0
  %713 = vmatpush1.msra.mxu0 0.0
  %714 = vmatprep.subr.mxu0 0.0
  %715 = vmatpush1.msra.mxu0 0.0
  %716 = vmatprep.subr.mxu0 0.0
  %717 = vmatpush1.msra.mxu0 0.0
  %718 = vmatprep.subr.mxu0 0.0
  %719 = vmatpush1.msra.mxu0 0.0
  %720 = vmatprep.subr.mxu0 0.0
  %721 = vmatpush1.msra.mxu0 0.0
  %722 = vmatprep.subr.mxu0 0.0
  %723 = vmatpush1.msra.mxu0 0.0
  %724 = vmatprep.subr.mxu0 0.0
  %725 = vmatpush1.msra.mxu0 0.0
  %726 = vmatprep.subr.mxu0 0.0
  %727 = vmatpush1.msra.mxu0 0.0
  %728 = vmatprep.subr.mxu0 0.0
  %729 = vmatpush1.msra.mxu0 0.0
  %730 = vmatprep.subr.mxu0 0.0
  %731 = vmatpush1.msra.mxu0 0.0
  %732 = vmatprep.subr.mxu0 0.0
  %733 = vmatpush1.msra.mxu0 0.0
  %734 = vmatprep.subr.mxu0 0.0
  %735 = vmatpush1.msra.mxu0 0.0
  %736 = vmatprep.subr.mxu0 0.0
  %737 = vmatpush1.msra.mxu0 0.0
  %738 = vmatprep.subr.mxu0 0.0
  %739 = vmatpush1.msra.mxu0 0.0
  %740 = vmatprep.subr.mxu0 0.0
  %741 = vmatpush1.msra.mxu0 0.0
  %742 = vmatprep.subr.mxu0 0.0
  %743 = vmatpush1.msra.mxu0 0.0
  %744 = vmatprep.subr.mxu0 0.0
  %745 = vmatpush1.msra.mxu0 0.0
  %746 = vmatprep.subr.mxu0 0.0
  %747 = vmatpush1.msra.mxu0 0.0
  %748 = vmatprep.subr.mxu0 0.0
  %749 = vmatpush1.msra.mxu0 0.0
  %750 = vmatprep.subr.mxu0 0.0
  %751 = vmatpush1.msra.mxu0 0.0
  %752 = vmatprep.subr.mxu0 0.0
  %753 = vmatpush1.msra.mxu0 0.0
  %754 = vmatprep.subr.mxu0 0.0
  %755 = vmatpush1.msra.mxu0 0.0
  %756 = vmatprep.subr.mxu0 0.0
  %757 = vmatpush1.msra.mxu0 0.0
  %758 = vmatprep.subr.mxu0 0.0
  %759 = vmatpush1.msra.mxu0 0.0
  %760 = vmatprep.mubr.f32.mxu0 0.0
  %761 = vmatmul.mubr.f32.gmra.mrb[0].mxu0 %v691
  %v762 = vpop.f32.mrb[0].mxu0
  %v763 = vadd.f32 %v688, %v762
  %v764 = vpop.f32.mrb[0].mxu0
  %765 = vmatprep.mubr.f32.mxu0 0.0
  %766 = vmatmul.mubr.f32.gmra.mrb[0].mxu0 %v694
  %v767 = vpop.f32.mrb[0].mxu0
  %v768 = vadd.f32 %v688, %v767
  %v769 = vpop.f32.mrb[0].mxu0
  %770 = vdwg.mxu0
  %v771 = vtanh.pop %v763
  %v772 = vtanh.pop %v768
  %v774 = vlaneseq
  %v775 = vshrl.u32 %v774, 7
  %v776 = vsub.s32 0, %v775
  %v777 = vrot.slane %v94, %v776
  %v780 = vsel %vm195, %v771, 0
  %v783 = vsel %vm195, %v772, 0
  %785 = vmatprep.subr.mxu0 0.0
  %786 = vmatpush1.msra.mxu0 %v90
  %787 = vmatprep.subr.mxu0 0.0
  %788 = vmatpush1.msra.mxu0 %v91
  %789 = vmatprep.subr.mxu0 0.0
  %790 = vmatpush1.msra.mxu0 %v92
  %791 = vmatprep.subr.mxu0 0.0
  %792 = vmatpush1.msra.mxu0 %v93
  %793 = vmatprep.subr.mxu0 0.0
  %794 = vmatpush1.msra.mxu0 0.0
  %795 = vmatprep.subr.mxu0 0.0
  %796 = vmatpush1.msra.mxu0 0.0
  %797 = vmatprep.subr.mxu0 0.0
  %798 = vmatpush1.msra.mxu0 0.0
  %799 = vmatprep.subr.mxu0 0.0
  %800 = vmatpush1.msra.mxu0 0.0
  %801 = vmatprep.subr.mxu0 0.0
  %802 = vmatpush1.msra.mxu0 0.0
  %803 = vmatprep.subr.mxu0 0.0
  %804 = vmatpush1.msra.mxu0 0.0
  %805 = vmatprep.subr.mxu0 0.0
  %806 = vmatpush1.msra.mxu0 0.0
  %807 = vmatprep.subr.mxu0 0.0
  %808 = vmatpush1.msra.mxu0 0.0
  %809 = vmatprep.subr.mxu0 0.0
  %810 = vmatpush1.msra.mxu0 0.0
  %811 = vmatprep.subr.mxu0 0.0
  %812 = vmatpush1.msra.mxu0 0.0
  %813 = vmatprep.subr.mxu0 0.0
  %814 = vmatpush1.msra.mxu0 0.0
  %815 = vmatprep.subr.mxu0 0.0
  %816 = vmatpush1.msra.mxu0 0.0
  %817 = vmatprep.subr.mxu0 0.0
  %818 = vmatpush1.msra.mxu0 0.0
  %819 = vmatprep.subr.mxu0 0.0
  %820 = vmatpush1.msra.mxu0 0.0
  %821 = vmatprep.subr.mxu0 0.0
  %822 = vmatpush1.msra.mxu0 0.0
  %823 = vmatprep.subr.mxu0 0.0
  %824 = vmatpush1.msra.mxu0 0.0
  %825 = vmatprep.subr.mxu0 0.0
  %826 = vmatpush1.msra.mxu0 0.0
  %827 = vmatprep.subr.mxu0 0.0
  %828 = vmatpush1.msra.mxu0 0.0
  %829 = vmatprep.subr.mxu0 0.0
  %830 = vmatpush1.msra.mxu0 0.0
  %831 = vmatprep.subr.mxu0 0.0
  %832 = vmatpush1.msra.mxu0 0.0
  %833 = vmatprep.subr.mxu0 0.0
  %834 = vmatpush1.msra.mxu0 0.0
  %835 = vmatprep.subr.mxu0 0.0
  %836 = vmatpush1.msra.mxu0 0.0
  %837 = vmatprep.subr.mxu0 0.0
  %838 = vmatpush1.msra.mxu0 0.0
  %839 = vmatprep.subr.mxu0 0.0
  %840 = vmatpush1.msra.mxu0 0.0
  %841 = vmatprep.subr.mxu0 0.0
  %842 = vmatpush1.msra.mxu0 0.0
  %843 = vmatprep.subr.mxu0 0.0
  %844 = vmatpush1.msra.mxu0 0.0
  %845 = vmatprep.subr.mxu0 0.0
  %846 = vmatpush1.msra.mxu0 0.0
  %847 = vmatprep.subr.mxu0 0.0
  %848 = vmatpush1.msra.mxu0 0.0
  %849 = vmatprep.mubr.f32.mxu0 0.0
  %850 = vmatmul.mubr.f32.gmra.mrb[0].mxu0 %v780
  %v851 = vpop.f32.mrb[0].mxu0
  %v852 = vadd.f32 %v777, %v851
  %v853 = vpop.f32.mrb[0].mxu0
  %854 = vmatprep.mubr.f32.mxu0 0.0
  %855 = vmatmul.mubr.f32.gmra.mrb[0].mxu0 %v783
  %v856 = vpop.f32.mrb[0].mxu0
  %v857 = vadd.f32 %v777, %v856
  %v858 = vpop.f32.mrb[0].mxu0
  %859 = vdwg.mxu0
  %vm860 = vcmask 31744
  %v861 = vsel %vm860, %v852, -inf
  %862 = vmax.xlane.f32.xlu0 %v861
  %v863 = vpop.xlane.xlu0 %862
  %v864 = vsel %vm860, %v857, -inf
  %865 = vmax.xlane.f32.xlu0 %v864
  %v866 = vpop.xlane.xlu0 %865
  %v867 = vsub.f32 %v852, %v863
  %v868 = vsub.f32 %v857, %v866
  %v869 = vmul.f32 %v867, 1.442695
  %v870 = vpow.pop %v869
  %v871 = vmul.f32 %v868, 1.442695
  %v872 = vpow.pop %v871
  %v873 = vsel %vm860, %v870, 0.0
  %874 = vadd.xlane.f32.xlu0 %v873
  %v875 = vpop.xlane.xlu0 %874
  %v876 = vsel %vm860, %v872, 0.0
  %877 = vadd.xlane.f32.xlu0 %v876
  %v878 = vpop.xlane.xlu0 %877
  %v879 = vrcp.pop %v875
  %v880 = vmul.f32 %v870, %v879
  %v881 = vrcp.pop %v878
  %v882 = vmul.f32 %v872, %v881
  %v883 = vlog2.pop %v875
  %v884 = vmul.f32 %v883, 0.6931472
  %v885 = vlog2.pop %v878
  %v886 = vmul.f32 %v885, 0.6931472
  %v887 = vsub.f32 %v867, %v884
  %v888 = vsub.f32 %v868, %v886
  %v889 = vadd.f32 %v887, %v70
  %v890 = vadd.f32 %v888, %v71
  %v891 = vsel %vm860, %v889, -inf
  %892 = vmax.xlane.f32.xlu0 %v891
  %v893 = vpop.xlane.xlu0 %892
  %v894 = vsel %vm860, %v890, -inf
  %895 = vmax.xlane.f32.xlu0 %v894
  %v896 = vpop.xlane.xlu0 %895
  %v897 = vsub.f32 %v889, %v893
  %v898 = vsub.f32 %v890, %v896
  %v899 = vmul.f32 %v897, 1.442695
  %v900 = vpow.pop %v899
  %v901 = vmul.f32 %v898, 1.442695
  %v902 = vpow.pop %v901
  %v903 = vsel %vm860, %v900, 0.0
  %904 = vadd.xlane.f32.xlu0 %v903
  %v905 = vpop.xlane.xlu0 %904
  %v906 = vsel %vm860, %v902, 0.0
  %907 = vadd.xlane.f32.xlu0 %v906
  %v908 = vpop.xlane.xlu0 %907
  %v909 = vrcp.pop %v905
  %v910 = vmul.f32 %v900, %v909
  %v911 = vrcp.pop %v908
  %v912 = vmul.f32 %v902, %v911
  %v913 = vld [vmem:[%s4] sm:$0xff]
  %v914 = vld [vmem:[%s4 + $0x8] sm:$0xff]
  %916 = vset.pattern.permute.xlu0 0
  %917 = vperm.xlu0 %916, %v913
  %v918 = vpop.permute.xlu0 %917
  %921 = vset.pattern.permute.xlu0 0
  %922 = vperm.xlu0 %921, %v914
  %v923 = vpop.permute.xlu0 %922
  %v925 = vmul.f32 %v880, %v918
  %v926 = vmul.f32 %v882, %v923
  %927 = vxpose.xlu0.b32.start [1/16] %v925, 128
  %928 = vxpose.xlu0.b32.cont [2/16] %v926, 128
  %929 = vxpose.xlu0.b32.cont [3/16] 0.0, 128
  %930 = vxpose.xlu0.b32.cont [4/16] 0.0, 128
  %931 = vxpose.xlu0.b32.cont [5/16] 0.0, 128
  %932 = vxpose.xlu0.b32.cont [6/16] 0.0, 128
  %933 = vxpose.xlu0.b32.cont [7/16] 0.0, 128
  %934 = vxpose.xlu0.b32.cont [8/16] 0.0, 128
  %935 = vxpose.xlu0.b32.cont [9/16] 0.0, 128
  %936 = vxpose.xlu0.b32.cont [10/16] 0.0, 128
  %937 = vxpose.xlu0.b32.cont [11/16] 0.0, 128
  %938 = vxpose.xlu0.b32.cont [12/16] 0.0, 128
  %939 = vxpose.xlu0.b32.cont [13/16] 0.0, 128
  %940 = vxpose.xlu0.b32.cont [14/16] 0.0, 128
  %941 = vxpose.xlu0.b32.cont [15/16] 0.0, 128
  %942 = vxpose.xlu0.b32.end [16/16] 0.0, 128
  %v943 = vpop.trf.xlu0
  %v944 = vpop.trf.xlu0
  %v945 = vpop.trf.xlu0
  %v946 = vpop.trf.xlu0
  %v947 = vpop.trf.xlu0
  %v948 = vpop.trf.xlu0
  %v949 = vpop.trf.xlu0
  %v950 = vpop.trf.xlu0
  %v951 = vpop.trf.xlu0
  %v952 = vpop.trf.xlu0
  %v953 = vpop.trf.xlu0
  %v954 = vpop.trf.xlu0
  %v955 = vpop.trf.xlu0
  %v956 = vpop.trf.xlu0
  %v957 = vpop.trf.xlu0
  %v958 = vpop.trf.xlu0
  %v960 = vsel %vm316, %v943, 0
  %962 = vmatprep.subr.mxu0 0.0
  %963 = vmatpush1.msra.mxu0 %v650
  %964 = vmatprep.subr.mxu0 0.0
  %965 = vmatpush1.msra.mxu0 %v655
  %966 = vmatprep.subr.mxu0 0.0
  %967 = vmatpush1.msra.mxu0 0.0
  %968 = vmatprep.subr.mxu0 0.0
  %969 = vmatpush1.msra.mxu0 0.0
  %970 = vmatprep.subr.mxu0 0.0
  %971 = vmatpush1.msra.mxu0 0.0
  %972 = vmatprep.subr.mxu0 0.0
  %973 = vmatpush1.msra.mxu0 0.0
  %974 = vmatprep.subr.mxu0 0.0
  %975 = vmatpush1.msra.mxu0 0.0
  %976 = vmatprep.subr.mxu0 0.0
  %977 = vmatpush1.msra.mxu0 0.0
  %978 = vmatprep.subr.mxu0 0.0
  %979 = vmatpush1.msra.mxu0 0.0
  %980 = vmatprep.subr.mxu0 0.0
  %981 = vmatpush1.msra.mxu0 0.0
  %982 = vmatprep.subr.mxu0 0.0
  %983 = vmatpush1.msra.mxu0 0.0
  %984 = vmatprep.subr.mxu0 0.0
  %985 = vmatpush1.msra.mxu0 0.0
  %986 = vmatprep.subr.mxu0 0.0
  %987 = vmatpush1.msra.mxu0 0.0
  %988 = vmatprep.subr.mxu0 0.0
  %989 = vmatpush1.msra.mxu0 0.0
  %990 = vmatprep.subr.mxu0 0.0
  %991 = vmatpush1.msra.mxu0 0.0
  %992 = vmatprep.subr.mxu0 0.0
  %993 = vmatpush1.msra.mxu0 0.0
  %994 = vmatprep.subr.mxu0 0.0
  %995 = vmatpush1.msra.mxu0 0.0
  %996 = vmatprep.subr.mxu0 0.0
  %997 = vmatpush1.msra.mxu0 0.0
  %998 = vmatprep.subr.mxu0 0.0
  %999 = vmatpush1.msra.mxu0 0.0
  %1000 = vmatprep.subr.mxu0 0.0
  %1001 = vmatpush1.msra.mxu0 0.0
  %1002 = vmatprep.subr.mxu0 0.0
  %1003 = vmatpush1.msra.mxu0 0.0
  %1004 = vmatprep.subr.mxu0 0.0
  %1005 = vmatpush1.msra.mxu0 0.0
  %1006 = vmatprep.subr.mxu0 0.0
  %1007 = vmatpush1.msra.mxu0 0.0
  %1008 = vmatprep.subr.mxu0 0.0
  %1009 = vmatpush1.msra.mxu0 0.0
  %1010 = vmatprep.subr.mxu0 0.0
  %1011 = vmatpush1.msra.mxu0 0.0
  %1012 = vmatprep.subr.mxu0 0.0
  %1013 = vmatpush1.msra.mxu0 0.0
  %1014 = vmatprep.subr.mxu0 0.0
  %1015 = vmatpush1.msra.mxu0 0.0
  %1016 = vmatprep.subr.mxu0 0.0
  %1017 = vmatpush1.msra.mxu0 0.0
  %1018 = vmatprep.subr.mxu0 0.0
  %1019 = vmatpush1.msra.mxu0 0.0
  %1020 = vmatprep.subr.mxu0 0.0
  %1021 = vmatpush1.msra.mxu0 0.0
  %1022 = vmatprep.subr.mxu0 0.0
  %1023 = vmatpush1.msra.mxu0 0.0
  %1024 = vmatprep.subr.mxu0 0.0
  %1025 = vmatpush1.msra.mxu0 0.0
  %1026 = vmatprep.mubr.f32.mxu0 0.0
  %1027 = vmatmul.mubr.f32.gmra.mrb[0].mxu0 %v960
  %v1028 = vpop.f32.mrb[0].mxu0
  %v1029 = vadd.f32 0.0, %v1028
  %v1030 = vpop.f32.mrb[0].mxu0
  %1031 = vdwg.mxu0
  %v1032 = vsel %vm860, %v925, 0.0
  %v1033 = vsel %vm860, %v926, 0.0
  %v1034 = vadd.f32 %v1032, %v1033
  %v1035 = vrot.slane %v1034, 4
  %v1036 = vadd.f32 %v1034, %v1035
  %v1037 = vrot.slane %v1036, 2
  %v1038 = vadd.f32 %v1036, %v1037
  %v1039 = vrot.slane %v1038, 1
  %v1040 = vadd.f32 %v1038, %v1039
  %1041 = vxpose.xlu0.b32.start [1/16] %v1040, 128
  %1042 = vxpose.xlu0.b32.cont [2/16] 0.0, 128
  %1043 = vxpose.xlu0.b32.cont [3/16] 0.0, 128
  %1044 = vxpose.xlu0.b32.cont [4/16] 0.0, 128
  %1045 = vxpose.xlu0.b32.cont [5/16] 0.0, 128
  %1046 = vxpose.xlu0.b32.cont [6/16] 0.0, 128
  %1047 = vxpose.xlu0.b32.cont [7/16] 0.0, 128
  %1048 = vxpose.xlu0.b32.cont [8/16] 0.0, 128
  %1049 = vxpose.xlu0.b32.cont [9/16] 0.0, 128
  %1050 = vxpose.xlu0.b32.cont [10/16] 0.0, 128
  %1051 = vxpose.xlu0.b32.cont [11/16] 0.0, 128
  %1052 = vxpose.xlu0.b32.cont [12/16] 0.0, 128
  %1053 = vxpose.xlu0.b32.cont [13/16] 0.0, 128
  %1054 = vxpose.xlu0.b32.cont [14/16] 0.0, 128
  %1055 = vxpose.xlu0.b32.cont [15/16] 0.0, 128
  %1056 = vxpose.xlu0.b32.end [16/16] 0.0, 128
  %v1057 = vpop.trf.xlu0
  %v1058 = vpop.trf.xlu0
  %v1059 = vpop.trf.xlu0
  %v1060 = vpop.trf.xlu0
  %v1061 = vpop.trf.xlu0
  %v1062 = vpop.trf.xlu0
  %v1063 = vpop.trf.xlu0
  %v1064 = vpop.trf.xlu0
  %v1065 = vpop.trf.xlu0
  %v1066 = vpop.trf.xlu0
  %v1067 = vpop.trf.xlu0
  %v1068 = vpop.trf.xlu0
  %v1069 = vpop.trf.xlu0
  %v1070 = vpop.trf.xlu0
  %v1071 = vpop.trf.xlu0
  %v1072 = vpop.trf.xlu0
  %v1073 = vadd.f32 %v1057, 1e-06
  %1075 = vset.pattern.permute.xlu0 0
  %1076 = vperm.xlu0 %1075, %v1073
  %v1077 = vpop.permute.xlu0 %1076
  %v1079 = vrcp.pop %v1077
  %v1080 = vmul.f32 %v1029, %v1079
  %v1081 = vld [vmem:[%s5] sm:$0xf]
  %v1082 = vmul.f32 %v1081, 0.9
  %v1083 = vmul.f32 %v1080, 0.1
  %v1084 = vadd.f32 %v1082, %v1083
  %vm1085 = vcmask 60416
  %1086 = vst.msk [vmem:[%s19] sm:$0xf] %vm1085, %v1084
  %v1088 = vsel %vm860, %v910, 0
  %v1091 = vsel %vm860, %v912, 0
  %vm1093 = vcmask 1043456
  %v1095 = vsel %vm1093, %v1084, 0
  %1097 = vmatprep.subr.mxu0 0.0
  %1098 = vmatpush1.msra.mxu0 %v1095
  %1099 = vmatprep.subr.mxu0 0.0
  %1100 = vmatpush1.msra.mxu0 0.0
  %1101 = vmatprep.subr.mxu0 0.0
  %1102 = vmatpush1.msra.mxu0 0.0
  %1103 = vmatprep.subr.mxu0 0.0
  %1104 = vmatpush1.msra.mxu0 0.0
  %1105 = vmatprep.subr.mxu0 0.0
  %1106 = vmatpush1.msra.mxu0 0.0
  %1107 = vmatprep.subr.mxu0 0.0
  %1108 = vmatpush1.msra.mxu0 0.0
  %1109 = vmatprep.subr.mxu0 0.0
  %1110 = vmatpush1.msra.mxu0 0.0
  %1111 = vmatprep.subr.mxu0 0.0
  %1112 = vmatpush1.msra.mxu0 0.0
  %1113 = vmatprep.subr.mxu0 0.0
  %1114 = vmatpush1.msra.mxu0 0.0
  %1115 = vmatprep.subr.mxu0 0.0
  %1116 = vmatpush1.msra.mxu0 0.0
  %1117 = vmatprep.subr.mxu0 0.0
  %1118 = vmatpush1.msra.mxu0 0.0
  %1119 = vmatprep.subr.mxu0 0.0
  %1120 = vmatpush1.msra.mxu0 0.0
  %1121 = vmatprep.subr.mxu0 0.0
  %1122 = vmatpush1.msra.mxu0 0.0
  %1123 = vmatprep.subr.mxu0 0.0
  %1124 = vmatpush1.msra.mxu0 0.0
  %1125 = vmatprep.subr.mxu0 0.0
  %1126 = vmatpush1.msra.mxu0 0.0
  %1127 = vmatprep.subr.mxu0 0.0
  %1128 = vmatpush1.msra.mxu0 0.0
  %1129 = vmatprep.subr.mxu0 0.0
  %1130 = vmatpush1.msra.mxu0 0.0
  %1131 = vmatprep.subr.mxu0 0.0
  %1132 = vmatpush1.msra.mxu0 0.0
  %1133 = vmatprep.subr.mxu0 0.0
  %1134 = vmatpush1.msra.mxu0 0.0
  %1135 = vmatprep.subr.mxu0 0.0
  %1136 = vmatpush1.msra.mxu0 0.0
  %1137 = vmatprep.subr.mxu0 0.0
  %1138 = vmatpush1.msra.mxu0 0.0
  %1139 = vmatprep.subr.mxu0 0.0
  %1140 = vmatpush1.msra.mxu0 0.0
  %1141 = vmatprep.subr.mxu0 0.0
  %1142 = vmatpush1.msra.mxu0 0.0
  %1143 = vmatprep.subr.mxu0 0.0
  %1144 = vmatpush1.msra.mxu0 0.0
  %1145 = vmatprep.subr.mxu0 0.0
  %1146 = vmatpush1.msra.mxu0 0.0
  %1147 = vmatprep.subr.mxu0 0.0
  %1148 = vmatpush1.msra.mxu0 0.0
  %1149 = vmatprep.subr.mxu0 0.0
  %1150 = vmatpush1.msra.mxu0 0.0
  %1151 = vmatprep.subr.mxu0 0.0
  %1152 = vmatpush1.msra.mxu0 0.0
  %1153 = vmatprep.subr.mxu0 0.0
  %1154 = vmatpush1.msra.mxu0 0.0
  %1155 = vmatprep.subr.mxu0 0.0
  %1156 = vmatpush1.msra.mxu0 0.0
  %1157 = vmatprep.subr.mxu0 0.0
  %1158 = vmatpush1.msra.mxu0 0.0
  %1159 = vmatprep.subr.mxu0 0.0
  %1160 = vmatpush1.msra.mxu0 0.0
  %1161 = vmatprep.mubr.f32.mxu0 0.0
  %1162 = vmatmul.mubr.f32.gmra.mrb[0].mxu0 %v1088
  %v1163 = vpop.f32.mrb[0].mxu0
  %v1164 = vadd.f32 0.0, %v1163
  %v1165 = vpop.f32.mrb[0].mxu0
  %1166 = vmatprep.mubr.f32.mxu0 0.0
  %1167 = vmatmul.mubr.f32.gmra.mrb[0].mxu0 %v1091
  %v1168 = vpop.f32.mrb[0].mxu0
  %v1169 = vadd.f32 0.0, %v1168
  %v1170 = vpop.f32.mrb[0].mxu0
  %1171 = vdwg.mxu0
  %v1172 = vsub.f32 %v682, %v1164
  %v1173 = vsub.f32 %v683, %v1169
  %1174 = vrot.lane.b32.xlu0 %v301, 16
  %v1175 = vpop.permute.xlu0 %1174
  %1176 = vrot.lane.b32.xlu0 %v302, 16
  %v1177 = vpop.permute.xlu0 %1176
  %1182 = vrot.lane.b32.xlu0 %v650, 24
  %v1183 = vpop.permute.xlu0 %1182
  %1184 = vrot.lane.b32.xlu0 %v655, 24
  %v1185 = vpop.permute.xlu0 %1184
  %1188 = vrot.lane.b32.xlu0 %v682, 40
  %v1189 = vpop.permute.xlu0 %1188
  %1190 = vrot.lane.b32.xlu0 %v683, 40
  %v1191 = vpop.permute.xlu0 %1190
  %1196 = vrot.lane.b32.xlu0 %v852, 48
  %v1197 = vpop.permute.xlu0 %1196
  %1198 = vrot.lane.b32.xlu0 %v857, 48
  %v1199 = vpop.permute.xlu0 %1198
  %1204 = vrot.lane.b32.xlu0 %v880, 52
  %v1205 = vpop.permute.xlu0 %1204
  %1206 = vrot.lane.b32.xlu0 %v882, 52
  %v1207 = vpop.permute.xlu0 %1206
  %1210 = vrot.lane.b32.xlu0 %v910, 56
  %v1211 = vpop.permute.xlu0 %1210
  %1212 = vrot.lane.b32.xlu0 %v912, 56
  %v1213 = vpop.permute.xlu0 %1212
  %1218 = vrot.lane.b32.xlu0 %v1172, 60
  %v1219 = vpop.permute.xlu0 %1218
  %1220 = vrot.lane.b32.xlu0 %v1173, 60
  %v1221 = vpop.permute.xlu0 %1220
  %v1224 = vsel %vm316, %v269, %v1175
  %v1225 = vsel %vm316, %v274, %v1177
  %vm1226 = vcmask 195584
  %v1227 = vsel %vm1226, %v1224, %v1183
  %v1228 = vsel %vm1226, %v1225, %v1185
  %vm1229 = vcmask 326656
  %v1230 = vsel %vm1229, %v1227, %v1189
  %v1231 = vsel %vm1229, %v1228, %v1191
  %vm1232 = vcmask 392192
  %v1233 = vsel %vm1232, %v1230, %v1197
  %v1234 = vsel %vm1232, %v1231, %v1199
  %vm1235 = vcmask 424960
  %v1236 = vsel %vm1235, %v1233, %v1205
  %v1237 = vsel %vm1235, %v1234, %v1207
  %vm1238 = vcmask 457728
  %v1239 = vsel %vm1238, %v1236, %v1211
  %v1240 = vsel %vm1238, %v1237, %v1213
  %vm1241 = vcmask 490496
  %v1242 = vsel %vm1241, %v1239, %v1219
  %v1243 = vsel %vm1241, %v1240, %v1221
  %vm1244 = vcmask 556032
  %v1245 = vsel %vm1244, %v1242, 0.0
  %v1246 = vsel %vm1244, %v1243, 0.0
  %1247 = vst [vmem:[%s20] sm:$0xff] %v1245
  %1248 = vst [vmem:[%s20 + $0x8] sm:$0xff] %v1246
  // Predicated region
  $region78: #{object_animation_forward.5} parent=0 // pred_check
    _
  $region79: #{object_animation_forward.5} parent=0 // pred_check_branch
    %1250 = sbr.rel (0) target = $region81
  $region80: #{object_animation_forward.5} parent=0 // pred_region
    _
  $region81: #{object_animation_forward.5} parent=0 // pred_fallthru
    _
  // Predicated region
  $region82: #{object_animation_forward.5} parent=0 // pred_check
    _
  $region83: #{object_animation_forward.5} parent=0 // pred_check_branch
    %1252 = sbr.rel (0) target = $region85
  $region84: #{object_animation_forward.5} parent=0 // pred_region
    _
  $region85: #{object_animation_forward.5} parent=0 // pred_fallthru
    _
  // Predicated region
  $region86: #{object_animation_forward.5} parent=0 // pred_check
    _
  $region87: #{object_animation_forward.5} parent=0 // pred_check_branch
    %1254 = sbr.rel (0) target = $region89
  $region88: #{object_animation_forward.5} parent=0 // pred_region
    _
  $region89: #{object_animation_forward.5} parent=0 // pred_fallthru
    _
  // Predicated region
  $region90: #{object_animation_forward.5} parent=0 // pred_check
    _
  $region91: #{object_animation_forward.5} parent=0 // pred_check_branch
    %1256 = sbr.rel (0) target = $region93
  $region92: #{object_animation_forward.5} parent=0 // pred_region
    _
  $region93: #{object_animation_forward.5} parent=0 // pred_fallthru
    _

// kernel: object_animation_forward.7
$region0: #{object_animation_forward.7}
  #allocation0 [shape = 'u32[]', space=smem, size = 0x4, offset = 0x4, fixed_abs, tag = 'smem constant byte address 0x4 - core index']
  #allocation1 [shape = 'u32[144,128]{1,0:T(1,128)}', space=vmem, size = 0x12000, scoped, tag = 'internal scratch']
  %s0 = inlined_call_operand.vmem [shape: f32[16,14], index: 0, kind: input, shape index: {}]
  %s1 = inlined_call_operand.vmem [shape: f32[16,8], index: 1, kind: input, shape index: {}]
  %s2 = inlined_call_operand.vmem [shape: f32[16,8], index: 2, kind: input, shape index: {}]
  %s3 = inlined_call_operand.vmem [shape: f32[16,4], index: 3, kind: input, shape index: {}]
  %s4 = inlined_call_operand.vmem [shape: f32[14,32], index: 4, kind: input, shape index: {}]
  %s5 = inlined_call_operand.vmem [shape: f32[1,32], index: 5, kind: input, shape index: {}]
  %s6 = inlined_call_operand.vmem [shape: f32[32,16], index: 6, kind: input, shape index: {}]
  %s7 = inlined_call_operand.vmem [shape: f32[1,16], index: 7, kind: input, shape index: {}]
  %s8 = inlined_call_operand.vmem [shape: f32[8,32], index: 8, kind: input, shape index: {}]
  %s9 = inlined_call_operand.vmem [shape: f32[8,32], index: 9, kind: input, shape index: {}]
  %s10 = inlined_call_operand.vmem [shape: f32[1,32], index: 10, kind: input, shape index: {}]
  %s11 = inlined_call_operand.vmem [shape: f32[32,16], index: 11, kind: input, shape index: {}]
  %s12 = inlined_call_operand.vmem [shape: f32[1,16], index: 12, kind: input, shape index: {}]
  %s13 = inlined_call_operand.vmem [shape: f32[8,32], index: 13, kind: input, shape index: {}]
  %s14 = inlined_call_operand.vmem [shape: f32[1,32], index: 14, kind: input, shape index: {}]
  %s15 = inlined_call_operand.vmem [shape: f32[32,4], index: 15, kind: input, shape index: {}]
  %s16 = inlined_call_operand.vmem [shape: f32[1,4], index: 16, kind: input, shape index: {}]
  %s17 = inlined_call_operand.vmem [shape: f32[16,128], index: 17, kind: output, shape index: {}]
  %s18 = sld [smem:[#allocation0]]
  $region78: #{object_animation_forward.7} parent=0
    _
  %s20 = ssub.s32 1, %s18
  %s21 = scalar_select 0, %s20, %s18
  // Predicated region
  $region2: #{object_animation_forward.7} parent=0 // pred_check
    _
  $region3: #{object_animation_forward.7} parent=0 // pred_check_branch
    %23 = sbr.rel (0) target = $region5
  $region4: #{object_animation_forward.7} parent=0 // pred_region
    _
  $region5: #{object_animation_forward.7} parent=0 // pred_fallthru
    _
  // Predicated region
  $region6: #{object_animation_forward.7} parent=0 // pred_check
    _
  $region7: #{object_animation_forward.7} parent=0 // pred_check_branch
    %25 = sbr.rel (0) target = $region9
  $region8: #{object_animation_forward.7} parent=0 // pred_region
    _
  $region9: #{object_animation_forward.7} parent=0 // pred_fallthru
    _
  // Predicated region
  $region10: #{object_animation_forward.7} parent=0 // pred_check
    _
  $region11: #{object_animation_forward.7} parent=0 // pred_check_branch
    %27 = sbr.rel (0) target = $region13
  $region12: #{object_animation_forward.7} parent=0 // pred_region
    _
  $region13: #{object_animation_forward.7} parent=0 // pred_fallthru
    _
  // Predicated region
  $region14: #{object_animation_forward.7} parent=0 // pred_check
    _
  $region15: #{object_animation_forward.7} parent=0 // pred_check_branch
    %29 = sbr.rel (0) target = $region17
  $region16: #{object_animation_forward.7} parent=0 // pred_region
    _
  $region17: #{object_animation_forward.7} parent=0 // pred_fallthru
    _
  // Predicated region
  $region18: #{object_animation_forward.7} parent=0 // pred_check
    _
  $region19: #{object_animation_forward.7} parent=0 // pred_check_branch
    %31 = sbr.rel (0) target = $region21
  $region20: #{object_animation_forward.7} parent=0 // pred_region
    _
  $region21: #{object_animation_forward.7} parent=0 // pred_fallthru
    _
  // Predicated region
  $region22: #{object_animation_forward.7} parent=0 // pred_check
    _
  $region23: #{object_animation_forward.7} parent=0 // pred_check_branch
    %33 = sbr.rel (0) target = $region25
  $region24: #{object_animation_forward.7} parent=0 // pred_region
    _
  $region25: #{object_animation_forward.7} parent=0 // pred_fallthru
    _
  // Predicated region
  $region26: #{object_animation_forward.7} parent=0 // pred_check
    _
  $region27: #{object_animation_forward.7} parent=0 // pred_check_branch
    %35 = sbr.rel (0) target = $region29
  $region28: #{object_animation_forward.7} parent=0 // pred_region
    _
  $region29: #{object_animation_forward.7} parent=0 // pred_fallthru
    _
  // Predicated region
  $region30: #{object_animation_forward.7} parent=0 // pred_check
    _
  $region31: #{object_animation_forward.7} parent=0 // pred_check_branch
    %37 = sbr.rel (0) target = $region33
  $region32: #{object_animation_forward.7} parent=0 // pred_region
    _
  $region33: #{object_animation_forward.7} parent=0 // pred_fallthru
    _
  // Predicated region
  $region34: #{object_animation_forward.7} parent=0 // pred_check
    _
  $region35: #{object_animation_forward.7} parent=0 // pred_check_branch
    %39 = sbr.rel (0) target = $region37
  $region36: #{object_animation_forward.7} parent=0 // pred_region
    _
  $region37: #{object_animation_forward.7} parent=0 // pred_fallthru
    _
  // Predicated region
  $region38: #{object_animation_forward.7} parent=0 // pred_check
    _
  $region39: #{object_animation_forward.7} parent=0 // pred_check_branch
    %41 = sbr.rel (0) target = $region41
  $region40: #{object_animation_forward.7} parent=0 // pred_region
    _
  $region41: #{object_animation_forward.7} parent=0 // pred_fallthru
    _
  // Predicated region
  $region42: #{object_animation_forward.7} parent=0 // pred_check
    _
  $region43: #{object_animation_forward.7} parent=0 // pred_check_branch
    %43 = sbr.rel (0) target = $region45
  $region44: #{object_animation_forward.7} parent=0 // pred_region
    _
  $region45: #{object_animation_forward.7} parent=0 // pred_fallthru
    _
  // Predicated region
  $region46: #{object_animation_forward.7} parent=0 // pred_check
    _
  $region47: #{object_animation_forward.7} parent=0 // pred_check_branch
    %45 = sbr.rel (0) target = $region49
  $region48: #{object_animation_forward.7} parent=0 // pred_region
    _
  $region49: #{object_animation_forward.7} parent=0 // pred_fallthru
    _
  // Predicated region
  $region50: #{object_animation_forward.7} parent=0 // pred_check
    _
  $region51: #{object_animation_forward.7} parent=0 // pred_check_branch
    %47 = sbr.rel (0) target = $region53
  $region52: #{object_animation_forward.7} parent=0 // pred_region
    _
  $region53: #{object_animation_forward.7} parent=0 // pred_fallthru
    _
  // Predicated region
  $region54: #{object_animation_forward.7} parent=0 // pred_check
    _
  $region55: #{object_animation_forward.7} parent=0 // pred_check_branch
    %49 = sbr.rel (0) target = $region57
  $region56: #{object_animation_forward.7} parent=0 // pred_region
    _
  $region57: #{object_animation_forward.7} parent=0 // pred_fallthru
    _
  // Predicated region
  $region58: #{object_animation_forward.7} parent=0 // pred_check
    _
  $region59: #{object_animation_forward.7} parent=0 // pred_check_branch
    %51 = sbr.rel (0) target = $region61
  $region60: #{object_animation_forward.7} parent=0 // pred_region
    _
  $region61: #{object_animation_forward.7} parent=0 // pred_fallthru
    _
  // Predicated region
  $region62: #{object_animation_forward.7} parent=0 // pred_check
    _
  $region63: #{object_animation_forward.7} parent=0 // pred_check_branch
    %53 = sbr.rel (0) target = $region65
  $region64: #{object_animation_forward.7} parent=0 // pred_region
    _
  $region65: #{object_animation_forward.7} parent=0 // pred_fallthru
    _
  // Predicated region
  $region66: #{object_animation_forward.7} parent=0 // pred_check
    _
  $region67: #{object_animation_forward.7} parent=0 // pred_check_branch
    %55 = sbr.rel (0) target = $region69
  $region68: #{object_animation_forward.7} parent=0 // pred_region
    _
  $region69: #{object_animation_forward.7} parent=0 // pred_fallthru
    _
  %v56 = vld [vmem:[%s0] sm:$0xff]
  %v57 = vld [vmem:[%s0 + $0x8] sm:$0xff]
  %v58 = vld [vmem:[%s1] sm:$0xff]
  %v59 = vld [vmem:[%s1 + $0x8] sm:$0xff]
  %v60 = vld [vmem:[%s2] sm:$0xff]
  %v61 = vld [vmem:[%s2 + $0x8] sm:$0xff]
  %v62 = vld [vmem:[%s3] sm:$0xff]
  %v63 = vld [vmem:[%s3 + $0x8] sm:$0xff]
  %v64 = vld [vmem:[%s4] sm:$0xff]
  %v65 = vld [vmem:[%s4 + $0x8] sm:$0x3f]
  %v66 = vld [vmem:[%s5] sm:$0x1]
  %v67 = vld [vmem:[%s6] sm:$0xff]
  %v68 = vld [vmem:[%s6 + $0x8] sm:$0xff]
  %v69 = vld [vmem:[%s6 + $0x10] sm:$0xff]
  %v70 = vld [vmem:[%s6 + $0x18] sm:$0xff]
  %v71 = vld [vmem:[%s7] sm:$0x1]
  %v72 = vld [vmem:[%s8] sm:$0xff]
  %v73 = vld [vmem:[%s9] sm:$0xff]
  %v74 = vld [vmem:[%s10] sm:$0x1]
  %v75 = vld [vmem:[%s11] sm:$0xff]
  %v76 = vld [vmem:[%s11 + $0x8] sm:$0xff]
  %v77 = vld [vmem:[%s11 + $0x10] sm:$0xff]
  %v78 = vld [vmem:[%s11 + $0x18] sm:$0xff]
  %v79 = vld [vmem:[%s12] sm:$0x1]
  %v80 = vld [vmem:[%s13] sm:$0xff]
  %v81 = vld [vmem:[%s14] sm:$0x1]
  %v82 = vld [vmem:[%s15] sm:$0xff]
  %v83 = vld [vmem:[%s15 + $0x8] sm:$0xff]
  %v84 = vld [vmem:[%s15 + $0x10] sm:$0xff]
  %v85 = vld [vmem:[%s15 + $0x18] sm:$0xff]
  %v86 = vld [vmem:[%s16] sm:$0x1]
  %v88 = vlaneseq
  %v89 = vshrl.u32 %v88, 7
  %v90 = vsub.s32 0, %v89
  %v91 = vrot.slane %v66, %v90
  %vm93 = vcmask 113664
  %v95 = vsel %vm93, %v56, 0
  %v98 = vsel %vm93, %v57, 0
  %vm100 = vcmask 1045504
  %v102 = vsel %vm100, %v65, 0
  %104 = vmatprep.subr.mxu0 0.0
  %105 = vmatpush1.msra.mxu0 %v64
  %106 = vmatprep.subr.mxu0 0.0
  %107 = vmatpush1.msra.mxu0 %v102
  %108 = vmatprep.subr.mxu0 0.0
  %109 = vmatpush1.msra.mxu0 0.0
  %110 = vmatprep.subr.mxu0 0.0
  %111 = vmatpush1.msra.mxu0 0.0
  %112 = vmatprep.subr.mxu0 0.0
  %113 = vmatpush1.msra.mxu0 0.0
  %114 = vmatprep.subr.mxu0 0.0
  %115 = vmatpush1.msra.mxu0 0.0
  %116 = vmatprep.subr.mxu0 0.0
  %117 = vmatpush1.msra.mxu0 0.0
  %118 = vmatprep.subr.mxu0 0.0
  %119 = vmatpush1.msra.mxu0 0.0
  %120 = vmatprep.subr.mxu0 0.0
  %121 = vmatpush1.msra.mxu0 0.0
  %122 = vmatprep.subr.mxu0 0.0
  %123 = vmatpush1.msra.mxu0 0.0
  %124 = vmatprep.subr.mxu0 0.0
  %125 = vmatpush1.msra.mxu0 0.0
  %126 = vmatprep.subr.mxu0 0.0
  %127 = vmatpush1.msra.mxu0 0.0
  %128 = vmatprep.subr.mxu0 0.0
  %129 = vmatpush1.msra.mxu0 0.0
  %130 = vmatprep.subr.mxu0 0.0
  %131 = vmatpush1.msra.mxu0 0.0
  %132 = vmatprep.subr.mxu0 0.0
  %133 = vmatpush1.msra.mxu0 0.0
  %134 = vmatprep.subr.mxu0 0.0
  %135 = vmatpush1.msra.mxu0 0.0
  %136 = vmatprep.subr.mxu0 0.0
  %137 = vmatpush1.msra.mxu0 0.0
  %138 = vmatprep.subr.mxu0 0.0
  %139 = vmatpush1.msra.mxu0 0.0
  %140 = vmatprep.subr.mxu0 0.0
  %141 = vmatpush1.msra.mxu0 0.0
  %142 = vmatprep.subr.mxu0 0.0
  %143 = vmatpush1.msra.mxu0 0.0
  %144 = vmatprep.subr.mxu0 0.0
  %145 = vmatpush1.msra.mxu0 0.0
  %146 = vmatprep.subr.mxu0 0.0
  %147 = vmatpush1.msra.mxu0 0.0
  %148 = vmatprep.subr.mxu0 0.0
  %149 = vmatpush1.msra.mxu0 0.0
  %150 = vmatprep.subr.mxu0 0.0
  %151 = vmatpush1.msra.mxu0 0.0
  %152 = vmatprep.subr.mxu0 0.0
  %153 = vmatpush1.msra.mxu0 0.0
  %154 = vmatprep.subr.mxu0 0.0
  %155 = vmatpush1.msra.mxu0 0.0
  %156 = vmatprep.subr.mxu0 0.0
  %157 = vmatpush1.msra.mxu0 0.0
  %158 = vmatprep.subr.mxu0 0.0
  %159 = vmatpush1.msra.mxu0 0.0
  %160 = vmatprep.subr.mxu0 0.0
  %161 = vmatpush1.msra.mxu0 0.0
  %162 = vmatprep.subr.mxu0 0.0
  %163 = vmatpush1.msra.mxu0 0.0
  %164 = vmatprep.subr.mxu0 0.0
  %165 = vmatpush1.msra.mxu0 0.0
  %166 = vmatprep.subr.mxu0 0.0
  %167 = vmatpush1.msra.mxu0 0.0
  %168 = vmatprep.mubr.f32.mxu0 0.0
  %169 = vmatmul.mubr.f32.gmra.mrb[0].mxu0 %v95
  %v170 = vpop.f32.mrb[0].mxu0
  %v171 = vadd.f32 %v91, %v170
  %v172 = vpop.f32.mrb[0].mxu0
  %173 = vmatprep.mubr.f32.mxu0 0.0
  %174 = vmatmul.mubr.f32.gmra.mrb[0].mxu0 %v98
  %v175 = vpop.f32.mrb[0].mxu0
  %v176 = vadd.f32 %v91, %v175
  %v177 = vpop.f32.mrb[0].mxu0
  %178 = vdwg.mxu0
  %v179 = vtanh.pop %v171
  %v180 = vtanh.pop %v176
  %v182 = vlaneseq
  %v183 = vshrl.u32 %v182, 7
  %v184 = vsub.s32 0, %v183
  %v185 = vrot.slane %v71, %v184
  %vm187 = vcmask 261120
  %v189 = vsel %vm187, %v179, 0
  %v192 = vsel %vm187, %v180, 0
  %194 = vmatprep.subr.mxu0 0.0
  %195 = vmatpush1.msra.mxu0 %v67
  %196 = vmatprep.subr.mxu0 0.0
  %197 = vmatpush1.msra.mxu0 %v68
  %198 = vmatprep.subr.mxu0 0.0
  %199 = vmatpush1.msra.mxu0 %v69
  %200 = vmatprep.subr.mxu0 0.0
  %201 = vmatpush1.msra.mxu0 %v70
  %202 = vmatprep.subr.mxu0 0.0
  %203 = vmatpush1.msra.mxu0 0.0
  %204 = vmatprep.subr.mxu0 0.0
  %205 = vmatpush1.msra.mxu0 0.0
  %206 = vmatprep.subr.mxu0 0.0
  %207 = vmatpush1.msra.mxu0 0.0
  %208 = vmatprep.subr.mxu0 0.0
  %209 = vmatpush1.msra.mxu0 0.0
  %210 = vmatprep.subr.mxu0 0.0
  %211 = vmatpush1.msra.mxu0 0.0
  %212 = vmatprep.subr.mxu0 0.0
  %213 = vmatpush1.msra.mxu0 0.0
  %214 = vmatprep.subr.mxu0 0.0
  %215 = vmatpush1.msra.mxu0 0.0
  %216 = vmatprep.subr.mxu0 0.0
  %217 = vmatpush1.msra.mxu0 0.0
  %218 = vmatprep.subr.mxu0 0.0
  %219 = vmatpush1.msra.mxu0 0.0
  %220 = vmatprep.subr.mxu0 0.0
  %221 = vmatpush1.msra.mxu0 0.0
  %222 = vmatprep.subr.mxu0 0.0
  %223 = vmatpush1.msra.mxu0 0.0
  %224 = vmatprep.subr.mxu0 0.0
  %225 = vmatpush1.msra.mxu0 0.0
  %226 = vmatprep.subr.mxu0 0.0
  %227 = vmatpush1.msra.mxu0 0.0
  %228 = vmatprep.subr.mxu0 0.0
  %229 = vmatpush1.msra.mxu0 0.0
  %230 = vmatprep.subr.mxu0 0.0
  %231 = vmatpush1.msra.mxu0 0.0
  %232 = vmatprep.subr.mxu0 0.0
  %233 = vmatpush1.msra.mxu0 0.0
  %234 = vmatprep.subr.mxu0 0.0
  %235 = vmatpush1.msra.mxu0 0.0
  %236 = vmatprep.subr.mxu0 0.0
  %237 = vmatpush1.msra.mxu0 0.0
  %238 = vmatprep.subr.mxu0 0.0
  %239 = vmatpush1.msra.mxu0 0.0
  %240 = vmatprep.subr.mxu0 0.0
  %241 = vmatpush1.msra.mxu0 0.0
  %242 = vmatprep.subr.mxu0 0.0
  %243 = vmatpush1.msra.mxu0 0.0
  %244 = vmatprep.subr.mxu0 0.0
  %245 = vmatpush1.msra.mxu0 0.0
  %246 = vmatprep.subr.mxu0 0.0
  %247 = vmatpush1.msra.mxu0 0.0
  %248 = vmatprep.subr.mxu0 0.0
  %249 = vmatpush1.msra.mxu0 0.0
  %250 = vmatprep.subr.mxu0 0.0
  %251 = vmatpush1.msra.mxu0 0.0
  %252 = vmatprep.subr.mxu0 0.0
  %253 = vmatpush1.msra.mxu0 0.0
  %254 = vmatprep.subr.mxu0 0.0
  %255 = vmatpush1.msra.mxu0 0.0
  %256 = vmatprep.subr.mxu0 0.0
  %257 = vmatpush1.msra.mxu0 0.0
  %258 = vmatprep.mubr.f32.mxu0 0.0
  %259 = vmatmul.mubr.f32.gmra.mrb[0].mxu0 %v189
  %v260 = vpop.f32.mrb[0].mxu0
  %v261 = vadd.f32 %v185, %v260
  %v262 = vpop.f32.mrb[0].mxu0
  %263 = vmatprep.mubr.f32.mxu0 0.0
  %264 = vmatmul.mubr.f32.gmra.mrb[0].mxu0 %v192
  %v265 = vpop.f32.mrb[0].mxu0
  %v266 = vadd.f32 %v185, %v265
  %v267 = vpop.f32.mrb[0].mxu0
  %268 = vdwg.mxu0
  %v269 = vmul.f32 %v261, 0.5
  %v270 = vmul.f32 %v266, 0.5
  %v271 = vmul.f32 %v269, 1.442695
  %v272 = vpow.pop %v271
  %v273 = vmul.f32 %v270, 1.442695
  %v274 = vpow.pop %v273
  %277 = vrot.lane.b32.xlu0 %v58, 8
  %v278 = vpop.permute.xlu0 %277
  %279 = vrot.lane.b32.xlu0 %v59, 8
  %v280 = vpop.permute.xlu0 %279
  %v283 = vmul.f32 %v272, %v278
  %v284 = vmul.f32 %v274, %v280
  %287 = vrot.lane.b32.xlu0 %v283, 120
  %v288 = vpop.permute.xlu0 %287
  %289 = vrot.lane.b32.xlu0 %v284, 120
  %v290 = vpop.permute.xlu0 %289
  %v293 = vadd.f32 %v261, %v288
  %v294 = vadd.f32 %v266, %v290
  %v295 = vlaneseq
  %v296 = vshrl.u32 %v295, 7
  %v297 = vadd.s32 %v296, 8
  %v298 = vlaneseq
  %v299 = vand.u32 %v298, 127
  %v300 = vadd.s32 %v296, 1
  %v301 = vadd.s32 %v297, 1
  %vm302 = vcmp.eq.s32.totalorder %v299, %v300
  %vm303 = vcmp.eq.s32.totalorder %v299, %v301
  %v304 = vsel %vm302, 1, 0
  %v305 = vsel %vm303, 1, 0
  %v306 = vcvt.s32.f32 %v304
  %v307 = vcvt.s32.f32 %v305
  %vm308 = vcmask 130048
  %v310 = vsel %vm308, %v306, 0
  %v313 = vsel %vm308, %v307, 0
  %315 = vmatprep.subr.mxu0 0.0
  %316 = vmatpush1.msra.mxu0 %v293
  %317 = vmatprep.subr.mxu0 0.0
  %318 = vmatpush1.msra.mxu0 %v294
  %319 = vmatprep.subr.mxu0 0.0
  %320 = vmatpush1.msra.mxu0 0.0
  %321 = vmatprep.subr.mxu0 0.0
  %322 = vmatpush1.msra.mxu0 0.0
  %323 = vmatprep.subr.mxu0 0.0
  %324 = vmatpush1.msra.mxu0 0.0
  %325 = vmatprep.subr.mxu0 0.0
  %326 = vmatpush1.msra.mxu0 0.0
  %327 = vmatprep.subr.mxu0 0.0
  %328 = vmatpush1.msra.mxu0 0.0
  %329 = vmatprep.subr.mxu0 0.0
  %330 = vmatpush1.msra.mxu0 0.0
  %331 = vmatprep.subr.mxu0 0.0
  %332 = vmatpush1.msra.mxu0 0.0
  %333 = vmatprep.subr.mxu0 0.0
  %334 = vmatpush1.msra.mxu0 0.0
  %335 = vmatprep.subr.mxu0 0.0
  %336 = vmatpush1.msra.mxu0 0.0
  %337 = vmatprep.subr.mxu0 0.0
  %338 = vmatpush1.msra.mxu0 0.0
  %339 = vmatprep.subr.mxu0 0.0
  %340 = vmatpush1.msra.mxu0 0.0
  %341 = vmatprep.subr.mxu0 0.0
  %342 = vmatpush1.msra.mxu0 0.0
  %343 = vmatprep.subr.mxu0 0.0
  %344 = vmatpush1.msra.mxu0 0.0
  %345 = vmatprep.subr.mxu0 0.0
  %346 = vmatpush1.msra.mxu0 0.0
  %347 = vmatprep.subr.mxu0 0.0
  %348 = vmatpush1.msra.mxu0 0.0
  %349 = vmatprep.subr.mxu0 0.0
  %350 = vmatpush1.msra.mxu0 0.0
  %351 = vmatprep.subr.mxu0 0.0
  %352 = vmatpush1.msra.mxu0 0.0
  %353 = vmatprep.subr.mxu0 0.0
  %354 = vmatpush1.msra.mxu0 0.0
  %355 = vmatprep.subr.mxu0 0.0
  %356 = vmatpush1.msra.mxu0 0.0
  %357 = vmatprep.subr.mxu0 0.0
  %358 = vmatpush1.msra.mxu0 0.0
  %359 = vmatprep.subr.mxu0 0.0
  %360 = vmatpush1.msra.mxu0 0.0
  %361 = vmatprep.subr.mxu0 0.0
  %362 = vmatpush1.msra.mxu0 0.0
  %363 = vmatprep.subr.mxu0 0.0
  %364 = vmatpush1.msra.mxu0 0.0
  %365 = vmatprep.subr.mxu0 0.0
  %366 = vmatpush1.msra.mxu0 0.0
  %367 = vmatprep.subr.mxu0 0.0
  %368 = vmatpush1.msra.mxu0 0.0
  %369 = vmatprep.subr.mxu0 0.0
  %370 = vmatpush1.msra.mxu0 0.0
  %371 = vmatprep.subr.mxu0 0.0
  %372 = vmatpush1.msra.mxu0 0.0
  %373 = vmatprep.subr.mxu0 0.0
  %374 = vmatpush1.msra.mxu0 0.0
  %375 = vmatprep.subr.mxu0 0.0
  %376 = vmatpush1.msra.mxu0 0.0
  %377 = vmatprep.subr.mxu0 0.0
  %378 = vmatpush1.msra.mxu0 0.0
  %379 = vmatprep.mubr.f32.mxu0 0.0
  %380 = vmatmul.mubr.f32.gmra.mrb[0].mxu0 %v310
  %v381 = vpop.f32.mrb[0].mxu0
  %v382 = vadd.f32 0.0, %v381
  %v383 = vpop.f32.mrb[0].mxu0
  %384 = vmatprep.mubr.f32.mxu0 0.0
  %385 = vmatmul.mubr.f32.gmra.mrb[0].mxu0 %v313
  %v386 = vpop.f32.mrb[0].mxu0
  %v387 = vadd.f32 0.0, %v386
  %v388 = vpop.f32.mrb[0].mxu0
  %389 = vdwg.mxu0
  %vm390 = vcmask 64512
  %v392 = vsel %vm390, %v382, 0
  %v395 = vsel %vm390, %v387, 0
  %397 = vmatprep.subr.mxu0 0.0
  %398 = vmatpush1.msra.mxu0 %v73
  %399 = vmatprep.subr.mxu0 0.0
  %400 = vmatpush1.msra.mxu0 0.0
  %401 = vmatprep.subr.mxu0 0.0
  %402 = vmatpush1.msra.mxu0 0.0
  %403 = vmatprep.subr.mxu0 0.0
  %404 = vmatpush1.msra.mxu0 0.0
  %405 = vmatprep.subr.mxu0 0.0
  %406 = vmatpush1.msra.mxu0 0.0
  %407 = vmatprep.subr.mxu0 0.0
  %408 = vmatpush1.msra.mxu0 0.0
  %409 = vmatprep.subr.mxu0 0.0
  %410 = vmatpush1.msra.mxu0 0.0
  %411 = vmatprep.subr.mxu0 0.0
  %412 = vmatpush1.msra.mxu0 0.0
  %413 = vmatprep.subr.mxu0 0.0
  %414 = vmatpush1.msra.mxu0 0.0
  %415 = vmatprep.subr.mxu0 0.0
  %416 = vmatpush1.msra.mxu0 0.0
  %417 = vmatprep.subr.mxu0 0.0
  %418 = vmatpush1.msra.mxu0 0.0
  %419 = vmatprep.subr.mxu0 0.0
  %420 = vmatpush1.msra.mxu0 0.0
  %421 = vmatprep.subr.mxu0 0.0
  %422 = vmatpush1.msra.mxu0 0.0
  %423 = vmatprep.subr.mxu0 0.0
  %424 = vmatpush1.msra.mxu0 0.0
  %425 = vmatprep.subr.mxu0 0.0
  %426 = vmatpush1.msra.mxu0 0.0
  %427 = vmatprep.subr.mxu0 0.0
  %428 = vmatpush1.msra.mxu0 0.0
  %429 = vmatprep.subr.mxu0 0.0
  %430 = vmatpush1.msra.mxu0 0.0
  %431 = vmatprep.subr.mxu0 0.0
  %432 = vmatpush1.msra.mxu0 0.0
  %433 = vmatprep.subr.mxu0 0.0
  %434 = vmatpush1.msra.mxu0 0.0
  %435 = vmatprep.subr.mxu0 0.0
  %436 = vmatpush1.msra.mxu0 0.0
  %437 = vmatprep.subr.mxu0 0.0
  %438 = vmatpush1.msra.mxu0 0.0
  %439 = vmatprep.subr.mxu0 0.0
  %440 = vmatpush1.msra.mxu0 0.0
  %441 = vmatprep.subr.mxu0 0.0
  %442 = vmatpush1.msra.mxu0 0.0
  %443 = vmatprep.subr.mxu0 0.0
  %444 = vmatpush1.msra.mxu0 0.0
  %445 = vmatprep.subr.mxu0 0.0
  %446 = vmatpush1.msra.mxu0 0.0
  %447 = vmatprep.subr.mxu0 0.0
  %448 = vmatpush1.msra.mxu0 0.0
  %449 = vmatprep.subr.mxu0 0.0
  %450 = vmatpush1.msra.mxu0 0.0
  %451 = vmatprep.subr.mxu0 0.0
  %452 = vmatpush1.msra.mxu0 0.0
  %453 = vmatprep.subr.mxu0 0.0
  %454 = vmatpush1.msra.mxu0 0.0
  %455 = vmatprep.subr.mxu0 0.0
  %456 = vmatpush1.msra.mxu0 0.0
  %457 = vmatprep.subr.mxu0 0.0
  %458 = vmatpush1.msra.mxu0 0.0
  %459 = vmatprep.subr.mxu0 0.0
  %460 = vmatpush1.msra.mxu0 0.0
  %461 = vmatprep.mubr.f32.mxu0 0.0
  %462 = vmatmul.mubr.f32.gmra.mrb[0].mxu0 %v392
  %v463 = vpop.f32.mrb[0].mxu0
  %v464 = vadd.f32 0.0, %v463
  %v465 = vpop.f32.mrb[0].mxu0
  %466 = vmatprep.mubr.f32.mxu0 0.0
  %467 = vmatmul.mubr.f32.gmra.mrb[0].mxu0 %v395
  %v468 = vpop.f32.mrb[0].mxu0
  %v469 = vadd.f32 0.0, %v468
  %v470 = vpop.f32.mrb[0].mxu0
  %471 = vdwg.mxu0
  %v473 = vsel %vm390, %v293, 0
  %v476 = vsel %vm390, %v294, 0
  %478 = vmatprep.subr.mxu0 0.0
  %479 = vmatpush1.msra.mxu0 %v72
  %480 = vmatprep.subr.mxu0 0.0
  %481 = vmatpush1.msra.mxu0 0.0
  %482 = vmatprep.subr.mxu0 0.0
  %483 = vmatpush1.msra.mxu0 0.0
  %484 = vmatprep.subr.mxu0 0.0
  %485 = vmatpush1.msra.mxu0 0.0
  %486 = vmatprep.subr.mxu0 0.0
  %487 = vmatpush1.msra.mxu0 0.0
  %488 = vmatprep.subr.mxu0 0.0
  %489 = vmatpush1.msra.mxu0 0.0
  %490 = vmatprep.subr.mxu0 0.0
  %491 = vmatpush1.msra.mxu0 0.0
  %492 = vmatprep.subr.mxu0 0.0
  %493 = vmatpush1.msra.mxu0 0.0
  %494 = vmatprep.subr.mxu0 0.0
  %495 = vmatpush1.msra.mxu0 0.0
  %496 = vmatprep.subr.mxu0 0.0
  %497 = vmatpush1.msra.mxu0 0.0
  %498 = vmatprep.subr.mxu0 0.0
  %499 = vmatpush1.msra.mxu0 0.0
  %500 = vmatprep.subr.mxu0 0.0
  %501 = vmatpush1.msra.mxu0 0.0
  %502 = vmatprep.subr.mxu0 0.0
  %503 = vmatpush1.msra.mxu0 0.0
  %504 = vmatprep.subr.mxu0 0.0
  %505 = vmatpush1.msra.mxu0 0.0
  %506 = vmatprep.subr.mxu0 0.0
  %507 = vmatpush1.msra.mxu0 0.0
  %508 = vmatprep.subr.mxu0 0.0
  %509 = vmatpush1.msra.mxu0 0.0
  %510 = vmatprep.subr.mxu0 0.0
  %511 = vmatpush1.msra.mxu0 0.0
  %512 = vmatprep.subr.mxu0 0.0
  %513 = vmatpush1.msra.mxu0 0.0
  %514 = vmatprep.subr.mxu0 0.0
  %515 = vmatpush1.msra.mxu0 0.0
  %516 = vmatprep.subr.mxu0 0.0
  %517 = vmatpush1.msra.mxu0 0.0
  %518 = vmatprep.subr.mxu0 0.0
  %519 = vmatpush1.msra.mxu0 0.0
  %520 = vmatprep.subr.mxu0 0.0
  %521 = vmatpush1.msra.mxu0 0.0
  %522 = vmatprep.subr.mxu0 0.0
  %523 = vmatpush1.msra.mxu0 0.0
  %524 = vmatprep.subr.mxu0 0.0
  %525 = vmatpush1.msra.mxu0 0.0
  %526 = vmatprep.subr.mxu0 0.0
  %527 = vmatpush1.msra.mxu0 0.0
  %528 = vmatprep.subr.mxu0 0.0
  %529 = vmatpush1.msra.mxu0 0.0
  %530 = vmatprep.subr.mxu0 0.0
  %531 = vmatpush1.msra.mxu0 0.0
  %532 = vmatprep.subr.mxu0 0.0
  %533 = vmatpush1.msra.mxu0 0.0
  %534 = vmatprep.subr.mxu0 0.0
  %535 = vmatpush1.msra.mxu0 0.0
  %536 = vmatprep.subr.mxu0 0.0
  %537 = vmatpush1.msra.mxu0 0.0
  %538 = vmatprep.subr.mxu0 0.0
  %539 = vmatpush1.msra.mxu0 0.0
  %540 = vmatprep.subr.mxu0 0.0
  %541 = vmatpush1.msra.mxu0 0.0
  %542 = vmatprep.mubr.f32.mxu0 0.0
  %543 = vmatmul.mubr.f32.gmra.mrb[0].mxu0 %v473
  %v544 = vpop.f32.mrb[0].mxu0
  %v545 = vadd.f32 %v464, %v544
  %v546 = vpop.f32.mrb[0].mxu0
  %547 = vmatprep.mubr.f32.mxu0 0.0
  %548 = vmatmul.mubr.f32.gmra.mrb[0].mxu0 %v476
  %v549 = vpop.f32.mrb[0].mxu0
  %v550 = vadd.f32 %v469, %v549
  %v551 = vpop.f32.mrb[0].mxu0
  %552 = vdwg.mxu0
  %v554 = vlaneseq
  %v555 = vshrl.u32 %v554, 7
  %v556 = vsub.s32 0, %v555
  %v557 = vrot.slane %v74, %v556
  %v559 = vadd.f32 %v545, %v557
  %v560 = vadd.f32 %v550, %v557
  %v561 = vtanh.pop %v559
  %v562 = vtanh.pop %v560
  %v564 = vlaneseq
  %v565 = vshrl.u32 %v564, 7
  %v566 = vsub.s32 0, %v565
  %v567 = vrot.slane %v79, %v566
  %v570 = vsel %vm187, %v561, 0
  %v573 = vsel %vm187, %v562, 0
  %575 = vmatprep.subr.mxu0 0.0
  %576 = vmatpush1.msra.mxu0 %v75
  %577 = vmatprep.subr.mxu0 0.0
  %578 = vmatpush1.msra.mxu0 %v76
  %579 = vmatprep.subr.mxu0 0.0
  %580 = vmatpush1.msra.mxu0 %v77
  %581 = vmatprep.subr.mxu0 0.0
  %582 = vmatpush1.msra.mxu0 %v78
  %583 = vmatprep.subr.mxu0 0.0
  %584 = vmatpush1.msra.mxu0 0.0
  %585 = vmatprep.subr.mxu0 0.0
  %586 = vmatpush1.msra.mxu0 0.0
  %587 = vmatprep.subr.mxu0 0.0
  %588 = vmatpush1.msra.mxu0 0.0
  %589 = vmatprep.subr.mxu0 0.0
  %590 = vmatpush1.msra.mxu0 0.0
  %591 = vmatprep.subr.mxu0 0.0
  %592 = vmatpush1.msra.mxu0 0.0
  %593 = vmatprep.subr.mxu0 0.0
  %594 = vmatpush1.msra.mxu0 0.0
  %595 = vmatprep.subr.mxu0 0.0
  %596 = vmatpush1.msra.mxu0 0.0
  %597 = vmatprep.subr.mxu0 0.0
  %598 = vmatpush1.msra.mxu0 0.0
  %599 = vmatprep.subr.mxu0 0.0
  %600 = vmatpush1.msra.mxu0 0.0
  %601 = vmatprep.subr.mxu0 0.0
  %602 = vmatpush1.msra.mxu0 0.0
  %603 = vmatprep.subr.mxu0 0.0
  %604 = vmatpush1.msra.mxu0 0.0
  %605 = vmatprep.subr.mxu0 0.0
  %606 = vmatpush1.msra.mxu0 0.0
  %607 = vmatprep.subr.mxu0 0.0
  %608 = vmatpush1.msra.mxu0 0.0
  %609 = vmatprep.subr.mxu0 0.0
  %610 = vmatpush1.msra.mxu0 0.0
  %611 = vmatprep.subr.mxu0 0.0
  %612 = vmatpush1.msra.mxu0 0.0
  %613 = vmatprep.subr.mxu0 0.0
  %614 = vmatpush1.msra.mxu0 0.0
  %615 = vmatprep.subr.mxu0 0.0
  %616 = vmatpush1.msra.mxu0 0.0
  %617 = vmatprep.subr.mxu0 0.0
  %618 = vmatpush1.msra.mxu0 0.0
  %619 = vmatprep.subr.mxu0 0.0
  %620 = vmatpush1.msra.mxu0 0.0
  %621 = vmatprep.subr.mxu0 0.0
  %622 = vmatpush1.msra.mxu0 0.0
  %623 = vmatprep.subr.mxu0 0.0
  %624 = vmatpush1.msra.mxu0 0.0
  %625 = vmatprep.subr.mxu0 0.0
  %626 = vmatpush1.msra.mxu0 0.0
  %627 = vmatprep.subr.mxu0 0.0
  %628 = vmatpush1.msra.mxu0 0.0
  %629 = vmatprep.subr.mxu0 0.0
  %630 = vmatpush1.msra.mxu0 0.0
  %631 = vmatprep.subr.mxu0 0.0
  %632 = vmatpush1.msra.mxu0 0.0
  %633 = vmatprep.subr.mxu0 0.0
  %634 = vmatpush1.msra.mxu0 0.0
  %635 = vmatprep.subr.mxu0 0.0
  %636 = vmatpush1.msra.mxu0 0.0
  %637 = vmatprep.subr.mxu0 0.0
  %638 = vmatpush1.msra.mxu0 0.0
  %639 = vmatprep.mubr.f32.mxu0 0.0
  %640 = vmatmul.mubr.f32.gmra.mrb[0].mxu0 %v570
  %v641 = vpop.f32.mrb[0].mxu0
  %v642 = vadd.f32 %v567, %v641
  %v643 = vpop.f32.mrb[0].mxu0
  %644 = vmatprep.mubr.f32.mxu0 0.0
  %645 = vmatmul.mubr.f32.gmra.mrb[0].mxu0 %v573
  %v646 = vpop.f32.mrb[0].mxu0
  %v647 = vadd.f32 %v567, %v646
  %v648 = vpop.f32.mrb[0].mxu0
  %649 = vdwg.mxu0
  %v650 = vmul.f32 %v642, 0.5
  %v651 = vmul.f32 %v647, 0.5
  %v652 = vmul.f32 %v650, 1.442695
  %v653 = vpow.pop %v652
  %v654 = vmul.f32 %v651, 1.442695
  %v655 = vpow.pop %v654
  %658 = vrot.lane.b32.xlu0 %v60, 8
  %v659 = vpop.permute.xlu0 %658
  %660 = vrot.lane.b32.xlu0 %v61, 8
  %v661 = vpop.permute.xlu0 %660
  %v664 = vmul.f32 %v653, %v659
  %v665 = vmul.f32 %v655, %v661
  %668 = vrot.lane.b32.xlu0 %v664, 120
  %v669 = vpop.permute.xlu0 %668
  %670 = vrot.lane.b32.xlu0 %v665, 120
  %v671 = vpop.permute.xlu0 %670
  %v674 = vadd.f32 %v642, %v669
  %v675 = vadd.f32 %v647, %v671
  %v677 = vlaneseq
  %v678 = vshrl.u32 %v677, 7
  %v679 = vsub.s32 0, %v678
  %v680 = vrot.slane %v81, %v679
  %v683 = vsel %vm390, %v674, 0
  %v686 = vsel %vm390, %v675, 0
  %688 = vmatprep.subr.mxu0 0.0
  %689 = vmatpush1.msra.mxu0 %v80
  %690 = vmatprep.subr.mxu0 0.0
  %691 = vmatpush1.msra.mxu0 0.0
  %692 = vmatprep.subr.mxu0 0.0
  %693 = vmatpush1.msra.mxu0 0.0
  %694 = vmatprep.subr.mxu0 0.0
  %695 = vmatpush1.msra.mxu0 0.0
  %696 = vmatprep.subr.mxu0 0.0
  %697 = vmatpush1.msra.mxu0 0.0
  %698 = vmatprep.subr.mxu0 0.0
  %699 = vmatpush1.msra.mxu0 0.0
  %700 = vmatprep.subr.mxu0 0.0
  %701 = vmatpush1.msra.mxu0 0.0
  %702 = vmatprep.subr.mxu0 0.0
  %703 = vmatpush1.msra.mxu0 0.0
  %704 = vmatprep.subr.mxu0 0.0
  %705 = vmatpush1.msra.mxu0 0.0
  %706 = vmatprep.subr.mxu0 0.0
  %707 = vmatpush1.msra.mxu0 0.0
  %708 = vmatprep.subr.mxu0 0.0
  %709 = vmatpush1.msra.mxu0 0.0
  %710 = vmatprep.subr.mxu0 0.0
  %711 = vmatpush1.msra.mxu0 0.0
  %712 = vmatprep.subr.mxu0 0.0
  %713 = vmatpush1.msra.mxu0 0.0
  %714 = vmatprep.subr.mxu0 0.0
  %715 = vmatpush1.msra.mxu0 0.0
  %716 = vmatprep.subr.mxu0 0.0
  %717 = vmatpush1.msra.mxu0 0.0
  %718 = vmatprep.subr.mxu0 0.0
  %719 = vmatpush1.msra.mxu0 0.0
  %720 = vmatprep.subr.mxu0 0.0
  %721 = vmatpush1.msra.mxu0 0.0
  %722 = vmatprep.subr.mxu0 0.0
  %723 = vmatpush1.msra.mxu0 0.0
  %724 = vmatprep.subr.mxu0 0.0
  %725 = vmatpush1.msra.mxu0 0.0
  %726 = vmatprep.subr.mxu0 0.0
  %727 = vmatpush1.msra.mxu0 0.0
  %728 = vmatprep.subr.mxu0 0.0
  %729 = vmatpush1.msra.mxu0 0.0
  %730 = vmatprep.subr.mxu0 0.0
  %731 = vmatpush1.msra.mxu0 0.0
  %732 = vmatprep.subr.mxu0 0.0
  %733 = vmatpush1.msra.mxu0 0.0
  %734 = vmatprep.subr.mxu0 0.0
  %735 = vmatpush1.msra.mxu0 0.0
  %736 = vmatprep.subr.mxu0 0.0
  %737 = vmatpush1.msra.mxu0 0.0
  %738 = vmatprep.subr.mxu0 0.0
  %739 = vmatpush1.msra.mxu0 0.0
  %740 = vmatprep.subr.mxu0 0.0
  %741 = vmatpush1.msra.mxu0 0.0
  %742 = vmatprep.subr.mxu0 0.0
  %743 = vmatpush1.msra.mxu0 0.0
  %744 = vmatprep.subr.mxu0 0.0
  %745 = vmatpush1.msra.mxu0 0.0
  %746 = vmatprep.subr.mxu0 0.0
  %747 = vmatpush1.msra.mxu0 0.0
  %748 = vmatprep.subr.mxu0 0.0
  %749 = vmatpush1.msra.mxu0 0.0
  %750 = vmatprep.subr.mxu0 0.0
  %751 = vmatpush1.msra.mxu0 0.0
  %752 = vmatprep.mubr.f32.mxu0 0.0
  %753 = vmatmul.mubr.f32.gmra.mrb[0].mxu0 %v683
  %v754 = vpop.f32.mrb[0].mxu0
  %v755 = vadd.f32 %v680, %v754
  %v756 = vpop.f32.mrb[0].mxu0
  %757 = vmatprep.mubr.f32.mxu0 0.0
  %758 = vmatmul.mubr.f32.gmra.mrb[0].mxu0 %v686
  %v759 = vpop.f32.mrb[0].mxu0
  %v760 = vadd.f32 %v680, %v759
  %v761 = vpop.f32.mrb[0].mxu0
  %762 = vdwg.mxu0
  %v763 = vtanh.pop %v755
  %v764 = vtanh.pop %v760
  %v766 = vlaneseq
  %v767 = vshrl.u32 %v766, 7
  %v768 = vsub.s32 0, %v767
  %v769 = vrot.slane %v86, %v768
  %v772 = vsel %vm187, %v763, 0
  %v775 = vsel %vm187, %v764, 0
  %777 = vmatprep.subr.mxu0 0.0
  %778 = vmatpush1.msra.mxu0 %v82
  %779 = vmatprep.subr.mxu0 0.0
  %780 = vmatpush1.msra.mxu0 %v83
  %781 = vmatprep.subr.mxu0 0.0
  %782 = vmatpush1.msra.mxu0 %v84
  %783 = vmatprep.subr.mxu0 0.0
  %784 = vmatpush1.msra.mxu0 %v85
  %785 = vmatprep.subr.mxu0 0.0
  %786 = vmatpush1.msra.mxu0 0.0
  %787 = vmatprep.subr.mxu0 0.0
  %788 = vmatpush1.msra.mxu0 0.0
  %789 = vmatprep.subr.mxu0 0.0
  %790 = vmatpush1.msra.mxu0 0.0
  %791 = vmatprep.subr.mxu0 0.0
  %792 = vmatpush1.msra.mxu0 0.0
  %793 = vmatprep.subr.mxu0 0.0
  %794 = vmatpush1.msra.mxu0 0.0
  %795 = vmatprep.subr.mxu0 0.0
  %796 = vmatpush1.msra.mxu0 0.0
  %797 = vmatprep.subr.mxu0 0.0
  %798 = vmatpush1.msra.mxu0 0.0
  %799 = vmatprep.subr.mxu0 0.0
  %800 = vmatpush1.msra.mxu0 0.0
  %801 = vmatprep.subr.mxu0 0.0
  %802 = vmatpush1.msra.mxu0 0.0
  %803 = vmatprep.subr.mxu0 0.0
  %804 = vmatpush1.msra.mxu0 0.0
  %805 = vmatprep.subr.mxu0 0.0
  %806 = vmatpush1.msra.mxu0 0.0
  %807 = vmatprep.subr.mxu0 0.0
  %808 = vmatpush1.msra.mxu0 0.0
  %809 = vmatprep.subr.mxu0 0.0
  %810 = vmatpush1.msra.mxu0 0.0
  %811 = vmatprep.subr.mxu0 0.0
  %812 = vmatpush1.msra.mxu0 0.0
  %813 = vmatprep.subr.mxu0 0.0
  %814 = vmatpush1.msra.mxu0 0.0
  %815 = vmatprep.subr.mxu0 0.0
  %816 = vmatpush1.msra.mxu0 0.0
  %817 = vmatprep.subr.mxu0 0.0
  %818 = vmatpush1.msra.mxu0 0.0
  %819 = vmatprep.subr.mxu0 0.0
  %820 = vmatpush1.msra.mxu0 0.0
  %821 = vmatprep.subr.mxu0 0.0
  %822 = vmatpush1.msra.mxu0 0.0
  %823 = vmatprep.subr.mxu0 0.0
  %824 = vmatpush1.msra.mxu0 0.0
  %825 = vmatprep.subr.mxu0 0.0
  %826 = vmatpush1.msra.mxu0 0.0
  %827 = vmatprep.subr.mxu0 0.0
  %828 = vmatpush1.msra.mxu0 0.0
  %829 = vmatprep.subr.mxu0 0.0
  %830 = vmatpush1.msra.mxu0 0.0
  %831 = vmatprep.subr.mxu0 0.0
  %832 = vmatpush1.msra.mxu0 0.0
  %833 = vmatprep.subr.mxu0 0.0
  %834 = vmatpush1.msra.mxu0 0.0
  %835 = vmatprep.subr.mxu0 0.0
  %836 = vmatpush1.msra.mxu0 0.0
  %837 = vmatprep.subr.mxu0 0.0
  %838 = vmatpush1.msra.mxu0 0.0
  %839 = vmatprep.subr.mxu0 0.0
  %840 = vmatpush1.msra.mxu0 0.0
  %841 = vmatprep.mubr.f32.mxu0 0.0
  %842 = vmatmul.mubr.f32.gmra.mrb[0].mxu0 %v772
  %v843 = vpop.f32.mrb[0].mxu0
  %v844 = vadd.f32 %v769, %v843
  %v845 = vpop.f32.mrb[0].mxu0
  %846 = vmatprep.mubr.f32.mxu0 0.0
  %847 = vmatmul.mubr.f32.gmra.mrb[0].mxu0 %v775
  %v848 = vpop.f32.mrb[0].mxu0
  %v849 = vadd.f32 %v769, %v848
  %v850 = vpop.f32.mrb[0].mxu0
  %851 = vdwg.mxu0
  %vm852 = vcmask 31744
  %v853 = vsel %vm852, %v844, -inf
  %854 = vmax.xlane.f32.xlu0 %v853
  %v855 = vpop.xlane.xlu0 %854
  %v856 = vsel %vm852, %v849, -inf
  %857 = vmax.xlane.f32.xlu0 %v856
  %v858 = vpop.xlane.xlu0 %857
  %v859 = vsub.f32 %v844, %v855
  %v860 = vsub.f32 %v849, %v858
  %v861 = vmul.f32 %v859, 1.442695
  %v862 = vpow.pop %v861
  %v863 = vmul.f32 %v860, 1.442695
  %v864 = vpow.pop %v863
  %v865 = vsel %vm852, %v862, 0.0
  %866 = vadd.xlane.f32.xlu0 %v865
  %v867 = vpop.xlane.xlu0 %866
  %v868 = vsel %vm852, %v864, 0.0
  %869 = vadd.xlane.f32.xlu0 %v868
  %v870 = vpop.xlane.xlu0 %869
  %v871 = vrcp.pop %v867
  %v872 = vmul.f32 %v862, %v871
  %v873 = vrcp.pop %v870
  %v874 = vmul.f32 %v864, %v873
  %v875 = vlog2.pop %v867
  %v876 = vmul.f32 %v875, 0.6931472
  %v877 = vlog2.pop %v870
  %v878 = vmul.f32 %v877, 0.6931472
  %v879 = vsub.f32 %v859, %v876
  %v880 = vsub.f32 %v860, %v878
  %v881 = vadd.f32 %v879, %v62
  %v882 = vadd.f32 %v880, %v63
  %v883 = vsel %vm852, %v881, -inf
  %884 = vmax.xlane.f32.xlu0 %v883
  %v885 = vpop.xlane.xlu0 %884
  %v886 = vsel %vm852, %v882, -inf
  %887 = vmax.xlane.f32.xlu0 %v886
  %v888 = vpop.xlane.xlu0 %887
  %v889 = vsub.f32 %v881, %v885
  %v890 = vsub.f32 %v882, %v888
  %v891 = vmul.f32 %v889, 1.442695
  %v892 = vpow.pop %v891
  %v893 = vmul.f32 %v890, 1.442695
  %v894 = vpow.pop %v893
  %v895 = vsel %vm852, %v892, 0.0
  %896 = vadd.xlane.f32.xlu0 %v895
  %v897 = vpop.xlane.xlu0 %896
  %v898 = vsel %vm852, %v894, 0.0
  %899 = vadd.xlane.f32.xlu0 %v898
  %v900 = vpop.xlane.xlu0 %899
  %v901 = vrcp.pop %v897
  %v902 = vmul.f32 %v892, %v901
  %v903 = vrcp.pop %v900
  %v904 = vmul.f32 %v894, %v903
  %905 = vrot.lane.b32.xlu0 %v293, 16
  %v906 = vpop.permute.xlu0 %905
  %907 = vrot.lane.b32.xlu0 %v294, 16
  %v908 = vpop.permute.xlu0 %907
  %913 = vrot.lane.b32.xlu0 %v642, 24
  %v914 = vpop.permute.xlu0 %913
  %915 = vrot.lane.b32.xlu0 %v647, 24
  %v916 = vpop.permute.xlu0 %915
  %919 = vrot.lane.b32.xlu0 %v674, 40
  %v920 = vpop.permute.xlu0 %919
  %921 = vrot.lane.b32.xlu0 %v675, 40
  %v922 = vpop.permute.xlu0 %921
  %927 = vrot.lane.b32.xlu0 %v844, 48
  %v928 = vpop.permute.xlu0 %927
  %929 = vrot.lane.b32.xlu0 %v849, 48
  %v930 = vpop.permute.xlu0 %929
  %935 = vrot.lane.b32.xlu0 %v872, 52
  %v936 = vpop.permute.xlu0 %935
  %937 = vrot.lane.b32.xlu0 %v874, 52
  %v938 = vpop.permute.xlu0 %937
  %943 = vrot.lane.b32.xlu0 %v902, 56
  %v944 = vpop.permute.xlu0 %943
  %945 = vrot.lane.b32.xlu0 %v904, 56
  %v946 = vpop.permute.xlu0 %945
  %v949 = vsel %vm308, %v261, %v906
  %v950 = vsel %vm308, %v266, %v908
  %vm951 = vcmask 195584
  %v952 = vsel %vm951, %v949, %v914
  %v953 = vsel %vm951, %v950, %v916
  %vm954 = vcmask 326656
  %v955 = vsel %vm954, %v952, %v920
  %v956 = vsel %vm954, %v953, %v922
  %vm957 = vcmask 392192
  %v958 = vsel %vm957, %v955, %v928
  %v959 = vsel %vm957, %v956, %v930
  %vm960 = vcmask 424960
  %v961 = vsel %vm960, %v958, %v936
  %v962 = vsel %vm960, %v959, %v938
  %vm963 = vcmask 457728
  %v964 = vsel %vm963, %v961, %v944
  %v965 = vsel %vm963, %v962, %v946
  %vm966 = vcmask 490496
  %v967 = vsel %vm966, %v964, 0.0
  %v968 = vsel %vm966, %v965, 0.0
  %969 = vst [vmem:[%s17] sm:$0xff] %v967
  %970 = vst [vmem:[%s17 + $0x8] sm:$0xff] %v968
  // Predicated region
  $region70: #{object_animation_forward.7} parent=0 // pred_check
    _
  $region71: #{object_animation_forward.7} parent=0 // pred_check_branch
    %972 = sbr.rel (0) target = $region73
  $region72: #{object_animation_forward.7} parent=0 // pred_region
    _
  $region73: #{object_animation_forward.7} parent=0 // pred_fallthru
    _
  // Predicated region
  $region74: #{object_animation_forward.7} parent=0 // pred_check
    _
  $region75: #{object_animation_forward.7} parent=0 // pred_check_branch
    %974 = sbr.rel (0) target = $region77
  $region76: #{object_animation_forward.7} parent=0 // pred_region
    _
  $region77: #{object_animation_forward.7} parent=0 // pred_fallthru
    _

</llo_original>
